<compile_context>
chip_gen: v6e
topology: v6e:2x2x1
jax: 0.10.0
libtpu: 0.0.40
codegen_flags: <defaults>
</compile_context>

<pallas_src>
import jax
import jax.numpy as jnp
from jax.experimental import pallas as pl
from jax.experimental.pallas import tpu as pltpu


# --------------------------------------------------------------------------- #
# Fused Bottleneck kernel
# --------------------------------------------------------------------------- #
def _bottleneck_kernel(x_ref, w1_ref, b1_ref, w2_ref, b2_ref,
                       sw1_ref, sb1_ref, sw2_ref, sb2_ref,
                       w3_ref, b3_ref, o_ref, pad_ref):
    # x_ref:   (1, H*W, Cin) f32     w1_ref: (Cin, P)  bf16   b1_ref: (1, P) f32
    # w2_ref:  (9, P, P)     bf16    b2_ref: (1, P)    f32
    # sw1_ref: (R, P) f32  sb1_ref: (R, 1) f32  sw2_ref: (R, P) f32  sb2_ref: (1, P) f32
    # w3_ref:  (P, Cexp)     bf16    b3_ref: (1, Cexp) f32
    # o_ref:   (1, H*W, Cexp)
    # pad_ref: (H+2, W+2, P) f32 scratch (zero halo; interior = conv1 output)
    HW = x_ref.shape[1]
    P = w1_ref.shape[1]
    H = pad_ref.shape[0] - 2
    W = pad_ref.shape[1] - 2

    x = x_ref[0]                                                   # (HW, Cin) f32

    # ---- conv1: 1x1 + ABN(leaky 1e-3).  bf16 MXU operands, f32 accumulate. ----
    y1 = jnp.dot(x.astype(jnp.bfloat16), w1_ref[...],
                 preferred_element_type=jnp.float32) + b1_ref[...]
    y1 = jnp.maximum(y1, 0.001 * y1)

    # ---- conv2: 3x3 s1 p1 as 9 shifted matmuls from a zero-haloed scratch. ----
    # Zero only the halo border (interior is fully overwritten every grid step).
    zr = jnp.zeros((1, W + 2, P), jnp.float32)
    zc = jnp.zeros((H + 2, 1, P), jnp.float32)
    pad_ref[pl.ds(0, 1), :, :] = zr
    pad_ref[pl.ds(H + 1, 1), :, :] = zr
    pad_ref[:, pl.ds(0, 1), :] = zc
    pad_ref[:, pl.ds(W + 1, 1), :] = zc
    pad_ref[pl.ds(1, H), pl.ds(1, W), :] = y1.reshape(H, W, P)

    acc = None
    for dy in range(3):
        for dx in range(3):
            k = dy * 3 + dx
            lhs = pad_ref[pl.ds(dy, H), pl.ds(dx, W), :].reshape(HW, P)
            t = jnp.dot(lhs.astype(jnp.bfloat16), w2_ref[k],
                        preferred_element_type=jnp.float32)
            acc = t if acc is None else acc + t
    y2 = acc + b2_ref[...]
    y2 = jnp.maximum(y2, 0.001 * y2)                               # leaky relu

    # ---- SE: global-avg-pool -> fc1 -> relu -> fc2 -> sigmoid -> scale (f32) --
    s = jnp.mean(y2, axis=0, keepdims=True)                        # (1, P)
    h = jnp.sum(sw1_ref[...] * s, axis=1, keepdims=True) + sb1_ref[...]   # (R, 1)
    h = jnp.maximum(h, 0.0)
    g = jnp.sum(sw2_ref[...] * h, axis=0, keepdims=True) + sb2_ref[...]   # (1, P)
    g = 1.0 / (1.0 + jnp.exp(-g))                                  # sigmoid
    y2 = y2 * g

    # ---- conv3: 1x1 + ABN(identity) -------------------------------------------
    y3 = jnp.dot(y2.astype(jnp.bfloat16), w3_ref[...],
                 preferred_element_type=jnp.float32) + b3_ref[...]

    # ---- residual add (full-precision x) + ReLU --------------------------------
    out = jnp.maximum(y3 + x, 0.0)
    o_ref[0] = out.astype(o_ref.dtype)


# --------------------------------------------------------------------------- #
# Wrappers
# --------------------------------------------------------------------------- #
def bottleneck_nhwc(x_nhwc, params):
    """Bottleneck.forward (stride=1, downsample=None, use_se=True), NHWC in/out."""
    N, H, W, cin = x_nhwc.shape
    planes = params["w2"].shape[-1]
    cexp = params["w3"].shape[-1]
    red = params["se_w1"].shape[-1]
    assert cin == cexp, "identity residual requires inplanes == planes*expansion"

    # BN scale already folded into conv weights; cast MXU operands to bf16.
    w1k = params["w1"].reshape(cin, planes).astype(jnp.bfloat16)
    w2k = params["w2"].reshape(9, planes, planes).astype(jnp.bfloat16)   # (dy*3+dx, ci, co)
    w3k = params["w3"].reshape(planes, cexp).astype(jnp.bfloat16)
    b1k = params["b1"].reshape(1, planes)
    b2k = params["b2"].reshape(1, planes)
    b3k = params["b3"].reshape(1, cexp)
    sw1t = params["se_w1"].T                          # (red, planes)
    sb1c = params["se_b1"].reshape(red, 1)
    sw2k = params["se_w2"]                            # (red, planes)
    sb2r = params["se_b2"].reshape(1, planes)

    HW = H * W
    x = x_nhwc.reshape(N, HW, cin)                    # leading-dim merge: layout-free

    # Explicit scoped-VMEM budget: double-buffered I/O + weights, plus scratch.
    f32b, bf16b = 4, 2
    io_blocks = HW * cin * f32b + HW * cexp * f32b
    weight_bytes = ((cin * planes + 9 * planes * planes + planes * cexp) * bf16b
                    + (3 * planes + cexp + 2 * red * planes + red + planes) * f32b)
    scratch_bytes = (H + 2) * (W + 2) * planes * f32b
    vmem_limit = min(4 * (io_blocks + weight_bytes) + scratch_bytes + (8 << 20),
                     64 << 20)

    c2 = lambda n: (0, 0)
    c3 = lambda n: (0, 0, 0)
    out = pl.pallas_call(
        _bottleneck_kernel,
        out_shape=jax.ShapeDtypeStruct((N, HW, cexp), x_nhwc.dtype),
        grid_spec=pltpu.PrefetchScalarGridSpec(
            num_scalar_prefetch=0,
            grid=(N,),
            in_specs=[
                pl.BlockSpec((1, HW, cin), lambda n: (n, 0, 0)),
                pl.BlockSpec((cin, planes), c2),
                pl.BlockSpec((1, planes), c2),
                pl.BlockSpec((9, planes, planes), c3),
                pl.BlockSpec((1, planes), c2),
                pl.BlockSpec((red, planes), c2),
                pl.BlockSpec((red, 1), c2),
                pl.BlockSpec((red, planes), c2),
                pl.BlockSpec((1, planes), c2),
                pl.BlockSpec((planes, cexp), c2),
                pl.BlockSpec((1, cexp), c2),
            ],
            out_specs=pl.BlockSpec((1, HW, cexp), lambda n: (n, 0, 0)),
            scratch_shapes=[
                pltpu.VMEM((H + 2, W + 2, planes), jnp.float32),   # haloed conv1 out
            ],
        ),
        compiler_params=pltpu.CompilerParams(
            dimension_semantics=("parallel",),
            vmem_limit_bytes=int(vmem_limit),
        ),
    )(x, w1k, b1k, w2k, b2k, sw1t, sb1c, sw2k, sb2r, w3k, b3k)

    return out.reshape(N, H, W, cexp)


def bottleneck_nchw(x_nchw, params):
    """Drop-in NCHW adapter (adds two HBM transposes; prefer bottleneck_nhwc)."""
    out = bottleneck_nhwc(jnp.transpose(x_nchw, (0, 2, 3, 1)), params)
    return jnp.transpose(out, (0, 3, 1, 2))


# --------------------------------------------------------------------------- #
# Synthetic parameters (conv2d_ABN -> conv weight with BN folded + bias)
# --------------------------------------------------------------------------- #
def make_conv_abn_params(key, kh, kw, cin, cout):
    kw_, kg, kb, km, kv = jax.random.split(key, 5)
    w = 0.1 * jax.random.normal(kw_, (kh, kw, cin, cout), jnp.float32)   # HWIO
    gamma = 1.0 + 0.1 * jax.random.normal(kg, (cout,), jnp.float32)
    beta = 0.1 * jax.random.normal(kb, (cout,), jnp.float32)
    mean = 0.1 * jax.random.normal(km, (cout,), jnp.float32)
    var = jnp.abs(jax.random.normal(kv, (cout,), jnp.float32)) + 0.5
    eps = 1e-5
    scale = gamma / jnp.sqrt(var + eps)
    bias = beta - mean * scale
    return w * scale, bias                      # BN scale folded into weights


def make_se_params(key, channels, reduction):
    k1, k2, k3, k4 = jax.random.split(key, 4)
    w1 = 0.1 * jax.random.normal(k1, (channels, reduction), jnp.float32)  # in,out
    b1 = 0.1 * jax.random.normal(k2, (reduction,), jnp.float32)
    w2 = 0.1 * jax.random.normal(k3, (reduction, channels), jnp.float32)  # in,out
    b2 = 0.1 * jax.random.normal(k4, (channels,), jnp.float32)
    return w1, b1, w2, b2


def init_bottleneck_params(key, inplanes, planes, expansion=4):
    k1, k2, k3, kse = jax.random.split(key, 4)
    w1, b1 = make_conv_abn_params(k1, 1, 1, inplanes, planes)
    w2, b2 = make_conv_abn_params(k2, 3, 3, planes, planes)
    w3, b3 = make_conv_abn_params(k3, 1, 1, planes, planes * expansion)
    reduce_planes = max(planes * expansion // 8, 64)
    se_w1, se_b1, se_w2, se_b2 = make_se_params(kse, planes, reduce_planes)
    return dict(w1=w1, b1=b1, w2=w2, b2=b2, w3=w3, b3=b3,
                se_w1=se_w1, se_b1=se_b1, se_w2=se_w2, se_b2=se_b2)


# --------------------------------------------------------------------------- #
# Pure-JAX reference (NHWC, f32) for correctness check
# --------------------------------------------------------------------------- #
def _ref_bottleneck_nhwc(x, params):
    def cab(y, w, b, leaky):
        y = jax.lax.conv_general_dilated(
            y, w, window_strides=(1, 1), padding="SAME",
            dimension_numbers=("NHWC", "HWIO", "NHWC"))
        y = y + b.reshape(1, 1, 1, -1)
        return jnp.maximum(y, 0.001 * y) if leaky else y

    out = cab(x, params["w1"], params["b1"], True)
    out = cab(out, params["w2"], params["b2"], True)
    s = jnp.mean(out, axis=(1, 2), keepdims=True)                   # (N,1,1,P)
    h = jnp.einsum("nijc,cr->nijr", s, params["se_w1"]) + params["se_b1"]
    h = jnp.maximum(h, 0.0)
    g = jnp.einsum("nijr,rc->nijc", h, params["se_w2"]) + params["se_b2"]
    g = jax.nn.sigmoid(g)
    out = out * g
    out = cab(out, params["w3"], params["b3"], False)
    return jnp.maximum(out + x, 0.0)


if __name__ == "__main__":
    key = jax.random.PRNGKey(0)
    kx, kp = jax.random.split(key)

    # Lane-dense small test: planes=64, inplanes = planes*4 = 256 (identity
    # residual path), batch=2, spatial 16x16, NHWC layout end-to-end.
    N, planes = 2, 64
    inplanes = planes * 4
    H = W = 16
    x = jax.random.normal(kx, (N, H, W, inplanes), jnp.float32)
    params = init_bottleneck_params(kp, inplanes, planes)

    out = jax.block_until_ready(bottleneck_nhwc(x, params))
    ref = jax.block_until_ready(_ref_bottleneck_nhwc(x, params))

    assert out.shape == (N, H, W, inplanes), out.shape
    max_err = float(jnp.max(jnp.abs(out - ref)))
    # bf16 MXU operands (f32 accumulation) vs the f32 reference -> loose tolerance.
    assert jnp.allclose(out, ref, atol=5e-2, rtol=5e-2), max_err
    print("KERNEL_OK")
</pallas_src>

<mosaic_0001>
module attributes {stable_mosaic.version = 11 : i64} {
  func.func @_bottleneck_kernel(%arg0: i32, %arg1: memref<1x256x256xf32, #tpu.memory_space<vmem>>, %arg2: memref<256x64xbf16, #tpu.memory_space<vmem>>, %arg3: memref<1x64xf32, #tpu.memory_space<vmem>>, %arg4: memref<9x64x64xbf16, #tpu.memory_space<vmem>>, %arg5: memref<1x64xf32, #tpu.memory_space<vmem>>, %arg6: memref<64x64xf32, #tpu.memory_space<vmem>>, %arg7: memref<64x1xf32, #tpu.memory_space<vmem>>, %arg8: memref<64x64xf32, #tpu.memory_space<vmem>>, %arg9: memref<1x64xf32, #tpu.memory_space<vmem>>, %arg10: memref<64x256xbf16, #tpu.memory_space<vmem>>, %arg11: memref<1x256xf32, #tpu.memory_space<vmem>>, %arg12: memref<1x256x256xf32, #tpu.memory_space<vmem>>, %arg13: memref<18x18x64xf32, #tpu.memory_space<vmem>>) attributes {dimension_semantics = [#tpu.dimension_semantics<parallel>], iteration_bounds = array<i64: 2>, scalar_prefetch = 0 : i64, scratch_operands = 1 : i64, tpu.core_type = #tpu.core_type<tc>, window_params = [{transform_indices = @transform_0, window_bounds = array<i64: 1, 256, 256>}, {pipeline_mode = #tpu.pipeline_mode<synchronous>, transform_indices = @transform_1, window_bounds = array<i64: 256, 64>}, {pipeline_mode = #tpu.pipeline_mode<synchronous>, transform_indices = @transform_2, window_bounds = array<i64: 1, 64>}, {pipeline_mode = #tpu.pipeline_mode<synchronous>, transform_indices = @transform_3, window_bounds = array<i64: 9, 64, 64>}, {pipeline_mode = #tpu.pipeline_mode<synchronous>, transform_indices = @transform_4, window_bounds = array<i64: 1, 64>}, {pipeline_mode = #tpu.pipeline_mode<synchronous>, transform_indices = @transform_5, window_bounds = array<i64: 64, 64>}, {pipeline_mode = #tpu.pipeline_mode<synchronous>, transform_indices = @transform_6, window_bounds = array<i64: 64, 1>}, {pipeline_mode = #tpu.pipeline_mode<synchronous>, transform_indices = @transform_7, window_bounds = array<i64: 64, 64>}, {pipeline_mode = #tpu.pipeline_mode<synchronous>, transform_indices = @transform_8, window_bounds = array<i64: 1, 64>}, {pipeline_mode = #tpu.pipeline_mode<synchronous>, transform_indices = @transform_9, window_bounds = array<i64: 64, 256>}, {pipeline_mode = #tpu.pipeline_mode<synchronous>, transform_indices = @transform_10, window_bounds = array<i64: 1, 256>}, {transform_indices = @transform_11, window_bounds = array<i64: 1, 256, 256>}]} {
    %c0 = arith.constant 0 : index
    %c0_0 = arith.constant 0 : index
    %c0_1 = arith.constant 0 : index
    %0 = vector.load %arg1[%c0, %c0_0, %c0_1] : memref<1x256x256xf32, #tpu.memory_space<vmem>>, vector<1x256x256xf32>
    %1 = vector.shape_cast %0 : vector<1x256x256xf32> to vector<256x256xf32>
    %2 = arith.truncf %1 : vector<256x256xf32> to vector<256x256xbf16>
    %c0_2 = arith.constant 0 : index
    %c0_3 = arith.constant 0 : index
    %3 = vector.load %arg2[%c0_2, %c0_3] : memref<256x64xbf16, #tpu.memory_space<vmem>>, vector<256x64xbf16>
    %cst = arith.constant dense<0.000000e+00> : vector<256x64xf32>
    %4 = tpu.matmul %2, %3, %cst {dimension_numbers = #tpu.dot_dimension_numbers<[1], [0], [0], [1], [0, 0, 1, 1], [], []>} : vector<256x256xbf16>, vector<256x64xbf16>, vector<256x64xf32> -> vector<256x64xf32>
    %c0_4 = arith.constant 0 : index
    %c0_5 = arith.constant 0 : index
    %5 = vector.load %arg3[%c0_4, %c0_5] : memref<1x64xf32, #tpu.memory_space<vmem>>, vector<1x64xf32>
    %6 = vector.broadcast %5 : vector<1x64xf32> to vector<256x64xf32>
    %7 = arith.addf %4, %6 : vector<256x64xf32>
    %cst_6 = arith.constant 1.000000e-03 : f32
    %8 = vector.broadcast %cst_6 : f32 to vector<256x64xf32>
    %9 = arith.mulf %8, %7 : vector<256x64xf32>
    %10 = arith.maximumf %7, %9 : vector<256x64xf32>
    %cst_7 = arith.constant 0.000000e+00 : f32
    %11 = vector.broadcast %cst_7 : f32 to vector<1x18x64xf32>
    %cst_8 = arith.constant 0.000000e+00 : f32
    %12 = vector.broadcast %cst_8 : f32 to vector<18x1x64xf32>
    %c0_9 = arith.constant 0 : index
    %c0_10 = arith.constant 0 : index
    %c0_11 = arith.constant 0 : index
    %13 = vector.load %arg13[%c0_9, %c0_10, %c0_11] : memref<18x18x64xf32, #tpu.memory_space<vmem>>, vector<1x18x64xf32>
    tpu.vector_store %arg13[%c0_9, %c0_10, %c0_11], %11 {strides = array<i32>} : memref<18x18x64xf32, #tpu.memory_space<vmem>>, vector<1x18x64xf32>,
    %c17 = arith.constant 17 : index
    %c0_12 = arith.constant 0 : index
    %c0_13 = arith.constant 0 : index
    %14 = vector.load %arg13[%c17, %c0_12, %c0_13] : memref<18x18x64xf32, #tpu.memory_space<vmem>>, vector<1x18x64xf32>
    tpu.vector_store %arg13[%c17, %c0_12, %c0_13], %11 {strides = array<i32>} : memref<18x18x64xf32, #tpu.memory_space<vmem>>, vector<1x18x64xf32>,
    %c0_14 = arith.constant 0 : index
    %c0_15 = arith.constant 0 : index
    %c0_16 = arith.constant 0 : index
    %15 = vector.load %arg13[%c0_14, %c0_15, %c0_16] : memref<18x18x64xf32, #tpu.memory_space<vmem>>, vector<18x1x64xf32>
    tpu.vector_store %arg13[%c0_14, %c0_15, %c0_16], %12 {strides = array<i32>} : memref<18x18x64xf32, #tpu.memory_space<vmem>>, vector<18x1x64xf32>,
    %c0_17 = arith.constant 0 : index
    %c17_18 = arith.constant 17 : index
    %c0_19 = arith.constant 0 : index
    %16 = vector.load %arg13[%c0_17, %c17_18, %c0_19] : memref<18x18x64xf32, #tpu.memory_space<vmem>>, vector<18x1x64xf32>
    tpu.vector_store %arg13[%c0_17, %c17_18, %c0_19], %12 {strides = array<i32>} : memref<18x18x64xf32, #tpu.memory_space<vmem>>, vector<18x1x64xf32>,
    %17 = vector.shape_cast %10 : vector<256x64xf32> to vector<16x16x64xf32>
    %c1 = arith.constant 1 : index
    %c1_20 = arith.constant 1 : index
    %c0_21 = arith.constant 0 : index
    %18 = vector.load %arg13[%c1, %c1_20, %c0_21] : memref<18x18x64xf32, #tpu.memory_space<vmem>>, vector<16x16x64xf32>
    tpu.vector_store %arg13[%c1, %c1_20, %c0_21], %17 {strides = array<i32>} : memref<18x18x64xf32, #tpu.memory_space<vmem>>, vector<16x16x64xf32>,
    %c0_22 = arith.constant 0 : index
    %c0_23 = arith.constant 0 : index
    %c0_24 = arith.constant 0 : index
    %19 = vector.load %arg13[%c0_22, %c0_23, %c0_24] : memref<18x18x64xf32, #tpu.memory_space<vmem>>, vector<16x16x64xf32>
    %20 = vector.shape_cast %19 : vector<16x16x64xf32> to vector<256x64xf32>
    %21 = arith.truncf %20 : vector<256x64xf32> to vector<256x64xbf16>
    %c0_25 = arith.constant 0 : index
    %c0_26 = arith.constant 0 : index
    %c0_27 = arith.constant 0 : index
    %22 = vector.load %arg4[%c0_25, %c0_26, %c0_27] : memref<9x64x64xbf16, #tpu.memory_space<vmem>>, vector<1x64x64xbf16>
    %23 = vector.shape_cast %22 : vector<1x64x64xbf16> to vector<64x64xbf16>
    %cst_28 = arith.constant dense<0.000000e+00> : vector<256x64xf32>
    %24 = tpu.matmul %21, %23, %cst_28 {dimension_numbers = #tpu.dot_dimension_numbers<[1], [0], [0], [1], [0, 0, 1, 1], [], []>} : vector<256x64xbf16>, vector<64x64xbf16>, vector<256x64xf32> -> vector<256x64xf32>
    %c0_29 = arith.constant 0 : index
    %c1_30 = arith.constant 1 : index
    %c0_31 = arith.constant 0 : index
    %25 = vector.load %arg13[%c0_29, %c1_30, %c0_31] : memref<18x18x64xf32, #tpu.memory_space<vmem>>, vector<16x16x64xf32>
    %26 = vector.shape_cast %25 : vector<16x16x64xf32> to vector<256x64xf32>
    %27 = arith.truncf %26 : vector<256x64xf32> to vector<256x64xbf16>
    %c1_32 = arith.constant 1 : index
    %c0_33 = arith.constant 0 : index
    %c0_34 = arith.constant 0 : index
    %28 = vector.load %arg4[%c1_32, %c0_33, %c0_34] : memref<9x64x64xbf16, #tpu.memory_space<vmem>>, vector<1x64x64xbf16>
    %29 = vector.shape_cast %28 : vector<1x64x64xbf16> to vector<64x64xbf16>
    %cst_35 = arith.constant dense<0.000000e+00> : vector<256x64xf32>
    %30 = tpu.matmul %27, %29, %cst_35 {dimension_numbers = #tpu.dot_dimension_numbers<[1], [0], [0], [1], [0, 0, 1, 1], [], []>} : vector<256x64xbf16>, vector<64x64xbf16>, vector<256x64xf32> -> vector<256x64xf32>
    %31 = arith.addf %24, %30 : vector<256x64xf32>
    %c0_36 = arith.constant 0 : index
    %c2 = arith.constant 2 : index
    %c0_37 = arith.constant 0 : index
    %32 = vector.load %arg13[%c0_36, %c2, %c0_37] : memref<18x18x64xf32, #tpu.memory_space<vmem>>, vector<16x16x64xf32>
    %33 = vector.shape_cast %32 : vector<16x16x64xf32> to vector<256x64xf32>
    %34 = arith.truncf %33 : vector<256x64xf32> to vector<256x64xbf16>
    %c2_38 = arith.constant 2 : index
    %c0_39 = arith.constant 0 : index
    %c0_40 = arith.constant 0 : index
    %35 = vector.load %arg4[%c2_38, %c0_39, %c0_40] : memref<9x64x64xbf16, #tpu.memory_space<vmem>>, vector<1x64x64xbf16>
    %36 = vector.shape_cast %35 : vector<1x64x64xbf16> to vector<64x64xbf16>
    %cst_41 = arith.constant dense<0.000000e+00> : vector<256x64xf32>
    %37 = tpu.matmul %34, %36, %cst_41 {dimension_numbers = #tpu.dot_dimension_numbers<[1], [0], [0], [1], [0, 0, 1, 1], [], []>} : vector<256x64xbf16>, vector<64x64xbf16>, vector<256x64xf32> -> vector<256x64xf32>
    %38 = arith.addf %31, %37 : vector<256x64xf32>
    %c1_42 = arith.constant 1 : index
    %c0_43 = arith.constant 0 : index
    %c0_44 = arith.constant 0 : index
    %39 = vector.load %arg13[%c1_42, %c0_43, %c0_44] : memref<18x18x64xf32, #tpu.memory_space<vmem>>, vector<16x16x64xf32>
    %40 = vector.shape_cast %39 : vector<16x16x64xf32> to vector<256x64xf32>
    %41 = arith.truncf %40 : vector<256x64xf32> to vector<256x64xbf16>
    %c3 = arith.constant 3 : index
    %c0_45 = arith.constant 0 : index
    %c0_46 = arith.constant 0 : index
    %42 = vector.load %arg4[%c3, %c0_45, %c0_46] : memref<9x64x64xbf16, #tpu.memory_space<vmem>>, vector<1x64x64xbf16>
    %43 = vector.shape_cast %42 : vector<1x64x64xbf16> to vector<64x64xbf16>
    %cst_47 = arith.constant dense<0.000000e+00> : vector<256x64xf32>
    %44 = tpu.matmul %41, %43, %cst_47 {dimension_numbers = #tpu.dot_dimension_numbers<[1], [0], [0], [1], [0, 0, 1, 1], [], []>} : vector<256x64xbf16>, vector<64x64xbf16>, vector<256x64xf32> -> vector<256x64xf32>
    %45 = arith.addf %38, %44 : vector<256x64xf32>
    %c1_48 = arith.constant 1 : index
    %c1_49 = arith.constant 1 : index
    %c0_50 = arith.constant 0 : index
    %46 = vector.load %arg13[%c1_48, %c1_49, %c0_50] : memref<18x18x64xf32, #tpu.memory_space<vmem>>, vector<16x16x64xf32>
    %47 = vector.shape_cast %46 : vector<16x16x64xf32> to vector<256x64xf32>
    %48 = arith.truncf %47 : vector<256x64xf32> to vector<256x64xbf16>
    %c4 = arith.constant 4 : index
    %c0_51 = arith.constant 0 : index
    %c0_52 = arith.constant 0 : index
    %49 = vector.load %arg4[%c4, %c0_51, %c0_52] : memref<9x64x64xbf16, #tpu.memory_space<vmem>>, vector<1x64x64xbf16>
    %50 = vector.shape_cast %49 : vector<1x64x64xbf16> to vector<64x64xbf16>
    %cst_53 = arith.constant dense<0.000000e+00> : vector<256x64xf32>
    %51 = tpu.matmul %48, %50, %cst_53 {dimension_numbers = #tpu.dot_dimension_numbers<[1], [0], [0], [1], [0, 0, 1, 1], [], []>} : vector<256x64xbf16>, vector<64x64xbf16>, vector<256x64xf32> -> vector<256x64xf32>
    %52 = arith.addf %45, %51 : vector<256x64xf32>
    %c1_54 = arith.constant 1 : index
    %c2_55 = arith.constant 2 : index
    %c0_56 = arith.constant 0 : index
    %53 = vector.load %arg13[%c1_54, %c2_55, %c0_56] : memref<18x18x64xf32, #tpu.memory_space<vmem>>, vector<16x16x64xf32>
    %54 = vector.shape_cast %53 : vector<16x16x64xf32> to vector<256x64xf32>
    %55 = arith.truncf %54 : vector<256x64xf32> to vector<256x64xbf16>
    %c5 = arith.constant 5 : index
    %c0_57 = arith.constant 0 : index
    %c0_58 = arith.constant 0 : index
    %56 = vector.load %arg4[%c5, %c0_57, %c0_58] : memref<9x64x64xbf16, #tpu.memory_space<vmem>>, vector<1x64x64xbf16>
    %57 = vector.shape_cast %56 : vector<1x64x64xbf16> to vector<64x64xbf16>
    %cst_59 = arith.constant dense<0.000000e+00> : vector<256x64xf32>
    %58 = tpu.matmul %55, %57, %cst_59 {dimension_numbers = #tpu.dot_dimension_numbers<[1], [0], [0], [1], [0, 0, 1, 1], [], []>} : vector<256x64xbf16>, vector<64x64xbf16>, vector<256x64xf32> -> vector<256x64xf32>
    %59 = arith.addf %52, %58 : vector<256x64xf32>
    %c2_60 = arith.constant 2 : index
    %c0_61 = arith.constant 0 : index
    %c0_62 = arith.constant 0 : index
    %60 = vector.load %arg13[%c2_60, %c0_61, %c0_62] : memref<18x18x64xf32, #tpu.memory_space<vmem>>, vector<16x16x64xf32>
    %61 = vector.shape_cast %60 : vector<16x16x64xf32> to vector<256x64xf32>
    %62 = arith.truncf %61 : vector<256x64xf32> to vector<256x64xbf16>
    %c6 = arith.constant 6 : index
    %c0_63 = arith.constant 0 : index
    %c0_64 = arith.constant 0 : index
    %63 = vector.load %arg4[%c6, %c0_63, %c0_64] : memref<9x64x64xbf16, #tpu.memory_space<vmem>>, vector<1x64x64xbf16>
    %64 = vector.shape_cast %63 : vector<1x64x64xbf16> to vector<64x64xbf16>
    %cst_65 = arith.constant dense<0.000000e+00> : vector<256x64xf32>
    %65 = tpu.matmul %62, %64, %cst_65 {dimension_numbers = #tpu.dot_dimension_numbers<[1], [0], [0], [1], [0, 0, 1, 1], [], []>} : vector<256x64xbf16>, vector<64x64xbf16>, vector<256x64xf32> -> vector<256x64xf32>
    %66 = arith.addf %59, %65 : vector<256x64xf32>
    %c2_66 = arith.constant 2 : index
    %c1_67 = arith.constant 1 : index
    %c0_68 = arith.constant 0 : index
    %67 = vector.load %arg13[%c2_66, %c1_67, %c0_68] : memref<18x18x64xf32, #tpu.memory_space<vmem>>, vector<16x16x64xf32>
    %68 = vector.shape_cast %67 : vector<16x16x64xf32> to vector<256x64xf32>
    %69 = arith.truncf %68 : vector<256x64xf32> to vector<256x64xbf16>
    %c7 = arith.constant 7 : index
    %c0_69 = arith.constant 0 : index
    %c0_70 = arith.constant 0 : index
    %70 = vector.load %arg4[%c7, %c0_69, %c0_70] : memref<9x64x64xbf16, #tpu.memory_space<vmem>>, vector<1x64x64xbf16>
    %71 = vector.shape_cast %70 : vector<1x64x64xbf16> to vector<64x64xbf16>
    %cst_71 = arith.constant dense<0.000000e+00> : vector<256x64xf32>
    %72 = tpu.matmul %69, %71, %cst_71 {dimension_numbers = #tpu.dot_dimension_numbers<[1], [0], [0], [1], [0, 0, 1, 1], [], []>} : vector<256x64xbf16>, vector<64x64xbf16>, vector<256x64xf32> -> vector<256x64xf32>
    %73 = arith.addf %66, %72 : vector<256x64xf32>
    %c2_72 = arith.constant 2 : index
    %c2_73 = arith.constant 2 : index
    %c0_74 = arith.constant 0 : index
    %74 = vector.load %arg13[%c2_72, %c2_73, %c0_74] : memref<18x18x64xf32, #tpu.memory_space<vmem>>, vector<16x16x64xf32>
    %75 = vector.shape_cast %74 : vector<16x16x64xf32> to vector<256x64xf32>
    %76 = arith.truncf %75 : vector<256x64xf32> to vector<256x64xbf16>
    %c8 = arith.constant 8 : index
    %c0_75 = arith.constant 0 : index
    %c0_76 = arith.constant 0 : index
    %77 = vector.load %arg4[%c8, %c0_75, %c0_76] : memref<9x64x64xbf16, #tpu.memory_space<vmem>>, vector<1x64x64xbf16>
    %78 = vector.shape_cast %77 : vector<1x64x64xbf16> to vector<64x64xbf16>
    %cst_77 = arith.constant dense<0.000000e+00> : vector<256x64xf32>
    %79 = tpu.matmul %76, %78, %cst_77 {dimension_numbers = #tpu.dot_dimension_numbers<[1], [0], [0], [1], [0, 0, 1, 1], [], []>} : vector<256x64xbf16>, vector<64x64xbf16>, vector<256x64xf32> -> vector<256x64xf32>
    %80 = arith.addf %73, %79 : vector<256x64xf32>
    %c0_78 = arith.constant 0 : index
    %c0_79 = arith.constant 0 : index
    %81 = vector.load %arg5[%c0_78, %c0_79] : memref<1x64xf32, #tpu.memory_space<vmem>>, vector<1x64xf32>
    %82 = vector.broadcast %81 : vector<1x64xf32> to vector<256x64xf32>
    %83 = arith.addf %80, %82 : vector<256x64xf32>
    %cst_80 = arith.constant 1.000000e-03 : f32
    %84 = vector.broadcast %cst_80 : f32 to vector<256x64xf32>
    %85 = arith.mulf %84, %83 : vector<256x64xf32>
    %86 = arith.maximumf %83, %85 : vector<256x64xf32>
    %cst_81 = arith.constant dense<0.000000e+00> : vector<64xf32>
    %87 = vector.multi_reduction <add>, %86, %cst_81 [0] : vector<256x64xf32> to vector<64xf32>
    %88 = vector.shape_cast %87 : vector<64xf32> to vector<1x64xf32>
    %cst_82 = arith.constant 2.560000e+02 : f32
    %89 = vector.broadcast %cst_82 : f32 to vector<1x64xf32>
    %90 = arith.divf %88, %89 : vector<1x64xf32>
    %c0_83 = arith.constant 0 : index
    %c0_84 = arith.constant 0 : index
    %91 = vector.load %arg6[%c0_83, %c0_84] : memref<64x64xf32, #tpu.memory_space<vmem>>, vector<64x64xf32>
    %92 = vector.broadcast %90 : vector<1x64xf32> to vector<64x64xf32>
    %93 = arith.mulf %91, %92 : vector<64x64xf32>
    %cst_85 = arith.constant dense<0.000000e+00> : vector<64xf32>
    %94 = vector.multi_reduction <add>, %93, %cst_85 [1] : vector<64x64xf32> to vector<64xf32>
    %95 = vector.shape_cast %94 : vector<64xf32> to vector<64x1xf32>
    %c0_86 = arith.constant 0 : index
    %c0_87 = arith.constant 0 : index
    %96 = vector.load %arg7[%c0_86, %c0_87] : memref<64x1xf32, #tpu.memory_space<vmem>>, vector<64x1xf32>
    %97 = arith.addf %95, %96 : vector<64x1xf32>
    %cst_88 = arith.constant 0.000000e+00 : f32
    %98 = vector.broadcast %cst_88 : f32 to vector<64x1xf32>
    %99 = arith.maximumf %97, %98 : vector<64x1xf32>
    %c0_89 = arith.constant 0 : index
    %c0_90 = arith.constant 0 : index
    %100 = vector.load %arg8[%c0_89, %c0_90] : memref<64x64xf32, #tpu.memory_space<vmem>>, vector<64x64xf32>
    %101 = vector.broadcast %99 : vector<64x1xf32> to vector<64x64xf32>
    %102 = arith.mulf %100, %101 : vector<64x64xf32>
    %cst_91 = arith.constant dense<0.000000e+00> : vector<64xf32>
    %103 = vector.multi_reduction <add>, %102, %cst_91 [0] : vector<64x64xf32> to vector<64xf32>
    %104 = vector.shape_cast %103 : vector<64xf32> to vector<1x64xf32>
    %c0_92 = arith.constant 0 : index
    %c0_93 = arith.constant 0 : index
    %105 = vector.load %arg9[%c0_92, %c0_93] : memref<1x64xf32, #tpu.memory_space<vmem>>, vector<1x64xf32>
    %106 = arith.addf %104, %105 : vector<1x64xf32>
    %cst_94 = arith.constant 0.000000e+00 : f32
    %107 = vector.broadcast %cst_94 : f32 to vector<1x64xf32>
    %108 = arith.subf %107, %106 : vector<1x64xf32>
    %109 = math.exp %108 : vector<1x64xf32>
    %cst_95 = arith.constant 1.000000e+00 : f32
    %110 = vector.broadcast %cst_95 : f32 to vector<1x64xf32>
    %111 = arith.addf %110, %109 : vector<1x64xf32>
    %cst_96 = arith.constant 1.000000e+00 : f32
    %112 = vector.broadcast %cst_96 : f32 to vector<1x64xf32>
    %113 = arith.divf %112, %111 : vector<1x64xf32>
    %114 = vector.broadcast %113 : vector<1x64xf32> to vector<256x64xf32>
    %115 = arith.mulf %86, %114 : vector<256x64xf32>
    %116 = arith.truncf %115 : vector<256x64xf32> to vector<256x64xbf16>
    %c0_97 = arith.constant 0 : index
    %c0_98 = arith.constant 0 : index
    %117 = vector.load %arg10[%c0_97, %c0_98] : memref<64x256xbf16, #tpu.memory_space<vmem>>, vector<64x256xbf16>
    %cst_99 = arith.constant dense<0.000000e+00> : vector<256x256xf32>
    %118 = tpu.matmul %116, %117, %cst_99 {dimension_numbers = #tpu.dot_dimension_numbers<[1], [0], [0], [1], [0, 0, 1, 1], [], []>} : vector<256x64xbf16>, vector<64x256xbf16>, vector<256x256xf32> -> vector<256x256xf32>
    %c0_100 = arith.constant 0 : index
    %c0_101 = arith.constant 0 : index
    %119 = vector.load %arg11[%c0_100, %c0_101] : memref<1x256xf32, #tpu.memory_space<vmem>>, vector<1x256xf32>
    %120 = vector.broadcast %119 : vector<1x256xf32> to vector<256x256xf32>
    %121 = arith.addf %118, %120 : vector<256x256xf32>
    %122 = arith.addf %121, %1 : vector<256x256xf32>
    %cst_102 = arith.constant 0.000000e+00 : f32
    %123 = vector.broadcast %cst_102 : f32 to vector<256x256xf32>
    %124 = arith.maximumf %122, %123 : vector<256x256xf32>
    %c0_103 = arith.constant 0 : index
    %c0_104 = arith.constant 0 : index
    %c0_105 = arith.constant 0 : index
    %125 = vector.load %arg12[%c0_103, %c0_104, %c0_105] : memref<1x256x256xf32, #tpu.memory_space<vmem>>, vector<1x256x256xf32>
    %126 = vector.shape_cast %125 : vector<1x256x256xf32> to vector<256x256xf32>
    %127 = vector.shape_cast %124 : vector<256x256xf32> to vector<1x256x256xf32>
    tpu.vector_store %arg12[%c0_103, %c0_104, %c0_105], %127 {strides = array<i32>} : memref<1x256x256xf32, #tpu.memory_space<vmem>>, vector<1x256x256xf32>,
    return
  }
  func.func @transform_0(%arg0: i32) -> (i32, i32, i32) {
    %c0_i32 = arith.constant 0 : i32
    %c0_i32_0 = arith.constant 0 : i32
    %c0_i32_1 = arith.constant 0 : i32
    return %arg0, %c0_i32, %c0_i32_0 : i32, i32, i32
  }
  func.func @transform_1(%arg0: i32) -> (i32, i32) {
    %c0_i32 = arith.constant 0 : i32
    %c0_i32_0 = arith.constant 0 : i32
    %c0_i32_1 = arith.constant 0 : i32
    return %c0_i32, %c0_i32_0 : i32, i32
  }
  func.func @transform_2(%arg0: i32) -> (i32, i32) {
    %c0_i32 = arith.constant 0 : i32
    %c0_i32_0 = arith.constant 0 : i32
    %c0_i32_1 = arith.constant 0 : i32
    return %c0_i32, %c0_i32_0 : i32, i32
  }
  func.func @transform_3(%arg0: i32) -> (i32, i32, i32) {
    %c0_i32 = arith.constant 0 : i32
    %c0_i32_0 = arith.constant 0 : i32
    %c0_i32_1 = arith.constant 0 : i32
    %c0_i32_2 = arith.constant 0 : i32
    return %c0_i32, %c0_i32_0, %c0_i32_1 : i32, i32, i32
  }
  func.func @transform_4(%arg0: i32) -> (i32, i32) {
    %c0_i32 = arith.constant 0 : i32
    %c0_i32_0 = arith.constant 0 : i32
    %c0_i32_1 = arith.constant 0 : i32
    return %c0_i32, %c0_i32_0 : i32, i32
  }
  func.func @transform_5(%arg0: i32) -> (i32, i32) {
    %c0_i32 = arith.constant 0 : i32
    %c0_i32_0 = arith.constant 0 : i32
    %c0_i32_1 = arith.constant 0 : i32
    return %c0_i32, %c0_i32_0 : i32, i32
  }
  func.func @transform_6(%arg0: i32) -> (i32, i32) {
    %c0_i32 = arith.constant 0 : i32
    %c0_i32_0 = arith.constant 0 : i32
    %c0_i32_1 = arith.constant 0 : i32
    return %c0_i32, %c0_i32_0 : i32, i32
  }
  func.func @transform_7(%arg0: i32) -> (i32, i32) {
    %c0_i32 = arith.constant 0 : i32
    %c0_i32_0 = arith.constant 0 : i32
    %c0_i32_1 = arith.constant 0 : i32
    return %c0_i32, %c0_i32_0 : i32, i32
  }
  func.func @transform_8(%arg0: i32) -> (i32, i32) {
    %c0_i32 = arith.constant 0 : i32
    %c0_i32_0 = arith.constant 0 : i32
    %c0_i32_1 = arith.constant 0 : i32
    return %c0_i32, %c0_i32_0 : i32, i32
  }
  func.func @transform_9(%arg0: i32) -> (i32, i32) {
    %c0_i32 = arith.constant 0 : i32
    %c0_i32_0 = arith.constant 0 : i32
    %c0_i32_1 = arith.constant 0 : i32
    return %c0_i32, %c0_i32_0 : i32, i32
  }
  func.func @transform_10(%arg0: i32) -> (i32, i32) {
    %c0_i32 = arith.constant 0 : i32
    %c0_i32_0 = arith.constant 0 : i32
    %c0_i32_1 = arith.constant 0 : i32
    return %c0_i32, %c0_i32_0 : i32, i32
  }
  func.func @transform_11(%arg0: i32) -> (i32, i32, i32) {
    %c0_i32 = arith.constant 0 : i32
    %c0_i32_0 = arith.constant 0 : i32
    %c0_i32_1 = arith.constant 0 : i32
    return %arg0, %c0_i32, %c0_i32_0 : i32, i32, i32
  }
}

</mosaic_0001>

<llo_original>
// kernel: tpu_custom_call.1
$region0: #{tpu_custom_call.1}
  #allocation0 [shape = 'u32[]', space=smem, size = 0x4, offset = 0x4, fixed_abs, tag = 'smem constant byte address 0x4 - core index']
  #allocation1 [shape = 'u32[144,128]{1,0:T(1,128)}', space=vmem, size = 0x12000, scoped, tag = 'internal scratch']
  #allocation2 [shape = 'f32[18,18,64]{2,1,0:T(8,128)}', space=vmem, size = 0x36000, scoped, tag = 'scratch operand']
  %s0 = inlined_call_operand.hbm [shape: f32[2,256,256], index: 0, kind: input, shape index: {}]
  %s1 = inlined_call_operand.vmem [shape: bf16[256,64], index: 1, kind: input, shape index: {}]
  %s2 = inlined_call_operand.vmem [shape: f32[1,64], index: 2, kind: input, shape index: {}]
  %s3 = inlined_call_operand.hbm [shape: bf16[9,64,64], index: 3, kind: input, shape index: {}]
  %s4 = inlined_call_operand.vmem [shape: f32[1,64], index: 4, kind: input, shape index: {}]
  %s5 = inlined_call_operand.vmem [shape: f32[64,64], index: 5, kind: input, shape index: {}]
  %s6 = inlined_call_operand.vmem [shape: f32[64,1], index: 6, kind: input, shape index: {}]
  %s7 = inlined_call_operand.vmem [shape: f32[64,64], index: 7, kind: input, shape index: {}]
  %s8 = inlined_call_operand.vmem [shape: f32[1,64], index: 8, kind: input, shape index: {}]
  %s9 = inlined_call_operand.vmem [shape: bf16[64,256], index: 9, kind: input, shape index: {}]
  %s10 = inlined_call_operand.vmem [shape: f32[1,256], index: 10, kind: input, shape index: {}]
  %s11 = inlined_call_operand.hbm [shape: f32[2,256,256], index: 11, kind: output, shape index: {}]
  %s12 = sld [smem:[#allocation0]]
  $region85: #{tpu_custom_call.1} parent=0
    _
  %s14 = ssub.s32 1, %s12
  %s15 = scalar_select 0, %s14, %s12
  $region1: #{tpu_custom_call.1} parent=0
    #allocation3 [shape = 'u8[524288]{0}', space=vmem, size = 0x80000, scoped, tag = 'input window, operand 0']
    #allocation4 [shape = 's32[2]{0}', space=sflag, size = 0x8, scoped, tag = 'scoped memory for tpu_custom_call.1']
    #allocation5 [shape = 's32[2]{0}', space=sflag, size = 0x8, scoped, tag = 'scoped memory for tpu_custom_call.1']
    #allocation6 [shape = 'u8[147456]{0}', space=vmem, size = 0x24000, scoped, tag = 'input window, operand 3, single buffered']
    #allocation7 [shape = 's32[1]{0}', space=sflag, size = 0x4, scoped, tag = 'scoped memory for tpu_custom_call.1']
    #allocation8 [shape = 'u8[524288]{0}', space=vmem, size = 0x80000, scoped, tag = 'output window, operand 0']
    %16 = vsyncpa [#allocation4], 0
    %s17 = scalar_lea.sflag [#allocation4], 1
    %18 = vsyncpa %s17, 0
    %19 = vsyncpa [#allocation7], 0
    %20 = vsyncpa [#allocation5], 0
    %s21 = scalar_lea.sflag [#allocation5], 1
    %22 = vsyncpa %s21, 0
    loop: start=0, step=1, limit=4
    $region2: #{tpu_custom_call.1} parent=1 // loop_pre_header
      _
    $region3: #{tpu_custom_call.1} parent=1 // loop_header
      %s24 = sphi 0, %s28
      %p25 = scmp.ge.s32.totalorder %s24, 4
      %s34 = sphi 0, %s36
      %s37 = sphi 0, %s34
      %s38 = sphi 0, %s37
      %s54 = sphi 0, %s38
      %s58 = sphi 0, %s58
      %s60 = sphi 0, %s58
      %s61 = sphi 0, %s60
      %s75 = sphi 0, %s61
      %s79 = sphi 0, %s79
      %s81 = sphi 0, %s79
      %s82 = sphi 0, %s81
      %s96 = sphi 0, %s82
      %s100 = sphi 0, %s100
      %s102 = sphi 0, %s100
      %s103 = sphi 0, %s102
      %s117 = sphi 0, %s103
      %s121 = sphi 0, %s121
      %s123 = sphi 0, %s121
      %s124 = sphi 0, %s123
      %s138 = sphi 0, %s124
      %s142 = sphi 0, %s142
      %s144 = sphi 0, %s142
      %s145 = sphi 0, %s144
      %s159 = sphi 0, %s145
      %s163 = sphi 0, %s163
      %s165 = sphi 0, %s163
      %s166 = sphi 0, %s165
      %s180 = sphi 0, %s166
      %s184 = sphi 0, %s184
      %s186 = sphi 0, %s184
      %s187 = sphi 0, %s186
      %s201 = sphi 0, %s187
      %s205 = sphi 0, %s205
      %s207 = sphi 0, %s205
      %s208 = sphi 0, %s207
      %s222 = sphi 0, %s208
      %s226 = sphi 0, %s226
      %s228 = sphi 0, %s226
      %s229 = sphi 0, %s228
      %s243 = sphi 0, %s229
      %s247 = sphi 0, %s247
      %s249 = sphi 0, %s247
      %s250 = sphi 0, %s249
      %s264 = sphi 0, %s250
      %s270 = sphi 0, %s272
      %s273 = sphi 0, %s270
      %s274 = sphi 0, %s273
      %s290 = sphi 0, %s274
    $region4: #{tpu_custom_call.1} parent=1 // loop_header_branch
      %27 = sbr.rel (%p25) target = $region8
    $region5: #{tpu_custom_call.1} parent=1 // loop_body
      %s29 = ssub.s32 %s24, 1
      %s30 = ssub.s32 %s24, 2
      %s31 = sadd.s32 %s24, 1
      %s32 = ssub.s32 %s24, %s31
      %p33 = scmp.eq.s32.totalorder %s32, 0
      %s35 = sadd.s32 %s34, 1
      %s36 = scalar_select %p33, %s34, %s35
      %p39 = pneg %p33
      %p40 = scmp.eq.s32.totalorder %s24, 1
      %p41 = por %p39, %p40
      %p42 = scmp.ne.s32.totalorder %s34, %s37
      %p43 = scmp.eq.s32.totalorder %s24, 0
      %p44 = por %p42, %p43
      %p45 = scmp.ne.s32.totalorder %s34, %s37
      %p46 = scmp.eq.s32.totalorder %s29, 1
      %p47 = por %p45, %p46
      %p48 = scmp.ne.s32.totalorder %s37, %s38
      %p49 = scmp.eq.s32.totalorder %s29, 0
      %p50 = por %p48, %p49
      %p51 = scmp.ne.s32.totalorder %s37, %s38
      %p52 = scmp.eq.s32.totalorder %s30, 1
      %p53 = por %p51, %p52
      %p55 = scmp.ne.s32.totalorder %s38, %s54
      %p56 = scmp.eq.s32.totalorder %s30, 0
      %p57 = por %p55, %p56
      %s59 = sadd.s32 %s58, 1
      %p62 = scmp.eq.s32.totalorder %s24, 1
      %p63 = scmp.ne.s32.totalorder %s58, %s60
      %p64 = scmp.eq.s32.totalorder %s24, 0
      %p65 = por %p63, %p64
      %p66 = scmp.ne.s32.totalorder %s58, %s60
      %p67 = scmp.eq.s32.totalorder %s29, 1
      %p68 = por %p66, %p67
      %p69 = scmp.ne.s32.totalorder %s60, %s61
      %p70 = scmp.eq.s32.totalorder %s29, 0
      %p71 = por %p69, %p70
      %p72 = scmp.ne.s32.totalorder %s60, %s61
      %p73 = scmp.eq.s32.totalorder %s30, 1
      %p74 = por %p72, %p73
      %p76 = scmp.ne.s32.totalorder %s61, %s75
      %p77 = scmp.eq.s32.totalorder %s30, 0
      %p78 = por %p76, %p77
      %s80 = sadd.s32 %s79, 1
      %p83 = scmp.eq.s32.totalorder %s24, 1
      %p84 = scmp.ne.s32.totalorder %s79, %s81
      %p85 = scmp.eq.s32.totalorder %s24, 0
      %p86 = por %p84, %p85
      %p87 = scmp.ne.s32.totalorder %s79, %s81
      %p88 = scmp.eq.s32.totalorder %s29, 1
      %p89 = por %p87, %p88
      %p90 = scmp.ne.s32.totalorder %s81, %s82
      %p91 = scmp.eq.s32.totalorder %s29, 0
      %p92 = por %p90, %p91
      %p93 = scmp.ne.s32.totalorder %s81, %s82
      %p94 = scmp.eq.s32.totalorder %s30, 1
      %p95 = por %p93, %p94
      %p97 = scmp.ne.s32.totalorder %s82, %s96
      %p98 = scmp.eq.s32.totalorder %s30, 0
      %p99 = por %p97, %p98
      %s101 = sadd.s32 %s100, 1
      %p104 = scmp.eq.s32.totalorder %s24, 1
      %p105 = scmp.ne.s32.totalorder %s100, %s102
      %p106 = scmp.eq.s32.totalorder %s24, 0
      %p107 = por %p105, %p106
      %p108 = scmp.ne.s32.totalorder %s100, %s102
      %p109 = scmp.eq.s32.totalorder %s29, 1
      %p110 = por %p108, %p109
      %p111 = scmp.ne.s32.totalorder %s102, %s103
      %p112 = scmp.eq.s32.totalorder %s29, 0
      %p113 = por %p111, %p112
      %p114 = scmp.ne.s32.totalorder %s102, %s103
      %p115 = scmp.eq.s32.totalorder %s30, 1
      %p116 = por %p114, %p115
      %p118 = scmp.ne.s32.totalorder %s103, %s117
      %p119 = scmp.eq.s32.totalorder %s30, 0
      %p120 = por %p118, %p119
      %s122 = sadd.s32 %s121, 1
      %p125 = scmp.eq.s32.totalorder %s24, 1
      %p126 = scmp.ne.s32.totalorder %s121, %s123
      %p127 = scmp.eq.s32.totalorder %s24, 0
      %p128 = por %p126, %p127
      %p129 = scmp.ne.s32.totalorder %s121, %s123
      %p130 = scmp.eq.s32.totalorder %s29, 1
      %p131 = por %p129, %p130
      %p132 = scmp.ne.s32.totalorder %s123, %s124
      %p133 = scmp.eq.s32.totalorder %s29, 0
      %p134 = por %p132, %p133
      %p135 = scmp.ne.s32.totalorder %s123, %s124
      %p136 = scmp.eq.s32.totalorder %s30, 1
      %p137 = por %p135, %p136
      %p139 = scmp.ne.s32.totalorder %s124, %s138
      %p140 = scmp.eq.s32.totalorder %s30, 0
      %p141 = por %p139, %p140
      %s143 = sadd.s32 %s142, 1
      %p146 = scmp.eq.s32.totalorder %s24, 1
      %p147 = scmp.ne.s32.totalorder %s142, %s144
      %p148 = scmp.eq.s32.totalorder %s24, 0
      %p149 = por %p147, %p148
      %p150 = scmp.ne.s32.totalorder %s142, %s144
      %p151 = scmp.eq.s32.totalorder %s29, 1
      %p152 = por %p150, %p151
      %p153 = scmp.ne.s32.totalorder %s144, %s145
      %p154 = scmp.eq.s32.totalorder %s29, 0
      %p155 = por %p153, %p154
      %p156 = scmp.ne.s32.totalorder %s144, %s145
      %p157 = scmp.eq.s32.totalorder %s30, 1
      %p158 = por %p156, %p157
      %p160 = scmp.ne.s32.totalorder %s145, %s159
      %p161 = scmp.eq.s32.totalorder %s30, 0
      %p162 = por %p160, %p161
      %s164 = sadd.s32 %s163, 1
      %p167 = scmp.eq.s32.totalorder %s24, 1
      %p168 = scmp.ne.s32.totalorder %s163, %s165
      %p169 = scmp.eq.s32.totalorder %s24, 0
      %p170 = por %p168, %p169
      %p171 = scmp.ne.s32.totalorder %s163, %s165
      %p172 = scmp.eq.s32.totalorder %s29, 1
      %p173 = por %p171, %p172
      %p174 = scmp.ne.s32.totalorder %s165, %s166
      %p175 = scmp.eq.s32.totalorder %s29, 0
      %p176 = por %p174, %p175
      %p177 = scmp.ne.s32.totalorder %s165, %s166
      %p178 = scmp.eq.s32.totalorder %s30, 1
      %p179 = por %p177, %p178
      %p181 = scmp.ne.s32.totalorder %s166, %s180
      %p182 = scmp.eq.s32.totalorder %s30, 0
      %p183 = por %p181, %p182
      %s185 = sadd.s32 %s184, 1
      %p188 = scmp.eq.s32.totalorder %s24, 1
      %p189 = scmp.ne.s32.totalorder %s184, %s186
      %p190 = scmp.eq.s32.totalorder %s24, 0
      %p191 = por %p189, %p190
      %p192 = scmp.ne.s32.totalorder %s184, %s186
      %p193 = scmp.eq.s32.totalorder %s29, 1
      %p194 = por %p192, %p193
      %p195 = scmp.ne.s32.totalorder %s186, %s187
      %p196 = scmp.eq.s32.totalorder %s29, 0
      %p197 = por %p195, %p196
      %p198 = scmp.ne.s32.totalorder %s186, %s187
      %p199 = scmp.eq.s32.totalorder %s30, 1
      %p200 = por %p198, %p199
      %p202 = scmp.ne.s32.totalorder %s187, %s201
      %p203 = scmp.eq.s32.totalorder %s30, 0
      %p204 = por %p202, %p203
      %s206 = sadd.s32 %s205, 1
      %p209 = scmp.eq.s32.totalorder %s24, 1
      %p210 = scmp.ne.s32.totalorder %s205, %s207
      %p211 = scmp.eq.s32.totalorder %s24, 0
      %p212 = por %p210, %p211
      %p213 = scmp.ne.s32.totalorder %s205, %s207
      %p214 = scmp.eq.s32.totalorder %s29, 1
      %p215 = por %p213, %p214
      %p216 = scmp.ne.s32.totalorder %s207, %s208
      %p217 = scmp.eq.s32.totalorder %s29, 0
      %p218 = por %p216, %p217
      %p219 = scmp.ne.s32.totalorder %s207, %s208
      %p220 = scmp.eq.s32.totalorder %s30, 1
      %p221 = por %p219, %p220
      %p223 = scmp.ne.s32.totalorder %s208, %s222
      %p224 = scmp.eq.s32.totalorder %s30, 0
      %p225 = por %p223, %p224
      %s227 = sadd.s32 %s226, 1
      %p230 = scmp.eq.s32.totalorder %s24, 1
      %p231 = scmp.ne.s32.totalorder %s226, %s228
      %p232 = scmp.eq.s32.totalorder %s24, 0
      %p233 = por %p231, %p232
      %p234 = scmp.ne.s32.totalorder %s226, %s228
      %p235 = scmp.eq.s32.totalorder %s29, 1
      %p236 = por %p234, %p235
      %p237 = scmp.ne.s32.totalorder %s228, %s229
      %p238 = scmp.eq.s32.totalorder %s29, 0
      %p239 = por %p237, %p238
      %p240 = scmp.ne.s32.totalorder %s228, %s229
      %p241 = scmp.eq.s32.totalorder %s30, 1
      %p242 = por %p240, %p241
      %p244 = scmp.ne.s32.totalorder %s229, %s243
      %p245 = scmp.eq.s32.totalorder %s30, 0
      %p246 = por %p244, %p245
      %s248 = sadd.s32 %s247, 1
      %p251 = scmp.eq.s32.totalorder %s24, 1
      %p252 = scmp.ne.s32.totalorder %s247, %s249
      %p253 = scmp.eq.s32.totalorder %s24, 0
      %p254 = por %p252, %p253
      %p255 = scmp.ne.s32.totalorder %s247, %s249
      %p256 = scmp.eq.s32.totalorder %s29, 1
      %p257 = por %p255, %p256
      %p258 = scmp.ne.s32.totalorder %s249, %s250
      %p259 = scmp.eq.s32.totalorder %s29, 0
      %p260 = por %p258, %p259
      %p261 = scmp.ne.s32.totalorder %s249, %s250
      %p262 = scmp.eq.s32.totalorder %s30, 1
      %p263 = por %p261, %p262
      %p265 = scmp.ne.s32.totalorder %s250, %s264
      %p266 = scmp.eq.s32.totalorder %s30, 0
      %p267 = por %p265, %p266
      %s268 = ssub.s32 %s24, %s31
      %p269 = scmp.eq.s32.totalorder %s268, 0
      %s271 = sadd.s32 %s270, 1
      %s272 = scalar_select %p269, %s270, %s271
      %p275 = pneg %p269
      %p276 = scmp.eq.s32.totalorder %s24, 1
      %p277 = por %p275, %p276
      %p278 = scmp.ne.s32.totalorder %s270, %s273
      %p279 = scmp.eq.s32.totalorder %s24, 0
      %p280 = por %p278, %p279
      %p281 = scmp.ne.s32.totalorder %s270, %s273
      %p282 = scmp.eq.s32.totalorder %s29, 1
      %p283 = por %p281, %p282
      %p284 = scmp.ne.s32.totalorder %s273, %s274
      %p285 = scmp.eq.s32.totalorder %s29, 0
      %p286 = por %p284, %p285
      %p287 = scmp.ne.s32.totalorder %s273, %s274
      %p288 = scmp.eq.s32.totalorder %s30, 1
      %p289 = por %p287, %p288
      %p291 = scmp.ne.s32.totalorder %s274, %s290
      %p292 = scmp.eq.s32.totalorder %s30, 0
      %p293 = por %p291, %p292
      %p294 = scmp.le.s32.totalorder 1, %s24
      %p295 = scmp.lt.s32.totalorder %s24, 3
      %p296 = pnand %p294, %p295
      %p297 = pneg %p296
      // Predicated region
      $region9: #{tpu_custom_call.1} parent=5 // pred_check
        _
      $region10: #{tpu_custom_call.1} parent=5 // pred_check_branch
        %299 = sbr.rel (%p296) target = $region12
      $region11: #{tpu_custom_call.1} parent=5 // pred_region
        %s300 = ssub.s32 %s24, 1
        // Predicated region
        $region13: #{tpu_custom_call.1} parent=11 // pred_check
          %p301 = pneg %p71
        $region14: #{tpu_custom_call.1} parent=11 // pred_check_branch
          %303 = sbr.rel (%p301) target = $region16
        $region15: #{tpu_custom_call.1} parent=11 // pred_region
          _
        $region16: #{tpu_custom_call.1} parent=11 // pred_fallthru
          _
        // Predicated region
        $region17: #{tpu_custom_call.1} parent=11 // pred_check
          %p304 = pneg %p92
        $region18: #{tpu_custom_call.1} parent=11 // pred_check_branch
          %306 = sbr.rel (%p304) target = $region20
        $region19: #{tpu_custom_call.1} parent=11 // pred_region
          _
        $region20: #{tpu_custom_call.1} parent=11 // pred_fallthru
          _
        // Predicated region
        $region21: #{tpu_custom_call.1} parent=11 // pred_check
          %p307 = pneg %p113
        $region22: #{tpu_custom_call.1} parent=11 // pred_check_branch
          %309 = sbr.rel (%p307) target = $region24
        $region23: #{tpu_custom_call.1} parent=11 // pred_region
          %s311 = ssub.s32 4608, 4608
          %312 = vsyncadd [#allocation7], %s311
          %s313 = sshll.u32 [#allocation6], 4
          %s314 = int_to_ptr.vmem [resolvable:$true] %s313
          %319 = dma.hbm_to_vmem [thread:$0]  %s3, 4608, %s314, [#allocation7], 64, 64, 4
        $region24: #{tpu_custom_call.1} parent=11 // pred_fallthru
          _
        // Predicated region
        $region25: #{tpu_custom_call.1} parent=11 // pred_check
          %p320 = pneg %p134
        $region26: #{tpu_custom_call.1} parent=11 // pred_check_branch
          %322 = sbr.rel (%p320) target = $region28
        $region27: #{tpu_custom_call.1} parent=11 // pred_region
          _
        $region28: #{tpu_custom_call.1} parent=11 // pred_fallthru
          _
        // Predicated region
        $region29: #{tpu_custom_call.1} parent=11 // pred_check
          %p323 = pneg %p155
        $region30: #{tpu_custom_call.1} parent=11 // pred_check_branch
          %325 = sbr.rel (%p323) target = $region32
        $region31: #{tpu_custom_call.1} parent=11 // pred_region
          _
        $region32: #{tpu_custom_call.1} parent=11 // pred_fallthru
          _
        // Predicated region
        $region33: #{tpu_custom_call.1} parent=11 // pred_check
          %p326 = pneg %p176
        $region34: #{tpu_custom_call.1} parent=11 // pred_check_branch
          %328 = sbr.rel (%p326) target = $region36
        $region35: #{tpu_custom_call.1} parent=11 // pred_region
          _
        $region36: #{tpu_custom_call.1} parent=11 // pred_fallthru
          _
        // Predicated region
        $region37: #{tpu_custom_call.1} parent=11 // pred_check
          %p329 = pneg %p197
        $region38: #{tpu_custom_call.1} parent=11 // pred_check_branch
          %331 = sbr.rel (%p329) target = $region40
        $region39: #{tpu_custom_call.1} parent=11 // pred_region
          _
        $region40: #{tpu_custom_call.1} parent=11 // pred_fallthru
          _
        // Predicated region
        $region41: #{tpu_custom_call.1} parent=11 // pred_check
          %p332 = pneg %p218
        $region42: #{tpu_custom_call.1} parent=11 // pred_check_branch
          %334 = sbr.rel (%p332) target = $region44
        $region43: #{tpu_custom_call.1} parent=11 // pred_region
          _
        $region44: #{tpu_custom_call.1} parent=11 // pred_fallthru
          _
        // Predicated region
        $region45: #{tpu_custom_call.1} parent=11 // pred_check
          %p335 = pneg %p239
        $region46: #{tpu_custom_call.1} parent=11 // pred_check_branch
          %337 = sbr.rel (%p335) target = $region48
        $region47: #{tpu_custom_call.1} parent=11 // pred_region
          _
        $region48: #{tpu_custom_call.1} parent=11 // pred_fallthru
          _
        // Predicated region
        $region49: #{tpu_custom_call.1} parent=11 // pred_check
          %p338 = pneg %p260
        $region50: #{tpu_custom_call.1} parent=11 // pred_check_branch
          %340 = sbr.rel (%p338) target = $region52
        $region51: #{tpu_custom_call.1} parent=11 // pred_region
          _
        $region52: #{tpu_custom_call.1} parent=11 // pred_fallthru
          _
      $region12: #{tpu_custom_call.1} parent=5 // pred_fallthru
        _
      %p341 = scmp.lt.s32.totalorder %s24, 2
      // Predicated region
      $region53: #{tpu_custom_call.1} parent=5 // pred_check
        %p342 = pneg %p341
      $region54: #{tpu_custom_call.1} parent=5 // pred_check_branch
        %344 = sbr.rel (%p342) target = $region56
      $region55: #{tpu_custom_call.1} parent=5 // pred_region
        // Predicated region
        $region57: #{tpu_custom_call.1} parent=55 // pred_check
          %p345 = pneg %p44
        $region58: #{tpu_custom_call.1} parent=55 // pred_check_branch
          %347 = sbr.rel (%p345) target = $region60
        $region59: #{tpu_custom_call.1} parent=55 // pred_region
          %s348 = sand.u32 %s34, 1
          %s349 = scalar_lea.sflag [#allocation4], %s348
          %s350 = sand.u32 %s34, 1
          %s351 = smul.addr %s350, 512
          %s352 = scalar_lea.vmem [#allocation3], %s351
          %s354 = ssub.s32 8192, 8192
          %355 = vsyncadd %s349, %s354
          %s356 = smul.addr %s24, 64
          %s357 = smul.addr %s356, 128
          %s358 = scalar_lea.hbm %s0, %s357
          %s359 = sshll.u32 %s352, 4
          %s360 = int_to_ptr.vmem [resolvable:$true] %s359
          %365 = dma.hbm_to_vmem [thread:$0]  %s358, 8192, %s360, %s349, 256, 256, 16
        $region60: #{tpu_custom_call.1} parent=55 // pred_fallthru
          _
      $region56: #{tpu_custom_call.1} parent=5 // pred_fallthru
        _
      %p366 = scmp.le.s32.totalorder 1, %s24
      %p367 = scmp.lt.s32.totalorder %s24, 3
      %p368 = pnand %p366, %p367
      %p369 = pneg %p368
      // Predicated region
      $region61: #{tpu_custom_call.1} parent=5 // pred_check
        _
      $region62: #{tpu_custom_call.1} parent=5 // pred_check_branch
        %371 = sbr.rel (%p368) target = $region64
      $region63: #{tpu_custom_call.1} parent=5 // pred_region
        %s372 = ssub.s32 %s24, 1
        %s373 = sand.u32 %s37, 1
        %s374 = scalar_lea.sflag [#allocation4], %s373
        %s375 = sand.u32 %s37, 1
        %s376 = smul.addr %s375, 512
        %s377 = scalar_lea.vmem [#allocation3], %s376
        // Predicated region
        $region65: #{tpu_custom_call.1} parent=63 // pred_check
          %p378 = pneg %p50
        $region66: #{tpu_custom_call.1} parent=63 // pred_check_branch
          %380 = sbr.rel (%p378) target = $region68
        $region67: #{tpu_custom_call.1} parent=63 // pred_region
          %381 = dma.done %s374, 8192
        $region68: #{tpu_custom_call.1} parent=63 // pred_fallthru
          _
        // Predicated region
        $region69: #{tpu_custom_call.1} parent=63 // pred_check
          %p382 = pneg %p113
        $region70: #{tpu_custom_call.1} parent=63 // pred_check_branch
          %384 = sbr.rel (%p382) target = $region72
        $region71: #{tpu_custom_call.1} parent=63 // pred_region
          %385 = dma.done [#allocation7], 4608
        $region72: #{tpu_custom_call.1} parent=63 // pred_fallthru
          _
        %s386 = sand.u32 %s37, 1
        %s387 = scalar_lea.sflag [#allocation4], %s386
        %s388 = sand.u32 %s37, 1
        %s389 = smul.addr %s388, 512
        %s390 = scalar_lea.vmem [#allocation3], %s389
        %p391 = pneg %p50
        %p392 = pneg %p47
        %p393 = pneg %p71
        %p394 = pneg %p68
        %p395 = pneg %p92
        %p396 = pneg %p89
        %p397 = pneg %p113
        %p398 = pneg %p110
        %p399 = pneg %p134
        %p400 = pneg %p131
        %p401 = pneg %p155
        %p402 = pneg %p152
        %p403 = pneg %p176
        %p404 = pneg %p173
        %p405 = pneg %p197
        %p406 = pneg %p194
        %p407 = pneg %p218
        %p408 = pneg %p215
        %p409 = pneg %p239
        %p410 = pneg %p236
        %p411 = pneg %p260
        %p412 = pneg %p257
        %p413 = pneg %p286
        %p414 = pneg %p283
        %s415 = sand.u32 %s273, 1
        %s416 = scalar_lea.sflag [#allocation5], %s415
        %s417 = sand.u32 %s273, 1
        %s418 = smul.addr %s417, 512
        %s419 = scalar_lea.vmem [#allocation8], %s418
        %v421 = vld [vmem:[%s377] sm:$0xff]
        %v422 = vld [vmem:[%s377 + $0x8] sm:$0xff]
        %v423 = vld [vmem:[%s377 + $0x10] sm:$0xff]
        %v424 = vld [vmem:[%s377 + $0x18] sm:$0xff]
        %v425 = vld [vmem:[%s377 + $0x20] sm:$0xff]
        %v426 = vld [vmem:[%s377 + $0x28] sm:$0xff]
        %v427 = vld [vmem:[%s377 + $0x30] sm:$0xff]
        %v428 = vld [vmem:[%s377 + $0x38] sm:$0xff]
        %v429 = vld [vmem:[%s377 + $0x40] sm:$0xff]
        %v430 = vld [vmem:[%s377 + $0x48] sm:$0xff]
        %v431 = vld [vmem:[%s377 + $0x50] sm:$0xff]
        %v432 = vld [vmem:[%s377 + $0x58] sm:$0xff]
        %v433 = vld [vmem:[%s377 + $0x60] sm:$0xff]
        %v434 = vld [vmem:[%s377 + $0x68] sm:$0xff]
        %v435 = vld [vmem:[%s377 + $0x70] sm:$0xff]
        %v436 = vld [vmem:[%s377 + $0x78] sm:$0xff]
        %v437 = vld [vmem:[%s377 + $0x80] sm:$0xff]
        %v438 = vld [vmem:[%s377 + $0x88] sm:$0xff]
        %v439 = vld [vmem:[%s377 + $0x90] sm:$0xff]
        %v440 = vld [vmem:[%s377 + $0x98] sm:$0xff]
        %v441 = vld [vmem:[%s377 + $0xa0] sm:$0xff]
        %v442 = vld [vmem:[%s377 + $0xa8] sm:$0xff]
        %v443 = vld [vmem:[%s377 + $0xb0] sm:$0xff]
        %v444 = vld [vmem:[%s377 + $0xb8] sm:$0xff]
        %v445 = vld [vmem:[%s377 + $0xc0] sm:$0xff]
        %v446 = vld [vmem:[%s377 + $0xc8] sm:$0xff]
        %v447 = vld [vmem:[%s377 + $0xd0] sm:$0xff]
        %v448 = vld [vmem:[%s377 + $0xd8] sm:$0xff]
        %v449 = vld [vmem:[%s377 + $0xe0] sm:$0xff]
        %v450 = vld [vmem:[%s377 + $0xe8] sm:$0xff]
        %v451 = vld [vmem:[%s377 + $0xf0] sm:$0xff]
        %v452 = vld [vmem:[%s377 + $0xf8] sm:$0xff]
        %v453 = vld [vmem:[%s377 + $0x100] sm:$0xff]
        %v454 = vld [vmem:[%s377 + $0x108] sm:$0xff]
        %v455 = vld [vmem:[%s377 + $0x110] sm:$0xff]
        %v456 = vld [vmem:[%s377 + $0x118] sm:$0xff]
        %v457 = vld [vmem:[%s377 + $0x120] sm:$0xff]
        %v458 = vld [vmem:[%s377 + $0x128] sm:$0xff]
        %v459 = vld [vmem:[%s377 + $0x130] sm:$0xff]
        %v460 = vld [vmem:[%s377 + $0x138] sm:$0xff]
        %v461 = vld [vmem:[%s377 + $0x140] sm:$0xff]
        %v462 = vld [vmem:[%s377 + $0x148] sm:$0xff]
        %v463 = vld [vmem:[%s377 + $0x150] sm:$0xff]
        %v464 = vld [vmem:[%s377 + $0x158] sm:$0xff]
        %v465 = vld [vmem:[%s377 + $0x160] sm:$0xff]
        %v466 = vld [vmem:[%s377 + $0x168] sm:$0xff]
        %v467 = vld [vmem:[%s377 + $0x170] sm:$0xff]
        %v468 = vld [vmem:[%s377 + $0x178] sm:$0xff]
        %v469 = vld [vmem:[%s377 + $0x180] sm:$0xff]
        %v470 = vld [vmem:[%s377 + $0x188] sm:$0xff]
        %v471 = vld [vmem:[%s377 + $0x190] sm:$0xff]
        %v472 = vld [vmem:[%s377 + $0x198] sm:$0xff]
        %v473 = vld [vmem:[%s377 + $0x1a0] sm:$0xff]
        %v474 = vld [vmem:[%s377 + $0x1a8] sm:$0xff]
        %v475 = vld [vmem:[%s377 + $0x1b0] sm:$0xff]
        %v476 = vld [vmem:[%s377 + $0x1b8] sm:$0xff]
        %v477 = vld [vmem:[%s377 + $0x1c0] sm:$0xff]
        %v478 = vld [vmem:[%s377 + $0x1c8] sm:$0xff]
        %v479 = vld [vmem:[%s377 + $0x1d0] sm:$0xff]
        %v480 = vld [vmem:[%s377 + $0x1d8] sm:$0xff]
        %v481 = vld [vmem:[%s377 + $0x1e0] sm:$0xff]
        %v482 = vld [vmem:[%s377 + $0x1e8] sm:$0xff]
        %v483 = vld [vmem:[%s377 + $0x1f0] sm:$0xff]
        %v484 = vld [vmem:[%s377 + $0x1f8] sm:$0xff]
        %v485 = vpack.c.bf16 %v423, %v421
        %v486 = vpack.c.bf16 %v424, %v422
        %v487 = vpack.c.bf16 %v427, %v425
        %v488 = vpack.c.bf16 %v428, %v426
        %v489 = vpack.c.bf16 %v431, %v429
        %v490 = vpack.c.bf16 %v432, %v430
        %v491 = vpack.c.bf16 %v435, %v433
        %v492 = vpack.c.bf16 %v436, %v434
        %v493 = vpack.c.bf16 %v439, %v437
        %v494 = vpack.c.bf16 %v440, %v438
        %v495 = vpack.c.bf16 %v443, %v441
        %v496 = vpack.c.bf16 %v444, %v442
        %v497 = vpack.c.bf16 %v447, %v445
        %v498 = vpack.c.bf16 %v448, %v446
        %v499 = vpack.c.bf16 %v451, %v449
        %v500 = vpack.c.bf16 %v452, %v450
        %v501 = vpack.c.bf16 %v455, %v453
        %v502 = vpack.c.bf16 %v456, %v454
        %v503 = vpack.c.bf16 %v459, %v457
        %v504 = vpack.c.bf16 %v460, %v458
        %v505 = vpack.c.bf16 %v463, %v461
        %v506 = vpack.c.bf16 %v464, %v462
        %v507 = vpack.c.bf16 %v467, %v465
        %v508 = vpack.c.bf16 %v468, %v466
        %v509 = vpack.c.bf16 %v471, %v469
        %v510 = vpack.c.bf16 %v472, %v470
        %v511 = vpack.c.bf16 %v475, %v473
        %v512 = vpack.c.bf16 %v476, %v474
        %v513 = vpack.c.bf16 %v479, %v477
        %v514 = vpack.c.bf16 %v480, %v478
        %v515 = vpack.c.bf16 %v483, %v481
        %v516 = vpack.c.bf16 %v484, %v482
        %v517 = vld [vmem:[%s1] sm:$0xf]
        %v518 = vld [vmem:[%s1 + $0x4] sm:$0xf]
        %v519 = vld [vmem:[%s1 + $0x8] sm:$0xf]
        %v520 = vld [vmem:[%s1 + $0xc] sm:$0xf]
        %v521 = vld [vmem:[%s1 + $0x10] sm:$0xf]
        %v522 = vld [vmem:[%s1 + $0x14] sm:$0xf]
        %v523 = vld [vmem:[%s1 + $0x18] sm:$0xf]
        %v524 = vld [vmem:[%s1 + $0x1c] sm:$0xf]
        %v525 = vld [vmem:[%s1 + $0x20] sm:$0xf]
        %v526 = vld [vmem:[%s1 + $0x24] sm:$0xf]
        %v527 = vld [vmem:[%s1 + $0x28] sm:$0xf]
        %v528 = vld [vmem:[%s1 + $0x2c] sm:$0xf]
        %v529 = vld [vmem:[%s1 + $0x30] sm:$0xf]
        %v530 = vld [vmem:[%s1 + $0x34] sm:$0xf]
        %v531 = vld [vmem:[%s1 + $0x38] sm:$0xf]
        %v532 = vld [vmem:[%s1 + $0x3c] sm:$0xf]
        %v533 = vld [vmem:[%s1 + $0x40] sm:$0xf]
        %v534 = vld [vmem:[%s1 + $0x44] sm:$0xf]
        %v535 = vld [vmem:[%s1 + $0x48] sm:$0xf]
        %v536 = vld [vmem:[%s1 + $0x4c] sm:$0xf]
        %v537 = vld [vmem:[%s1 + $0x50] sm:$0xf]
        %v538 = vld [vmem:[%s1 + $0x54] sm:$0xf]
        %v539 = vld [vmem:[%s1 + $0x58] sm:$0xf]
        %v540 = vld [vmem:[%s1 + $0x5c] sm:$0xf]
        %v541 = vld [vmem:[%s1 + $0x60] sm:$0xf]
        %v542 = vld [vmem:[%s1 + $0x64] sm:$0xf]
        %v543 = vld [vmem:[%s1 + $0x68] sm:$0xf]
        %v544 = vld [vmem:[%s1 + $0x6c] sm:$0xf]
        %v545 = vld [vmem:[%s1 + $0x70] sm:$0xf]
        %v546 = vld [vmem:[%s1 + $0x74] sm:$0xf]
        %v547 = vld [vmem:[%s1 + $0x78] sm:$0xf]
        %v548 = vld [vmem:[%s1 + $0x7c] sm:$0xf]
        %v549 = vld [vmem:[%s2] sm:$0x1]
        %v551 = vlaneseq
        %v552 = vshrl.u32 %v551, 7
        %v553 = vsub.s32 0, %v552
        %v554 = vrot.slane %v549, %v553
        %v588 = vunpack.c.l.b16 %v517
        %v589 = vunpack.c.l.b16 %v518
        %v590 = vunpack.c.l.b16 %v519
        %v591 = vunpack.c.l.b16 %v520
        %v592 = vunpack.c.l.b16 %v521
        %v593 = vunpack.c.l.b16 %v522
        %v594 = vunpack.c.l.b16 %v523
        %v595 = vunpack.c.l.b16 %v524
        %v596 = vunpack.c.l.b16 %v525
        %v597 = vunpack.c.l.b16 %v526
        %v598 = vunpack.c.l.b16 %v527
        %v599 = vunpack.c.l.b16 %v528
        %v600 = vunpack.c.l.b16 %v529
        %v601 = vunpack.c.l.b16 %v530
        %v602 = vunpack.c.l.b16 %v531
        %v603 = vunpack.c.l.b16 %v532
        %v604 = vunpack.c.l.b16 %v533
        %v605 = vunpack.c.l.b16 %v534
        %v606 = vunpack.c.l.b16 %v535
        %v607 = vunpack.c.l.b16 %v536
        %v608 = vunpack.c.l.b16 %v537
        %v609 = vunpack.c.l.b16 %v538
        %v610 = vunpack.c.l.b16 %v539
        %v611 = vunpack.c.l.b16 %v540
        %v612 = vunpack.c.l.b16 %v541
        %v613 = vunpack.c.l.b16 %v542
        %v614 = vunpack.c.l.b16 %v543
        %v615 = vunpack.c.l.b16 %v544
        %v616 = vunpack.c.l.b16 %v545
        %v617 = vunpack.c.l.b16 %v546
        %v618 = vunpack.c.l.b16 %v547
        %v619 = vunpack.c.l.b16 %v548
        %v620 = vpack.c.b16 %v589, %v588
        %v621 = vpack.c.b16 %v591, %v590
        %v622 = vpack.c.b16 %v593, %v592
        %v623 = vpack.c.b16 %v595, %v594
        %v624 = vpack.c.b16 %v597, %v596
        %v625 = vpack.c.b16 %v599, %v598
        %v626 = vpack.c.b16 %v601, %v600
        %v627 = vpack.c.b16 %v603, %v602
        %v628 = vpack.c.b16 %v605, %v604
        %v629 = vpack.c.b16 %v607, %v606
        %v630 = vpack.c.b16 %v609, %v608
        %v631 = vpack.c.b16 %v611, %v610
        %v632 = vpack.c.b16 %v613, %v612
        %v633 = vpack.c.b16 %v615, %v614
        %v634 = vpack.c.b16 %v617, %v616
        %v635 = vpack.c.b16 %v619, %v618
        %652 = vmatprep.subr.bf16.mxu0 0
        %653 = vmatpush1.bf16.msra.mxu0 %v627
        %654 = vmatprep.subr.bf16.mxu0 0
        %655 = vmatpush1.bf16.msra.mxu0 %v626
        %656 = vmatprep.subr.bf16.mxu0 0
        %657 = vmatpush1.bf16.msra.mxu0 %v625
        %658 = vmatprep.subr.bf16.mxu0 0
        %659 = vmatpush1.bf16.msra.mxu0 %v624
        %660 = vmatprep.subr.bf16.mxu0 0
        %661 = vmatpush1.bf16.msra.mxu0 %v623
        %662 = vmatprep.subr.bf16.mxu0 0
        %663 = vmatpush1.bf16.msra.mxu0 %v622
        %664 = vmatprep.subr.bf16.mxu0 0
        %665 = vmatpush1.bf16.msra.mxu0 %v621
        %666 = vmatprep.subr.bf16.mxu0 0
        %667 = vmatpush1.bf16.msra.mxu0 %v620
        %668 = vmatprep.subr.bf16.mxu0 0
        %669 = vmatpush2.bf16.msra.mxu0 %v635
        %670 = vmatprep.subr.bf16.mxu0 0
        %671 = vmatpush2.bf16.msra.mxu0 %v634
        %672 = vmatprep.subr.bf16.mxu0 0
        %673 = vmatpush2.bf16.msra.mxu0 %v633
        %674 = vmatprep.subr.bf16.mxu0 0
        %675 = vmatpush2.bf16.msra.mxu0 %v632
        %676 = vmatprep.subr.bf16.mxu0 0
        %677 = vmatpush2.bf16.msra.mxu0 %v631
        %678 = vmatprep.subr.bf16.mxu0 0
        %679 = vmatpush2.bf16.msra.mxu0 %v630
        %680 = vmatprep.subr.bf16.mxu0 0
        %681 = vmatpush2.bf16.msra.mxu0 %v629
        %682 = vmatprep.subr.bf16.mxu0 0
        %683 = vmatpush2.bf16.msra.mxu0 %v628
        %684 = vmatprep.mubr.bf16.mxu0 %v486
        %685 = vmatmul.mubr.bf16.gmra.mxu0 %v485
        %v686 = vpop.f32.mrf.mxu0
        %v687 = vadd.f32 %v554, %v686
        %v688 = vpop.f32.mrf.mxu0
        %v689 = vpop.f32.mrf.mxu0
        %v690 = vadd.f32 %v554, %v689
        %v691 = vpop.f32.mrf.mxu0
        %692 = vmatprep.mubr.bf16.mxu0 %v488
        %693 = vmatmul.mubr.bf16.gmra.mxu0 %v487
        %v694 = vpop.f32.mrf.mxu0
        %v695 = vadd.f32 %v554, %v694
        %v696 = vpop.f32.mrf.mxu0
        %v697 = vpop.f32.mrf.mxu0
        %v698 = vadd.f32 %v554, %v697
        %v699 = vpop.f32.mrf.mxu0
        %700 = vmatprep.mubr.bf16.mxu0 %v490
        %701 = vmatmul.mubr.bf16.gmra.mxu0 %v489
        %v702 = vpop.f32.mrf.mxu0
        %v703 = vadd.f32 %v554, %v702
        %v704 = vpop.f32.mrf.mxu0
        %v705 = vpop.f32.mrf.mxu0
        %v706 = vadd.f32 %v554, %v705
        %v707 = vpop.f32.mrf.mxu0
        %708 = vmatprep.mubr.bf16.mxu0 %v492
        %709 = vmatmul.mubr.bf16.gmra.mxu0 %v491
        %v710 = vpop.f32.mrf.mxu0
        %v711 = vadd.f32 %v554, %v710
        %v712 = vpop.f32.mrf.mxu0
        %v713 = vpop.f32.mrf.mxu0
        %v714 = vadd.f32 %v554, %v713
        %v715 = vpop.f32.mrf.mxu0
        %716 = vmatprep.mubr.bf16.mxu0 %v494
        %717 = vmatmul.mubr.bf16.gmra.mxu0 %v493
        %v718 = vpop.f32.mrf.mxu0
        %v719 = vadd.f32 %v554, %v718
        %v720 = vpop.f32.mrf.mxu0
        %v721 = vpop.f32.mrf.mxu0
        %v722 = vadd.f32 %v554, %v721
        %v723 = vpop.f32.mrf.mxu0
        %724 = vmatprep.mubr.bf16.mxu0 %v496
        %725 = vmatmul.mubr.bf16.gmra.mxu0 %v495
        %v726 = vpop.f32.mrf.mxu0
        %v727 = vadd.f32 %v554, %v726
        %v728 = vpop.f32.mrf.mxu0
        %v729 = vpop.f32.mrf.mxu0
        %v730 = vadd.f32 %v554, %v729
        %v731 = vpop.f32.mrf.mxu0
        %732 = vmatprep.mubr.bf16.mxu0 %v498
        %733 = vmatmul.mubr.bf16.gmra.mxu0 %v497
        %v734 = vpop.f32.mrf.mxu0
        %v735 = vadd.f32 %v554, %v734
        %v736 = vpop.f32.mrf.mxu0
        %v737 = vpop.f32.mrf.mxu0
        %v738 = vadd.f32 %v554, %v737
        %v739 = vpop.f32.mrf.mxu0
        %740 = vmatprep.mubr.bf16.mxu0 %v500
        %741 = vmatmul.mubr.bf16.gmra.mxu0 %v499
        %v742 = vpop.f32.mrf.mxu0
        %v743 = vadd.f32 %v554, %v742
        %v744 = vpop.f32.mrf.mxu0
        %v745 = vpop.f32.mrf.mxu0
        %v746 = vadd.f32 %v554, %v745
        %v747 = vpop.f32.mrf.mxu0
        %748 = vmatprep.mubr.bf16.mxu0 %v502
        %749 = vmatmul.mubr.bf16.gmra.mxu0 %v501
        %v750 = vpop.f32.mrf.mxu0
        %v751 = vadd.f32 %v554, %v750
        %v752 = vpop.f32.mrf.mxu0
        %v753 = vpop.f32.mrf.mxu0
        %v754 = vadd.f32 %v554, %v753
        %v755 = vpop.f32.mrf.mxu0
        %756 = vmatprep.mubr.bf16.mxu0 %v504
        %757 = vmatmul.mubr.bf16.gmra.mxu0 %v503
        %v758 = vpop.f32.mrf.mxu0
        %v759 = vadd.f32 %v554, %v758
        %v760 = vpop.f32.mrf.mxu0
        %v761 = vpop.f32.mrf.mxu0
        %v762 = vadd.f32 %v554, %v761
        %v763 = vpop.f32.mrf.mxu0
        %764 = vmatprep.mubr.bf16.mxu0 %v506
        %765 = vmatmul.mubr.bf16.gmra.mxu0 %v505
        %v766 = vpop.f32.mrf.mxu0
        %v767 = vadd.f32 %v554, %v766
        %v768 = vpop.f32.mrf.mxu0
        %v769 = vpop.f32.mrf.mxu0
        %v770 = vadd.f32 %v554, %v769
        %v771 = vpop.f32.mrf.mxu0
        %772 = vmatprep.mubr.bf16.mxu0 %v508
        %773 = vmatmul.mubr.bf16.gmra.mxu0 %v507
        %v774 = vpop.f32.mrf.mxu0
        %v775 = vadd.f32 %v554, %v774
        %v776 = vpop.f32.mrf.mxu0
        %v777 = vpop.f32.mrf.mxu0
        %v778 = vadd.f32 %v554, %v777
        %v779 = vpop.f32.mrf.mxu0
        %780 = vmatprep.mubr.bf16.mxu0 %v510
        %781 = vmatmul.mubr.bf16.gmra.mxu0 %v509
        %v782 = vpop.f32.mrf.mxu0
        %v783 = vadd.f32 %v554, %v782
        %v784 = vpop.f32.mrf.mxu0
        %v785 = vpop.f32.mrf.mxu0
        %v786 = vadd.f32 %v554, %v785
        %v787 = vpop.f32.mrf.mxu0
        %788 = vmatprep.mubr.bf16.mxu0 %v512
        %789 = vmatmul.mubr.bf16.gmra.mxu0 %v511
        %v790 = vpop.f32.mrf.mxu0
        %v791 = vadd.f32 %v554, %v790
        %v792 = vpop.f32.mrf.mxu0
        %v793 = vpop.f32.mrf.mxu0
        %v794 = vadd.f32 %v554, %v793
        %v795 = vpop.f32.mrf.mxu0
        %796 = vmatprep.mubr.bf16.mxu0 %v514
        %797 = vmatmul.mubr.bf16.gmra.mxu0 %v513
        %v798 = vpop.f32.mrf.mxu0
        %v799 = vadd.f32 %v554, %v798
        %v800 = vpop.f32.mrf.mxu0
        %v801 = vpop.f32.mrf.mxu0
        %v802 = vadd.f32 %v554, %v801
        %v803 = vpop.f32.mrf.mxu0
        %804 = vmatprep.mubr.bf16.mxu0 %v516
        %805 = vmatmul.mubr.bf16.gmra.mxu0 %v515
        %v806 = vpop.f32.mrf.mxu0
        %v807 = vadd.f32 %v554, %v806
        %v808 = vpop.f32.mrf.mxu0
        %v809 = vpop.f32.mrf.mxu0
        %v810 = vadd.f32 %v554, %v809
        %v811 = vpop.f32.mrf.mxu0
        %812 = vdwg.mxu0
        %v813 = vmul.f32 %v687, 0.001
        %v814 = vmul.f32 %v690, 0.001
        %v815 = vmul.f32 %v695, 0.001
        %v816 = vmul.f32 %v698, 0.001
        %v817 = vmul.f32 %v703, 0.001
        %v818 = vmul.f32 %v706, 0.001
        %v819 = vmul.f32 %v711, 0.001
        %v820 = vmul.f32 %v714, 0.001
        %v821 = vmul.f32 %v719, 0.001
        %v822 = vmul.f32 %v722, 0.001
        %v823 = vmul.f32 %v727, 0.001
        %v824 = vmul.f32 %v730, 0.001
        %v825 = vmul.f32 %v735, 0.001
        %v826 = vmul.f32 %v738, 0.001
        %v827 = vmul.f32 %v743, 0.001
        %v828 = vmul.f32 %v746, 0.001
        %v829 = vmul.f32 %v751, 0.001
        %v830 = vmul.f32 %v754, 0.001
        %v831 = vmul.f32 %v759, 0.001
        %v832 = vmul.f32 %v762, 0.001
        %v833 = vmul.f32 %v767, 0.001
        %v834 = vmul.f32 %v770, 0.001
        %v835 = vmul.f32 %v775, 0.001
        %v836 = vmul.f32 %v778, 0.001
        %v837 = vmul.f32 %v783, 0.001
        %v838 = vmul.f32 %v786, 0.001
        %v839 = vmul.f32 %v791, 0.001
        %v840 = vmul.f32 %v794, 0.001
        %v841 = vmul.f32 %v799, 0.001
        %v842 = vmul.f32 %v802, 0.001
        %v843 = vmul.f32 %v807, 0.001
        %v844 = vmul.f32 %v810, 0.001
        %v845 = vmax.f32 %v687, %v813
        %v846 = vmax.f32 %v690, %v814
        %v847 = vmax.f32 %v695, %v815
        %v848 = vmax.f32 %v698, %v816
        %v849 = vmax.f32 %v703, %v817
        %v850 = vmax.f32 %v706, %v818
        %v851 = vmax.f32 %v711, %v819
        %v852 = vmax.f32 %v714, %v820
        %v853 = vmax.f32 %v719, %v821
        %v854 = vmax.f32 %v722, %v822
        %v855 = vmax.f32 %v727, %v823
        %v856 = vmax.f32 %v730, %v824
        %v857 = vmax.f32 %v735, %v825
        %v858 = vmax.f32 %v738, %v826
        %v859 = vmax.f32 %v743, %v827
        %v860 = vmax.f32 %v746, %v828
        %v861 = vmax.f32 %v751, %v829
        %v862 = vmax.f32 %v754, %v830
        %v863 = vmax.f32 %v759, %v831
        %v864 = vmax.f32 %v762, %v832
        %v865 = vmax.f32 %v767, %v833
        %v866 = vmax.f32 %v770, %v834
        %v867 = vmax.f32 %v775, %v835
        %v868 = vmax.f32 %v778, %v836
        %v869 = vmax.f32 %v783, %v837
        %v870 = vmax.f32 %v786, %v838
        %v871 = vmax.f32 %v791, %v839
        %v872 = vmax.f32 %v794, %v840
        %v873 = vmax.f32 %v799, %v841
        %v874 = vmax.f32 %v802, %v842
        %v875 = vmax.f32 %v807, %v843
        %v876 = vmax.f32 %v810, %v844
        %vm877 = vcmask 523264
        %878 = vst.msk [vmem:[#allocation2] sm:$0xff] %vm877, 0.0
        %879 = vst.msk [vmem:[#allocation2 + $0x8] sm:$0xff] %vm877, 0.0
        %vm880 = vcmask 517120
        %881 = vst.msk [vmem:[#allocation2 + $0x10] sm:$0x3] %vm880, 0.0
        %s882 = scalar_lea.vmem [#allocation2], 408
        %883 = vst.msk [vmem:[%s882] sm:$0xff] %vm877, 0.0
        %884 = vst.msk [vmem:[%s882 + $0x8] sm:$0xff] %vm877, 0.0
        %885 = vst.msk [vmem:[%s882 + $0x10] sm:$0x3] %vm880, 0.0
        %vm886 = vcmask 516096
        %887 = vst.msk [vmem:[#allocation2] sm:$0x1] %vm886, 0.0
        %888 = vst.msk [vmem:[#allocation2 + $0x18] sm:$0x1] %vm886, 0.0
        %889 = vst.msk [vmem:[#allocation2 + $0x30] sm:$0x1] %vm886, 0.0
        %890 = vst.msk [vmem:[#allocation2 + $0x48] sm:$0x1] %vm886, 0.0
        %891 = vst.msk [vmem:[#allocation2 + $0x60] sm:$0x1] %vm886, 0.0
        %892 = vst.msk [vmem:[#allocation2 + $0x78] sm:$0x1] %vm886, 0.0
        %893 = vst.msk [vmem:[#allocation2 + $0x90] sm:$0x1] %vm886, 0.0
        %894 = vst.msk [vmem:[#allocation2 + $0xa8] sm:$0x1] %vm886, 0.0
        %895 = vst.msk [vmem:[#allocation2 + $0xc0] sm:$0x1] %vm886, 0.0
        %896 = vst.msk [vmem:[#allocation2 + $0xd8] sm:$0x1] %vm886, 0.0
        %897 = vst.msk [vmem:[#allocation2 + $0xf0] sm:$0x1] %vm886, 0.0
        %898 = vst.msk [vmem:[#allocation2 + $0x108] sm:$0x1] %vm886, 0.0
        %899 = vst.msk [vmem:[#allocation2 + $0x120] sm:$0x1] %vm886, 0.0
        %900 = vst.msk [vmem:[#allocation2 + $0x138] sm:$0x1] %vm886, 0.0
        %901 = vst.msk [vmem:[#allocation2 + $0x150] sm:$0x1] %vm886, 0.0
        %902 = vst.msk [vmem:[#allocation2 + $0x168] sm:$0x1] %vm886, 0.0
        %903 = vst.msk [vmem:[#allocation2 + $0x180] sm:$0x1] %vm886, 0.0
        %904 = vst.msk [vmem:[#allocation2 + $0x198] sm:$0x1] %vm886, 0.0
        %905 = vst.msk [vmem:[#allocation2 + $0x11] sm:$0x1] %vm886, 0.0
        %906 = vst.msk [vmem:[#allocation2 + $0x29] sm:$0x1] %vm886, 0.0
        %907 = vst.msk [vmem:[#allocation2 + $0x41] sm:$0x1] %vm886, 0.0
        %908 = vst.msk [vmem:[#allocation2 + $0x59] sm:$0x1] %vm886, 0.0
        %909 = vst.msk [vmem:[#allocation2 + $0x71] sm:$0x1] %vm886, 0.0
        %910 = vst.msk [vmem:[#allocation2 + $0x89] sm:$0x1] %vm886, 0.0
        %911 = vst.msk [vmem:[#allocation2 + $0xa1] sm:$0x1] %vm886, 0.0
        %912 = vst.msk [vmem:[#allocation2 + $0xb9] sm:$0x1] %vm886, 0.0
        %913 = vst.msk [vmem:[#allocation2 + $0xd1] sm:$0x1] %vm886, 0.0
        %914 = vst.msk [vmem:[#allocation2 + $0xe9] sm:$0x1] %vm886, 0.0
        %915 = vst.msk [vmem:[#allocation2 + $0x101] sm:$0x1] %vm886, 0.0
        %916 = vst.msk [vmem:[#allocation2 + $0x119] sm:$0x1] %vm886, 0.0
        %917 = vst.msk [vmem:[#allocation2 + $0x131] sm:$0x1] %vm886, 0.0
        %918 = vst.msk [vmem:[#allocation2 + $0x149] sm:$0x1] %vm886, 0.0
        %919 = vst.msk [vmem:[#allocation2 + $0x161] sm:$0x1] %vm886, 0.0
        %920 = vst.msk [vmem:[#allocation2 + $0x179] sm:$0x1] %vm886, 0.0
        %921 = vst.msk [vmem:[#allocation2 + $0x191] sm:$0x1] %vm886, 0.0
        %922 = vst.msk [vmem:[#allocation2 + $0x1a9] sm:$0x1] %vm886, 0.0
        %s923 = scalar_lea.vmem [#allocation2], 24
        %924 = vst.msk [vmem:[%s923 + $0x1] sm:$0xff] %vm877, %v845
        %925 = vst.msk [vmem:[%s923 + $0x9] sm:$0xff] %vm877, %v846
        %926 = vst.msk [vmem:[%s923 + $0x19] sm:$0xff] %vm877, %v847
        %927 = vst.msk [vmem:[%s923 + $0x21] sm:$0xff] %vm877, %v848
        %928 = vst.msk [vmem:[%s923 + $0x31] sm:$0xff] %vm877, %v849
        %929 = vst.msk [vmem:[%s923 + $0x39] sm:$0xff] %vm877, %v850
        %930 = vst.msk [vmem:[%s923 + $0x49] sm:$0xff] %vm877, %v851
        %931 = vst.msk [vmem:[%s923 + $0x51] sm:$0xff] %vm877, %v852
        %932 = vst.msk [vmem:[%s923 + $0x61] sm:$0xff] %vm877, %v853
        %933 = vst.msk [vmem:[%s923 + $0x69] sm:$0xff] %vm877, %v854
        %934 = vst.msk [vmem:[%s923 + $0x79] sm:$0xff] %vm877, %v855
        %935 = vst.msk [vmem:[%s923 + $0x81] sm:$0xff] %vm877, %v856
        %936 = vst.msk [vmem:[%s923 + $0x91] sm:$0xff] %vm877, %v857
        %937 = vst.msk [vmem:[%s923 + $0x99] sm:$0xff] %vm877, %v858
        %938 = vst.msk [vmem:[%s923 + $0xa9] sm:$0xff] %vm877, %v859
        %939 = vst.msk [vmem:[%s923 + $0xb1] sm:$0xff] %vm877, %v860
        %940 = vst.msk [vmem:[%s923 + $0xc1] sm:$0xff] %vm877, %v861
        %941 = vst.msk [vmem:[%s923 + $0xc9] sm:$0xff] %vm877, %v862
        %942 = vst.msk [vmem:[%s923 + $0xd9] sm:$0xff] %vm877, %v863
        %943 = vst.msk [vmem:[%s923 + $0xe1] sm:$0xff] %vm877, %v864
        %944 = vst.msk [vmem:[%s923 + $0xf1] sm:$0xff] %vm877, %v865
        %945 = vst.msk [vmem:[%s923 + $0xf9] sm:$0xff] %vm877, %v866
        %946 = vst.msk [vmem:[%s923 + $0x109] sm:$0xff] %vm877, %v867
        %947 = vst.msk [vmem:[%s923 + $0x111] sm:$0xff] %vm877, %v868
        %948 = vst.msk [vmem:[%s923 + $0x121] sm:$0xff] %vm877, %v869
        %949 = vst.msk [vmem:[%s923 + $0x129] sm:$0xff] %vm877, %v870
        %950 = vst.msk [vmem:[%s923 + $0x139] sm:$0xff] %vm877, %v871
        %951 = vst.msk [vmem:[%s923 + $0x141] sm:$0xff] %vm877, %v872
        %952 = vst.msk [vmem:[%s923 + $0x151] sm:$0xff] %vm877, %v873
        %953 = vst.msk [vmem:[%s923 + $0x159] sm:$0xff] %vm877, %v874
        %954 = vst.msk [vmem:[%s923 + $0x169] sm:$0xff] %vm877, %v875
        %955 = vst.msk [vmem:[%s923 + $0x171] sm:$0xff] %vm877, %v876
        %v956 = vld [vmem:[#allocation2] sm:$0xff]
        %v957 = vld [vmem:[#allocation2 + $0x8] sm:$0xff]
        %v958 = vld [vmem:[#allocation2 + $0x18] sm:$0xff]
        %v959 = vld [vmem:[#allocation2 + $0x20] sm:$0xff]
        %v960 = vld [vmem:[#allocation2 + $0x30] sm:$0xff]
        %v961 = vld [vmem:[#allocation2 + $0x38] sm:$0xff]
        %v962 = vld [vmem:[#allocation2 + $0x48] sm:$0xff]
        %v963 = vld [vmem:[#allocation2 + $0x50] sm:$0xff]
        %v964 = vld [vmem:[#allocation2 + $0x60] sm:$0xff]
        %v965 = vld [vmem:[#allocation2 + $0x68] sm:$0xff]
        %v966 = vld [vmem:[#allocation2 + $0x78] sm:$0xff]
        %v967 = vld [vmem:[#allocation2 + $0x80] sm:$0xff]
        %v968 = vld [vmem:[#allocation2 + $0x90] sm:$0xff]
        %v969 = vld [vmem:[#allocation2 + $0x98] sm:$0xff]
        %v970 = vld [vmem:[#allocation2 + $0xa8] sm:$0xff]
        %v971 = vld [vmem:[#allocation2 + $0xb0] sm:$0xff]
        %v972 = vld [vmem:[#allocation2 + $0xc0] sm:$0xff]
        %v973 = vld [vmem:[#allocation2 + $0xc8] sm:$0xff]
        %v974 = vld [vmem:[#allocation2 + $0xd8] sm:$0xff]
        %v975 = vld [vmem:[#allocation2 + $0xe0] sm:$0xff]
        %v976 = vld [vmem:[#allocation2 + $0xf0] sm:$0xff]
        %v977 = vld [vmem:[#allocation2 + $0xf8] sm:$0xff]
        %v978 = vld [vmem:[#allocation2 + $0x108] sm:$0xff]
        %v979 = vld [vmem:[#allocation2 + $0x110] sm:$0xff]
        %v980 = vld [vmem:[#allocation2 + $0x120] sm:$0xff]
        %v981 = vld [vmem:[#allocation2 + $0x128] sm:$0xff]
        %v982 = vld [vmem:[#allocation2 + $0x138] sm:$0xff]
        %v983 = vld [vmem:[#allocation2 + $0x140] sm:$0xff]
        %v984 = vld [vmem:[#allocation2 + $0x150] sm:$0xff]
        %v985 = vld [vmem:[#allocation2 + $0x158] sm:$0xff]
        %v986 = vld [vmem:[#allocation2 + $0x168] sm:$0xff]
        %v987 = vld [vmem:[#allocation2 + $0x170] sm:$0xff]
        %v988 = vpack.c.bf16 %v957, %v956
        %v989 = vpack.c.bf16 %v959, %v958
        %v990 = vpack.c.bf16 %v961, %v960
        %v991 = vpack.c.bf16 %v963, %v962
        %v992 = vpack.c.bf16 %v965, %v964
        %v993 = vpack.c.bf16 %v967, %v966
        %v994 = vpack.c.bf16 %v969, %v968
        %v995 = vpack.c.bf16 %v971, %v970
        %v996 = vpack.c.bf16 %v973, %v972
        %v997 = vpack.c.bf16 %v975, %v974
        %v998 = vpack.c.bf16 %v977, %v976
        %v999 = vpack.c.bf16 %v979, %v978
        %v1000 = vpack.c.bf16 %v981, %v980
        %v1001 = vpack.c.bf16 %v983, %v982
        %v1002 = vpack.c.bf16 %v985, %v984
        %v1003 = vpack.c.bf16 %v987, %v986
        %v1004 = vld [vmem:[#allocation6] sm:$0xf]
        %v1005 = vld [vmem:[#allocation6 + $0x4] sm:$0xf]
        %v1006 = vld [vmem:[#allocation6 + $0x8] sm:$0xf]
        %v1007 = vld [vmem:[#allocation6 + $0xc] sm:$0xf]
        %v1008 = vld [vmem:[#allocation6 + $0x10] sm:$0xf]
        %v1009 = vld [vmem:[#allocation6 + $0x14] sm:$0xf]
        %v1010 = vld [vmem:[#allocation6 + $0x18] sm:$0xf]
        %v1011 = vld [vmem:[#allocation6 + $0x1c] sm:$0xf]
        %v1012 = vld [vmem:[#allocation2 + $0x1] sm:$0xff]
        %v1013 = vld [vmem:[#allocation2 + $0x9] sm:$0xff]
        %v1014 = vld [vmem:[#allocation2 + $0x19] sm:$0xff]
        %v1015 = vld [vmem:[#allocation2 + $0x21] sm:$0xff]
        %v1016 = vld [vmem:[#allocation2 + $0x31] sm:$0xff]
        %v1017 = vld [vmem:[#allocation2 + $0x39] sm:$0xff]
        %v1018 = vld [vmem:[#allocation2 + $0x49] sm:$0xff]
        %v1019 = vld [vmem:[#allocation2 + $0x51] sm:$0xff]
        %v1020 = vld [vmem:[#allocation2 + $0x61] sm:$0xff]
        %v1021 = vld [vmem:[#allocation2 + $0x69] sm:$0xff]
        %v1022 = vld [vmem:[#allocation2 + $0x79] sm:$0xff]
        %v1023 = vld [vmem:[#allocation2 + $0x81] sm:$0xff]
        %v1024 = vld [vmem:[#allocation2 + $0x91] sm:$0xff]
        %v1025 = vld [vmem:[#allocation2 + $0x99] sm:$0xff]
        %v1026 = vld [vmem:[#allocation2 + $0xa9] sm:$0xff]
        %v1027 = vld [vmem:[#allocation2 + $0xb1] sm:$0xff]
        %v1028 = vld [vmem:[#allocation2 + $0xc1] sm:$0xff]
        %v1029 = vld [vmem:[#allocation2 + $0xc9] sm:$0xff]
        %v1030 = vld [vmem:[#allocation2 + $0xd9] sm:$0xff]
        %v1031 = vld [vmem:[#allocation2 + $0xe1] sm:$0xff]
        %v1032 = vld [vmem:[#allocation2 + $0xf1] sm:$0xff]
        %v1033 = vld [vmem:[#allocation2 + $0xf9] sm:$0xff]
        %v1034 = vld [vmem:[#allocation2 + $0x109] sm:$0xff]
        %v1035 = vld [vmem:[#allocation2 + $0x111] sm:$0xff]
        %v1036 = vld [vmem:[#allocation2 + $0x121] sm:$0xff]
        %v1037 = vld [vmem:[#allocation2 + $0x129] sm:$0xff]
        %v1038 = vld [vmem:[#allocation2 + $0x139] sm:$0xff]
        %v1039 = vld [vmem:[#allocation2 + $0x141] sm:$0xff]
        %v1040 = vld [vmem:[#allocation2 + $0x151] sm:$0xff]
        %v1041 = vld [vmem:[#allocation2 + $0x159] sm:$0xff]
        %v1042 = vld [vmem:[#allocation2 + $0x169] sm:$0xff]
        %v1043 = vld [vmem:[#allocation2 + $0x171] sm:$0xff]
        %v1044 = vpack.c.bf16 %v1013, %v1012
        %v1045 = vpack.c.bf16 %v1015, %v1014
        %v1046 = vpack.c.bf16 %v1017, %v1016
        %v1047 = vpack.c.bf16 %v1019, %v1018
        %v1048 = vpack.c.bf16 %v1021, %v1020
        %v1049 = vpack.c.bf16 %v1023, %v1022
        %v1050 = vpack.c.bf16 %v1025, %v1024
        %v1051 = vpack.c.bf16 %v1027, %v1026
        %v1052 = vpack.c.bf16 %v1029, %v1028
        %v1053 = vpack.c.bf16 %v1031, %v1030
        %v1054 = vpack.c.bf16 %v1033, %v1032
        %v1055 = vpack.c.bf16 %v1035, %v1034
        %v1056 = vpack.c.bf16 %v1037, %v1036
        %v1057 = vpack.c.bf16 %v1039, %v1038
        %v1058 = vpack.c.bf16 %v1041, %v1040
        %v1059 = vpack.c.bf16 %v1043, %v1042
        %s1060 = scalar_lea.vmem [#allocation6], 32
        %v1061 = vld [vmem:[%s1060] sm:$0xf]
        %v1062 = vld [vmem:[%s1060 + $0x4] sm:$0xf]
        %v1063 = vld [vmem:[%s1060 + $0x8] sm:$0xf]
        %v1064 = vld [vmem:[%s1060 + $0xc] sm:$0xf]
        %v1065 = vld [vmem:[%s1060 + $0x10] sm:$0xf]
        %v1066 = vld [vmem:[%s1060 + $0x14] sm:$0xf]
        %v1067 = vld [vmem:[%s1060 + $0x18] sm:$0xf]
        %v1068 = vld [vmem:[%s1060 + $0x1c] sm:$0xf]
        %v1077 = vunpack.c.l.b16 %v1061
        %v1078 = vunpack.c.l.b16 %v1062
        %v1079 = vunpack.c.l.b16 %v1063
        %v1080 = vunpack.c.l.b16 %v1064
        %v1081 = vunpack.c.l.b16 %v1065
        %v1082 = vunpack.c.l.b16 %v1066
        %v1083 = vunpack.c.l.b16 %v1067
        %v1084 = vunpack.c.l.b16 %v1068
        %v1085 = vpack.c.b16 %v1078, %v1077
        %v1086 = vpack.c.b16 %v1080, %v1079
        %v1087 = vpack.c.b16 %v1082, %v1081
        %v1088 = vpack.c.b16 %v1084, %v1083
        %v1094 = vsel %vm877, %v1044, 0
        %v1097 = vsel %vm877, %v1045, 0
        %v1100 = vsel %vm877, %v1046, 0
        %v1103 = vsel %vm877, %v1047, 0
        %v1106 = vsel %vm877, %v1048, 0
        %v1109 = vsel %vm877, %v1049, 0
        %v1112 = vsel %vm877, %v1050, 0
        %v1115 = vsel %vm877, %v1051, 0
        %v1118 = vsel %vm877, %v1052, 0
        %v1121 = vsel %vm877, %v1053, 0
        %v1124 = vsel %vm877, %v1054, 0
        %v1127 = vsel %vm877, %v1055, 0
        %v1130 = vsel %vm877, %v1056, 0
        %v1133 = vsel %vm877, %v1057, 0
        %v1136 = vsel %vm877, %v1058, 0
        %v1139 = vsel %vm877, %v1059, 0
        %1141 = vmatprep.subr.bf16.mxu0 0
        %1142 = vmatpush1.bf16.msra.mxu0 0
        %1143 = vmatprep.subr.bf16.mxu0 0
        %1144 = vmatpush1.bf16.msra.mxu0 0
        %1145 = vmatprep.subr.bf16.mxu0 0
        %1146 = vmatpush1.bf16.msra.mxu0 0
        %1147 = vmatprep.subr.bf16.mxu0 0
        %1148 = vmatpush1.bf16.msra.mxu0 0
        %1149 = vmatprep.subr.bf16.mxu0 0
        %1150 = vmatpush1.bf16.msra.mxu0 %v1088
        %1151 = vmatprep.subr.bf16.mxu0 0
        %1152 = vmatpush1.bf16.msra.mxu0 %v1087
        %1153 = vmatprep.subr.bf16.mxu0 0
        %1154 = vmatpush1.bf16.msra.mxu0 %v1086
        %1155 = vmatprep.subr.bf16.mxu0 0
        %1156 = vmatpush1.bf16.msra.mxu0 %v1085
        %1157 = vmatprep.subr.bf16.mxu0 0
        %1158 = vmatpush2.bf16.msra.mxu0 0
        %1159 = vmatprep.subr.bf16.mxu0 0
        %1160 = vmatpush2.bf16.msra.mxu0 0
        %1161 = vmatprep.subr.bf16.mxu0 0
        %1162 = vmatpush2.bf16.msra.mxu0 0
        %1163 = vmatprep.subr.bf16.mxu0 0
        %1164 = vmatpush2.bf16.msra.mxu0 0
        %1165 = vmatprep.subr.bf16.mxu0 0
        %1166 = vmatpush2.bf16.msra.mxu0 0
        %1167 = vmatprep.subr.bf16.mxu0 0
        %1168 = vmatpush2.bf16.msra.mxu0 0
        %1169 = vmatprep.subr.bf16.mxu0 0
        %1170 = vmatpush2.bf16.msra.mxu0 0
        %1171 = vmatprep.subr.bf16.mxu0 0
        %1172 = vmatpush2.bf16.msra.mxu0 0
        %1173 = vmatprep.mubr.bf16.mxu0 0
        %1174 = vmatmul.mubr.bf16.gmra.mxu0 %v1094
        %v1175 = vpop.f32.mrf.mxu0
        %v1176 = vadd.f32 0.0, %v1175
        %v1177 = vpop.f32.mrf.mxu0
        %v1178 = vpop.f32.mrf.mxu0
        %v1179 = vadd.f32 0.0, %v1178
        %v1180 = vpop.f32.mrf.mxu0
        %1181 = vmatprep.mubr.bf16.mxu0 0
        %1182 = vmatmul.mubr.bf16.gmra.mxu0 %v1097
        %v1183 = vpop.f32.mrf.mxu0
        %v1184 = vadd.f32 0.0, %v1183
        %v1185 = vpop.f32.mrf.mxu0
        %v1186 = vpop.f32.mrf.mxu0
        %v1187 = vadd.f32 0.0, %v1186
        %v1188 = vpop.f32.mrf.mxu0
        %1189 = vmatprep.mubr.bf16.mxu0 0
        %1190 = vmatmul.mubr.bf16.gmra.mxu0 %v1100
        %v1191 = vpop.f32.mrf.mxu0
        %v1192 = vadd.f32 0.0, %v1191
        %v1193 = vpop.f32.mrf.mxu0
        %v1194 = vpop.f32.mrf.mxu0
        %v1195 = vadd.f32 0.0, %v1194
        %v1196 = vpop.f32.mrf.mxu0
        %1197 = vmatprep.mubr.bf16.mxu0 0
        %1198 = vmatmul.mubr.bf16.gmra.mxu0 %v1103
        %v1199 = vpop.f32.mrf.mxu0
        %v1200 = vadd.f32 0.0, %v1199
        %v1201 = vpop.f32.mrf.mxu0
        %v1202 = vpop.f32.mrf.mxu0
        %v1203 = vadd.f32 0.0, %v1202
        %v1204 = vpop.f32.mrf.mxu0
        %1205 = vmatprep.mubr.bf16.mxu0 0
        %1206 = vmatmul.mubr.bf16.gmra.mxu0 %v1106
        %v1207 = vpop.f32.mrf.mxu0
        %v1208 = vadd.f32 0.0, %v1207
        %v1209 = vpop.f32.mrf.mxu0
        %v1210 = vpop.f32.mrf.mxu0
        %v1211 = vadd.f32 0.0, %v1210
        %v1212 = vpop.f32.mrf.mxu0
        %1213 = vmatprep.mubr.bf16.mxu0 0
        %1214 = vmatmul.mubr.bf16.gmra.mxu0 %v1109
        %v1215 = vpop.f32.mrf.mxu0
        %v1216 = vadd.f32 0.0, %v1215
        %v1217 = vpop.f32.mrf.mxu0
        %v1218 = vpop.f32.mrf.mxu0
        %v1219 = vadd.f32 0.0, %v1218
        %v1220 = vpop.f32.mrf.mxu0
        %1221 = vmatprep.mubr.bf16.mxu0 0
        %1222 = vmatmul.mubr.bf16.gmra.mxu0 %v1112
        %v1223 = vpop.f32.mrf.mxu0
        %v1224 = vadd.f32 0.0, %v1223
        %v1225 = vpop.f32.mrf.mxu0
        %v1226 = vpop.f32.mrf.mxu0
        %v1227 = vadd.f32 0.0, %v1226
        %v1228 = vpop.f32.mrf.mxu0
        %1229 = vmatprep.mubr.bf16.mxu0 0
        %1230 = vmatmul.mubr.bf16.gmra.mxu0 %v1115
        %v1231 = vpop.f32.mrf.mxu0
        %v1232 = vadd.f32 0.0, %v1231
        %v1233 = vpop.f32.mrf.mxu0
        %v1234 = vpop.f32.mrf.mxu0
        %v1235 = vadd.f32 0.0, %v1234
        %v1236 = vpop.f32.mrf.mxu0
        %1237 = vmatprep.mubr.bf16.mxu0 0
        %1238 = vmatmul.mubr.bf16.gmra.mxu0 %v1118
        %v1239 = vpop.f32.mrf.mxu0
        %v1240 = vadd.f32 0.0, %v1239
        %v1241 = vpop.f32.mrf.mxu0
        %v1242 = vpop.f32.mrf.mxu0
        %v1243 = vadd.f32 0.0, %v1242
        %v1244 = vpop.f32.mrf.mxu0
        %1245 = vmatprep.mubr.bf16.mxu0 0
        %1246 = vmatmul.mubr.bf16.gmra.mxu0 %v1121
        %v1247 = vpop.f32.mrf.mxu0
        %v1248 = vadd.f32 0.0, %v1247
        %v1249 = vpop.f32.mrf.mxu0
        %v1250 = vpop.f32.mrf.mxu0
        %v1251 = vadd.f32 0.0, %v1250
        %v1252 = vpop.f32.mrf.mxu0
        %1253 = vmatprep.mubr.bf16.mxu0 0
        %1254 = vmatmul.mubr.bf16.gmra.mxu0 %v1124
        %v1255 = vpop.f32.mrf.mxu0
        %v1256 = vadd.f32 0.0, %v1255
        %v1257 = vpop.f32.mrf.mxu0
        %v1258 = vpop.f32.mrf.mxu0
        %v1259 = vadd.f32 0.0, %v1258
        %v1260 = vpop.f32.mrf.mxu0
        %1261 = vmatprep.mubr.bf16.mxu0 0
        %1262 = vmatmul.mubr.bf16.gmra.mxu0 %v1127
        %v1263 = vpop.f32.mrf.mxu0
        %v1264 = vadd.f32 0.0, %v1263
        %v1265 = vpop.f32.mrf.mxu0
        %v1266 = vpop.f32.mrf.mxu0
        %v1267 = vadd.f32 0.0, %v1266
        %v1268 = vpop.f32.mrf.mxu0
        %1269 = vmatprep.mubr.bf16.mxu0 0
        %1270 = vmatmul.mubr.bf16.gmra.mxu0 %v1130
        %v1271 = vpop.f32.mrf.mxu0
        %v1272 = vadd.f32 0.0, %v1271
        %v1273 = vpop.f32.mrf.mxu0
        %v1274 = vpop.f32.mrf.mxu0
        %v1275 = vadd.f32 0.0, %v1274
        %v1276 = vpop.f32.mrf.mxu0
        %1277 = vmatprep.mubr.bf16.mxu0 0
        %1278 = vmatmul.mubr.bf16.gmra.mxu0 %v1133
        %v1279 = vpop.f32.mrf.mxu0
        %v1280 = vadd.f32 0.0, %v1279
        %v1281 = vpop.f32.mrf.mxu0
        %v1282 = vpop.f32.mrf.mxu0
        %v1283 = vadd.f32 0.0, %v1282
        %v1284 = vpop.f32.mrf.mxu0
        %1285 = vmatprep.mubr.bf16.mxu0 0
        %1286 = vmatmul.mubr.bf16.gmra.mxu0 %v1136
        %v1287 = vpop.f32.mrf.mxu0
        %v1288 = vadd.f32 0.0, %v1287
        %v1289 = vpop.f32.mrf.mxu0
        %v1290 = vpop.f32.mrf.mxu0
        %v1291 = vadd.f32 0.0, %v1290
        %v1292 = vpop.f32.mrf.mxu0
        %1293 = vmatprep.mubr.bf16.mxu0 0
        %1294 = vmatmul.mubr.bf16.gmra.mxu0 %v1139
        %v1295 = vpop.f32.mrf.mxu0
        %v1296 = vadd.f32 0.0, %v1295
        %v1297 = vpop.f32.mrf.mxu0
        %v1298 = vpop.f32.mrf.mxu0
        %v1299 = vadd.f32 0.0, %v1298
        %v1300 = vpop.f32.mrf.mxu0
        %1301 = vdwg.mxu0
        %v1310 = vunpack.c.l.b16 %v1004
        %v1311 = vunpack.c.l.b16 %v1005
        %v1312 = vunpack.c.l.b16 %v1006
        %v1313 = vunpack.c.l.b16 %v1007
        %v1314 = vunpack.c.l.b16 %v1008
        %v1315 = vunpack.c.l.b16 %v1009
        %v1316 = vunpack.c.l.b16 %v1010
        %v1317 = vunpack.c.l.b16 %v1011
        %v1318 = vpack.c.b16 %v1311, %v1310
        %v1319 = vpack.c.b16 %v1313, %v1312
        %v1320 = vpack.c.b16 %v1315, %v1314
        %v1321 = vpack.c.b16 %v1317, %v1316
        %v1327 = vsel %vm877, %v988, 0
        %v1330 = vsel %vm877, %v989, 0
        %v1333 = vsel %vm877, %v990, 0
        %v1336 = vsel %vm877, %v991, 0
        %v1339 = vsel %vm877, %v992, 0
        %v1342 = vsel %vm877, %v993, 0
        %v1345 = vsel %vm877, %v994, 0
        %v1348 = vsel %vm877, %v995, 0
        %v1351 = vsel %vm877, %v996, 0
        %v1354 = vsel %vm877, %v997, 0
        %v1357 = vsel %vm877, %v998, 0
        %v1360 = vsel %vm877, %v999, 0
        %v1363 = vsel %vm877, %v1000, 0
        %v1366 = vsel %vm877, %v1001, 0
        %v1369 = vsel %vm877, %v1002, 0
        %v1372 = vsel %vm877, %v1003, 0
        %1374 = vmatprep.subr.bf16.mxu0 0
        %1375 = vmatpush1.bf16.msra.mxu0 0
        %1376 = vmatprep.subr.bf16.mxu0 0
        %1377 = vmatpush1.bf16.msra.mxu0 0
        %1378 = vmatprep.subr.bf16.mxu0 0
        %1379 = vmatpush1.bf16.msra.mxu0 0
        %1380 = vmatprep.subr.bf16.mxu0 0
        %1381 = vmatpush1.bf16.msra.mxu0 0
        %1382 = vmatprep.subr.bf16.mxu0 0
        %1383 = vmatpush1.bf16.msra.mxu0 %v1321
        %1384 = vmatprep.subr.bf16.mxu0 0
        %1385 = vmatpush1.bf16.msra.mxu0 %v1320
        %1386 = vmatprep.subr.bf16.mxu0 0
        %1387 = vmatpush1.bf16.msra.mxu0 %v1319
        %1388 = vmatprep.subr.bf16.mxu0 0
        %1389 = vmatpush1.bf16.msra.mxu0 %v1318
        %1390 = vmatprep.subr.bf16.mxu0 0
        %1391 = vmatpush2.bf16.msra.mxu0 0
        %1392 = vmatprep.subr.bf16.mxu0 0
        %1393 = vmatpush2.bf16.msra.mxu0 0
        %1394 = vmatprep.subr.bf16.mxu0 0
        %1395 = vmatpush2.bf16.msra.mxu0 0
        %1396 = vmatprep.subr.bf16.mxu0 0
        %1397 = vmatpush2.bf16.msra.mxu0 0
        %1398 = vmatprep.subr.bf16.mxu0 0
        %1399 = vmatpush2.bf16.msra.mxu0 0
        %1400 = vmatprep.subr.bf16.mxu0 0
        %1401 = vmatpush2.bf16.msra.mxu0 0
        %1402 = vmatprep.subr.bf16.mxu0 0
        %1403 = vmatpush2.bf16.msra.mxu0 0
        %1404 = vmatprep.subr.bf16.mxu0 0
        %1405 = vmatpush2.bf16.msra.mxu0 0
        %1406 = vmatprep.mubr.bf16.mxu0 0
        %1407 = vmatmul.mubr.bf16.gmra.mxu0 %v1327
        %v1408 = vpop.f32.mrf.mxu0
        %v1409 = vadd.f32 %v1176, %v1408
        %v1410 = vpop.f32.mrf.mxu0
        %v1411 = vpop.f32.mrf.mxu0
        %v1412 = vadd.f32 %v1179, %v1411
        %v1413 = vpop.f32.mrf.mxu0
        %1414 = vmatprep.mubr.bf16.mxu0 0
        %1415 = vmatmul.mubr.bf16.gmra.mxu0 %v1330
        %v1416 = vpop.f32.mrf.mxu0
        %v1417 = vadd.f32 %v1184, %v1416
        %v1418 = vpop.f32.mrf.mxu0
        %v1419 = vpop.f32.mrf.mxu0
        %v1420 = vadd.f32 %v1187, %v1419
        %v1421 = vpop.f32.mrf.mxu0
        %1422 = vmatprep.mubr.bf16.mxu0 0
        %1423 = vmatmul.mubr.bf16.gmra.mxu0 %v1333
        %v1424 = vpop.f32.mrf.mxu0
        %v1425 = vadd.f32 %v1192, %v1424
        %v1426 = vpop.f32.mrf.mxu0
        %v1427 = vpop.f32.mrf.mxu0
        %v1428 = vadd.f32 %v1195, %v1427
        %v1429 = vpop.f32.mrf.mxu0
        %1430 = vmatprep.mubr.bf16.mxu0 0
        %1431 = vmatmul.mubr.bf16.gmra.mxu0 %v1336
        %v1432 = vpop.f32.mrf.mxu0
        %v1433 = vadd.f32 %v1200, %v1432
        %v1434 = vpop.f32.mrf.mxu0
        %v1435 = vpop.f32.mrf.mxu0
        %v1436 = vadd.f32 %v1203, %v1435
        %v1437 = vpop.f32.mrf.mxu0
        %1438 = vmatprep.mubr.bf16.mxu0 0
        %1439 = vmatmul.mubr.bf16.gmra.mxu0 %v1339
        %v1440 = vpop.f32.mrf.mxu0
        %v1441 = vadd.f32 %v1208, %v1440
        %v1442 = vpop.f32.mrf.mxu0
        %v1443 = vpop.f32.mrf.mxu0
        %v1444 = vadd.f32 %v1211, %v1443
        %v1445 = vpop.f32.mrf.mxu0
        %1446 = vmatprep.mubr.bf16.mxu0 0
        %1447 = vmatmul.mubr.bf16.gmra.mxu0 %v1342
        %v1448 = vpop.f32.mrf.mxu0
        %v1449 = vadd.f32 %v1216, %v1448
        %v1450 = vpop.f32.mrf.mxu0
        %v1451 = vpop.f32.mrf.mxu0
        %v1452 = vadd.f32 %v1219, %v1451
        %v1453 = vpop.f32.mrf.mxu0
        %1454 = vmatprep.mubr.bf16.mxu0 0
        %1455 = vmatmul.mubr.bf16.gmra.mxu0 %v1345
        %v1456 = vpop.f32.mrf.mxu0
        %v1457 = vadd.f32 %v1224, %v1456
        %v1458 = vpop.f32.mrf.mxu0
        %v1459 = vpop.f32.mrf.mxu0
        %v1460 = vadd.f32 %v1227, %v1459
        %v1461 = vpop.f32.mrf.mxu0
        %1462 = vmatprep.mubr.bf16.mxu0 0
        %1463 = vmatmul.mubr.bf16.gmra.mxu0 %v1348
        %v1464 = vpop.f32.mrf.mxu0
        %v1465 = vadd.f32 %v1232, %v1464
        %v1466 = vpop.f32.mrf.mxu0
        %v1467 = vpop.f32.mrf.mxu0
        %v1468 = vadd.f32 %v1235, %v1467
        %v1469 = vpop.f32.mrf.mxu0
        %1470 = vmatprep.mubr.bf16.mxu0 0
        %1471 = vmatmul.mubr.bf16.gmra.mxu0 %v1351
        %v1472 = vpop.f32.mrf.mxu0
        %v1473 = vadd.f32 %v1240, %v1472
        %v1474 = vpop.f32.mrf.mxu0
        %v1475 = vpop.f32.mrf.mxu0
        %v1476 = vadd.f32 %v1243, %v1475
        %v1477 = vpop.f32.mrf.mxu0
        %1478 = vmatprep.mubr.bf16.mxu0 0
        %1479 = vmatmul.mubr.bf16.gmra.mxu0 %v1354
        %v1480 = vpop.f32.mrf.mxu0
        %v1481 = vadd.f32 %v1248, %v1480
        %v1482 = vpop.f32.mrf.mxu0
        %v1483 = vpop.f32.mrf.mxu0
        %v1484 = vadd.f32 %v1251, %v1483
        %v1485 = vpop.f32.mrf.mxu0
        %1486 = vmatprep.mubr.bf16.mxu0 0
        %1487 = vmatmul.mubr.bf16.gmra.mxu0 %v1357
        %v1488 = vpop.f32.mrf.mxu0
        %v1489 = vadd.f32 %v1256, %v1488
        %v1490 = vpop.f32.mrf.mxu0
        %v1491 = vpop.f32.mrf.mxu0
        %v1492 = vadd.f32 %v1259, %v1491
        %v1493 = vpop.f32.mrf.mxu0
        %1494 = vmatprep.mubr.bf16.mxu0 0
        %1495 = vmatmul.mubr.bf16.gmra.mxu0 %v1360
        %v1496 = vpop.f32.mrf.mxu0
        %v1497 = vadd.f32 %v1264, %v1496
        %v1498 = vpop.f32.mrf.mxu0
        %v1499 = vpop.f32.mrf.mxu0
        %v1500 = vadd.f32 %v1267, %v1499
        %v1501 = vpop.f32.mrf.mxu0
        %1502 = vmatprep.mubr.bf16.mxu0 0
        %1503 = vmatmul.mubr.bf16.gmra.mxu0 %v1363
        %v1504 = vpop.f32.mrf.mxu0
        %v1505 = vadd.f32 %v1272, %v1504
        %v1506 = vpop.f32.mrf.mxu0
        %v1507 = vpop.f32.mrf.mxu0
        %v1508 = vadd.f32 %v1275, %v1507
        %v1509 = vpop.f32.mrf.mxu0
        %1510 = vmatprep.mubr.bf16.mxu0 0
        %1511 = vmatmul.mubr.bf16.gmra.mxu0 %v1366
        %v1512 = vpop.f32.mrf.mxu0
        %v1513 = vadd.f32 %v1280, %v1512
        %v1514 = vpop.f32.mrf.mxu0
        %v1515 = vpop.f32.mrf.mxu0
        %v1516 = vadd.f32 %v1283, %v1515
        %v1517 = vpop.f32.mrf.mxu0
        %1518 = vmatprep.mubr.bf16.mxu0 0
        %1519 = vmatmul.mubr.bf16.gmra.mxu0 %v1369
        %v1520 = vpop.f32.mrf.mxu0
        %v1521 = vadd.f32 %v1288, %v1520
        %v1522 = vpop.f32.mrf.mxu0
        %v1523 = vpop.f32.mrf.mxu0
        %v1524 = vadd.f32 %v1291, %v1523
        %v1525 = vpop.f32.mrf.mxu0
        %1526 = vmatprep.mubr.bf16.mxu0 0
        %1527 = vmatmul.mubr.bf16.gmra.mxu0 %v1372
        %v1528 = vpop.f32.mrf.mxu0
        %v1529 = vadd.f32 %v1296, %v1528
        %v1530 = vpop.f32.mrf.mxu0
        %v1531 = vpop.f32.mrf.mxu0
        %v1532 = vadd.f32 %v1299, %v1531
        %v1533 = vpop.f32.mrf.mxu0
        %1534 = vdwg.mxu0
        %v1535 = vld [vmem:[#allocation2 + $0x2] sm:$0xff]
        %v1536 = vld [vmem:[#allocation2 + $0xa] sm:$0xff]
        %v1537 = vld [vmem:[#allocation2 + $0x1a] sm:$0xff]
        %v1538 = vld [vmem:[#allocation2 + $0x22] sm:$0xff]
        %v1539 = vld [vmem:[#allocation2 + $0x32] sm:$0xff]
        %v1540 = vld [vmem:[#allocation2 + $0x3a] sm:$0xff]
        %v1541 = vld [vmem:[#allocation2 + $0x4a] sm:$0xff]
        %v1542 = vld [vmem:[#allocation2 + $0x52] sm:$0xff]
        %v1543 = vld [vmem:[#allocation2 + $0x62] sm:$0xff]
        %v1544 = vld [vmem:[#allocation2 + $0x6a] sm:$0xff]
        %v1545 = vld [vmem:[#allocation2 + $0x7a] sm:$0xff]
        %v1546 = vld [vmem:[#allocation2 + $0x82] sm:$0xff]
        %v1547 = vld [vmem:[#allocation2 + $0x92] sm:$0xff]
        %v1548 = vld [vmem:[#allocation2 + $0x9a] sm:$0xff]
        %v1549 = vld [vmem:[#allocation2 + $0xaa] sm:$0xff]
        %v1550 = vld [vmem:[#allocation2 + $0xb2] sm:$0xff]
        %v1551 = vld [vmem:[#allocation2 + $0xc2] sm:$0xff]
        %v1552 = vld [vmem:[#allocation2 + $0xca] sm:$0xff]
        %v1553 = vld [vmem:[#allocation2 + $0xda] sm:$0xff]
        %v1554 = vld [vmem:[#allocation2 + $0xe2] sm:$0xff]
        %v1555 = vld [vmem:[#allocation2 + $0xf2] sm:$0xff]
        %v1556 = vld [vmem:[#allocation2 + $0xfa] sm:$0xff]
        %v1557 = vld [vmem:[#allocation2 + $0x10a] sm:$0xff]
        %v1558 = vld [vmem:[#allocation2 + $0x112] sm:$0xff]
        %v1559 = vld [vmem:[#allocation2 + $0x122] sm:$0xff]
        %v1560 = vld [vmem:[#allocation2 + $0x12a] sm:$0xff]
        %v1561 = vld [vmem:[#allocation2 + $0x13a] sm:$0xff]
        %v1562 = vld [vmem:[#allocation2 + $0x142] sm:$0xff]
        %v1563 = vld [vmem:[#allocation2 + $0x152] sm:$0xff]
        %v1564 = vld [vmem:[#allocation2 + $0x15a] sm:$0xff]
        %v1565 = vld [vmem:[#allocation2 + $0x16a] sm:$0xff]
        %v1566 = vld [vmem:[#allocation2 + $0x172] sm:$0xff]
        %v1567 = vpack.c.bf16 %v1536, %v1535
        %v1568 = vpack.c.bf16 %v1538, %v1537
        %v1569 = vpack.c.bf16 %v1540, %v1539
        %v1570 = vpack.c.bf16 %v1542, %v1541
        %v1571 = vpack.c.bf16 %v1544, %v1543
        %v1572 = vpack.c.bf16 %v1546, %v1545
        %v1573 = vpack.c.bf16 %v1548, %v1547
        %v1574 = vpack.c.bf16 %v1550, %v1549
        %v1575 = vpack.c.bf16 %v1552, %v1551
        %v1576 = vpack.c.bf16 %v1554, %v1553
        %v1577 = vpack.c.bf16 %v1556, %v1555
        %v1578 = vpack.c.bf16 %v1558, %v1557
        %v1579 = vpack.c.bf16 %v1560, %v1559
        %v1580 = vpack.c.bf16 %v1562, %v1561
        %v1581 = vpack.c.bf16 %v1564, %v1563
        %v1582 = vpack.c.bf16 %v1566, %v1565
        %s1583 = scalar_lea.vmem [#allocation6], 64
        %v1584 = vld [vmem:[%s1583] sm:$0xf]
        %v1585 = vld [vmem:[%s1583 + $0x4] sm:$0xf]
        %v1586 = vld [vmem:[%s1583 + $0x8] sm:$0xf]
        %v1587 = vld [vmem:[%s1583 + $0xc] sm:$0xf]
        %v1588 = vld [vmem:[%s1583 + $0x10] sm:$0xf]
        %v1589 = vld [vmem:[%s1583 + $0x14] sm:$0xf]
        %v1590 = vld [vmem:[%s1583 + $0x18] sm:$0xf]
        %v1591 = vld [vmem:[%s1583 + $0x1c] sm:$0xf]
        %v1600 = vunpack.c.l.b16 %v1584
        %v1601 = vunpack.c.l.b16 %v1585
        %v1602 = vunpack.c.l.b16 %v1586
        %v1603 = vunpack.c.l.b16 %v1587
        %v1604 = vunpack.c.l.b16 %v1588
        %v1605 = vunpack.c.l.b16 %v1589
        %v1606 = vunpack.c.l.b16 %v1590
        %v1607 = vunpack.c.l.b16 %v1591
        %v1608 = vpack.c.b16 %v1601, %v1600
        %v1609 = vpack.c.b16 %v1603, %v1602
        %v1610 = vpack.c.b16 %v1605, %v1604
        %v1611 = vpack.c.b16 %v1607, %v1606
        %v1617 = vsel %vm877, %v1567, 0
        %v1620 = vsel %vm877, %v1568, 0
        %v1623 = vsel %vm877, %v1569, 0
        %v1626 = vsel %vm877, %v1570, 0
        %v1629 = vsel %vm877, %v1571, 0
        %v1632 = vsel %vm877, %v1572, 0
        %v1635 = vsel %vm877, %v1573, 0
        %v1638 = vsel %vm877, %v1574, 0
        %v1641 = vsel %vm877, %v1575, 0
        %v1644 = vsel %vm877, %v1576, 0
        %v1647 = vsel %vm877, %v1577, 0
        %v1650 = vsel %vm877, %v1578, 0
        %v1653 = vsel %vm877, %v1579, 0
        %v1656 = vsel %vm877, %v1580, 0
        %v1659 = vsel %vm877, %v1581, 0
        %v1662 = vsel %vm877, %v1582, 0
        %1664 = vmatprep.subr.bf16.mxu0 0
        %1665 = vmatpush1.bf16.msra.mxu0 0
        %1666 = vmatprep.subr.bf16.mxu0 0
        %1667 = vmatpush1.bf16.msra.mxu0 0
        %1668 = vmatprep.subr.bf16.mxu0 0
        %1669 = vmatpush1.bf16.msra.mxu0 0
        %1670 = vmatprep.subr.bf16.mxu0 0
        %1671 = vmatpush1.bf16.msra.mxu0 0
        %1672 = vmatprep.subr.bf16.mxu0 0
        %1673 = vmatpush1.bf16.msra.mxu0 %v1611
        %1674 = vmatprep.subr.bf16.mxu0 0
        %1675 = vmatpush1.bf16.msra.mxu0 %v1610
        %1676 = vmatprep.subr.bf16.mxu0 0
        %1677 = vmatpush1.bf16.msra.mxu0 %v1609
        %1678 = vmatprep.subr.bf16.mxu0 0
        %1679 = vmatpush1.bf16.msra.mxu0 %v1608
        %1680 = vmatprep.subr.bf16.mxu0 0
        %1681 = vmatpush2.bf16.msra.mxu0 0
        %1682 = vmatprep.subr.bf16.mxu0 0
        %1683 = vmatpush2.bf16.msra.mxu0 0
        %1684 = vmatprep.subr.bf16.mxu0 0
        %1685 = vmatpush2.bf16.msra.mxu0 0
        %1686 = vmatprep.subr.bf16.mxu0 0
        %1687 = vmatpush2.bf16.msra.mxu0 0
        %1688 = vmatprep.subr.bf16.mxu0 0
        %1689 = vmatpush2.bf16.msra.mxu0 0
        %1690 = vmatprep.subr.bf16.mxu0 0
        %1691 = vmatpush2.bf16.msra.mxu0 0
        %1692 = vmatprep.subr.bf16.mxu0 0
        %1693 = vmatpush2.bf16.msra.mxu0 0
        %1694 = vmatprep.subr.bf16.mxu0 0
        %1695 = vmatpush2.bf16.msra.mxu0 0
        %1696 = vmatprep.mubr.bf16.mxu0 0
        %1697 = vmatmul.mubr.bf16.gmra.mxu0 %v1617
        %v1698 = vpop.f32.mrf.mxu0
        %v1699 = vadd.f32 0.0, %v1698
        %v1700 = vpop.f32.mrf.mxu0
        %v1701 = vpop.f32.mrf.mxu0
        %v1702 = vadd.f32 0.0, %v1701
        %v1703 = vpop.f32.mrf.mxu0
        %1704 = vmatprep.mubr.bf16.mxu0 0
        %1705 = vmatmul.mubr.bf16.gmra.mxu0 %v1620
        %v1706 = vpop.f32.mrf.mxu0
        %v1707 = vadd.f32 0.0, %v1706
        %v1708 = vpop.f32.mrf.mxu0
        %v1709 = vpop.f32.mrf.mxu0
        %v1710 = vadd.f32 0.0, %v1709
        %v1711 = vpop.f32.mrf.mxu0
        %1712 = vmatprep.mubr.bf16.mxu0 0
        %1713 = vmatmul.mubr.bf16.gmra.mxu0 %v1623
        %v1714 = vpop.f32.mrf.mxu0
        %v1715 = vadd.f32 0.0, %v1714
        %v1716 = vpop.f32.mrf.mxu0
        %v1717 = vpop.f32.mrf.mxu0
        %v1718 = vadd.f32 0.0, %v1717
        %v1719 = vpop.f32.mrf.mxu0
        %1720 = vmatprep.mubr.bf16.mxu0 0
        %1721 = vmatmul.mubr.bf16.gmra.mxu0 %v1626
        %v1722 = vpop.f32.mrf.mxu0
        %v1723 = vadd.f32 0.0, %v1722
        %v1724 = vpop.f32.mrf.mxu0
        %v1725 = vpop.f32.mrf.mxu0
        %v1726 = vadd.f32 0.0, %v1725
        %v1727 = vpop.f32.mrf.mxu0
        %1728 = vmatprep.mubr.bf16.mxu0 0
        %1729 = vmatmul.mubr.bf16.gmra.mxu0 %v1629
        %v1730 = vpop.f32.mrf.mxu0
        %v1731 = vadd.f32 0.0, %v1730
        %v1732 = vpop.f32.mrf.mxu0
        %v1733 = vpop.f32.mrf.mxu0
        %v1734 = vadd.f32 0.0, %v1733
        %v1735 = vpop.f32.mrf.mxu0
        %1736 = vmatprep.mubr.bf16.mxu0 0
        %1737 = vmatmul.mubr.bf16.gmra.mxu0 %v1632
        %v1738 = vpop.f32.mrf.mxu0
        %v1739 = vadd.f32 0.0, %v1738
        %v1740 = vpop.f32.mrf.mxu0
        %v1741 = vpop.f32.mrf.mxu0
        %v1742 = vadd.f32 0.0, %v1741
        %v1743 = vpop.f32.mrf.mxu0
        %1744 = vmatprep.mubr.bf16.mxu0 0
        %1745 = vmatmul.mubr.bf16.gmra.mxu0 %v1635
        %v1746 = vpop.f32.mrf.mxu0
        %v1747 = vadd.f32 0.0, %v1746
        %v1748 = vpop.f32.mrf.mxu0
        %v1749 = vpop.f32.mrf.mxu0
        %v1750 = vadd.f32 0.0, %v1749
        %v1751 = vpop.f32.mrf.mxu0
        %1752 = vmatprep.mubr.bf16.mxu0 0
        %1753 = vmatmul.mubr.bf16.gmra.mxu0 %v1638
        %v1754 = vpop.f32.mrf.mxu0
        %v1755 = vadd.f32 0.0, %v1754
        %v1756 = vpop.f32.mrf.mxu0
        %v1757 = vpop.f32.mrf.mxu0
        %v1758 = vadd.f32 0.0, %v1757
        %v1759 = vpop.f32.mrf.mxu0
        %1760 = vmatprep.mubr.bf16.mxu0 0
        %1761 = vmatmul.mubr.bf16.gmra.mxu0 %v1641
        %v1762 = vpop.f32.mrf.mxu0
        %v1763 = vadd.f32 0.0, %v1762
        %v1764 = vpop.f32.mrf.mxu0
        %v1765 = vpop.f32.mrf.mxu0
        %v1766 = vadd.f32 0.0, %v1765
        %v1767 = vpop.f32.mrf.mxu0
        %1768 = vmatprep.mubr.bf16.mxu0 0
        %1769 = vmatmul.mubr.bf16.gmra.mxu0 %v1644
        %v1770 = vpop.f32.mrf.mxu0
        %v1771 = vadd.f32 0.0, %v1770
        %v1772 = vpop.f32.mrf.mxu0
        %v1773 = vpop.f32.mrf.mxu0
        %v1774 = vadd.f32 0.0, %v1773
        %v1775 = vpop.f32.mrf.mxu0
        %1776 = vmatprep.mubr.bf16.mxu0 0
        %1777 = vmatmul.mubr.bf16.gmra.mxu0 %v1647
        %v1778 = vpop.f32.mrf.mxu0
        %v1779 = vadd.f32 0.0, %v1778
        %v1780 = vpop.f32.mrf.mxu0
        %v1781 = vpop.f32.mrf.mxu0
        %v1782 = vadd.f32 0.0, %v1781
        %v1783 = vpop.f32.mrf.mxu0
        %1784 = vmatprep.mubr.bf16.mxu0 0
        %1785 = vmatmul.mubr.bf16.gmra.mxu0 %v1650
        %v1786 = vpop.f32.mrf.mxu0
        %v1787 = vadd.f32 0.0, %v1786
        %v1788 = vpop.f32.mrf.mxu0
        %v1789 = vpop.f32.mrf.mxu0
        %v1790 = vadd.f32 0.0, %v1789
        %v1791 = vpop.f32.mrf.mxu0
        %1792 = vmatprep.mubr.bf16.mxu0 0
        %1793 = vmatmul.mubr.bf16.gmra.mxu0 %v1653
        %v1794 = vpop.f32.mrf.mxu0
        %v1795 = vadd.f32 0.0, %v1794
        %v1796 = vpop.f32.mrf.mxu0
        %v1797 = vpop.f32.mrf.mxu0
        %v1798 = vadd.f32 0.0, %v1797
        %v1799 = vpop.f32.mrf.mxu0
        %1800 = vmatprep.mubr.bf16.mxu0 0
        %1801 = vmatmul.mubr.bf16.gmra.mxu0 %v1656
        %v1802 = vpop.f32.mrf.mxu0
        %v1803 = vadd.f32 0.0, %v1802
        %v1804 = vpop.f32.mrf.mxu0
        %v1805 = vpop.f32.mrf.mxu0
        %v1806 = vadd.f32 0.0, %v1805
        %v1807 = vpop.f32.mrf.mxu0
        %1808 = vmatprep.mubr.bf16.mxu0 0
        %1809 = vmatmul.mubr.bf16.gmra.mxu0 %v1659
        %v1810 = vpop.f32.mrf.mxu0
        %v1811 = vadd.f32 0.0, %v1810
        %v1812 = vpop.f32.mrf.mxu0
        %v1813 = vpop.f32.mrf.mxu0
        %v1814 = vadd.f32 0.0, %v1813
        %v1815 = vpop.f32.mrf.mxu0
        %1816 = vmatprep.mubr.bf16.mxu0 0
        %1817 = vmatmul.mubr.bf16.gmra.mxu0 %v1662
        %v1818 = vpop.f32.mrf.mxu0
        %v1819 = vadd.f32 0.0, %v1818
        %v1820 = vpop.f32.mrf.mxu0
        %v1821 = vpop.f32.mrf.mxu0
        %v1822 = vadd.f32 0.0, %v1821
        %v1823 = vpop.f32.mrf.mxu0
        %1824 = vdwg.mxu0
        %v1825 = vadd.f32 %v1409, %v1699
        %v1826 = vadd.f32 %v1412, %v1702
        %v1827 = vadd.f32 %v1417, %v1707
        %v1828 = vadd.f32 %v1420, %v1710
        %v1829 = vadd.f32 %v1425, %v1715
        %v1830 = vadd.f32 %v1428, %v1718
        %v1831 = vadd.f32 %v1433, %v1723
        %v1832 = vadd.f32 %v1436, %v1726
        %v1833 = vadd.f32 %v1441, %v1731
        %v1834 = vadd.f32 %v1444, %v1734
        %v1835 = vadd.f32 %v1449, %v1739
        %v1836 = vadd.f32 %v1452, %v1742
        %v1837 = vadd.f32 %v1457, %v1747
        %v1838 = vadd.f32 %v1460, %v1750
        %v1839 = vadd.f32 %v1465, %v1755
        %v1840 = vadd.f32 %v1468, %v1758
        %v1841 = vadd.f32 %v1473, %v1763
        %v1842 = vadd.f32 %v1476, %v1766
        %v1843 = vadd.f32 %v1481, %v1771
        %v1844 = vadd.f32 %v1484, %v1774
        %v1845 = vadd.f32 %v1489, %v1779
        %v1846 = vadd.f32 %v1492, %v1782
        %v1847 = vadd.f32 %v1497, %v1787
        %v1848 = vadd.f32 %v1500, %v1790
        %v1849 = vadd.f32 %v1505, %v1795
        %v1850 = vadd.f32 %v1508, %v1798
        %v1851 = vadd.f32 %v1513, %v1803
        %v1852 = vadd.f32 %v1516, %v1806
        %v1853 = vadd.f32 %v1521, %v1811
        %v1854 = vadd.f32 %v1524, %v1814
        %v1855 = vadd.f32 %v1529, %v1819
        %v1856 = vadd.f32 %v1532, %v1822
        %v1857 = vld [vmem:[%s923] sm:$0xff]
        %v1858 = vld [vmem:[%s923 + $0x8] sm:$0xff]
        %v1859 = vld [vmem:[%s923 + $0x18] sm:$0xff]
        %v1860 = vld [vmem:[%s923 + $0x20] sm:$0xff]
        %v1861 = vld [vmem:[%s923 + $0x30] sm:$0xff]
        %v1862 = vld [vmem:[%s923 + $0x38] sm:$0xff]
        %v1863 = vld [vmem:[%s923 + $0x48] sm:$0xff]
        %v1864 = vld [vmem:[%s923 + $0x50] sm:$0xff]
        %v1865 = vld [vmem:[%s923 + $0x60] sm:$0xff]
        %v1866 = vld [vmem:[%s923 + $0x68] sm:$0xff]
        %v1867 = vld [vmem:[%s923 + $0x78] sm:$0xff]
        %v1868 = vld [vmem:[%s923 + $0x80] sm:$0xff]
        %v1869 = vld [vmem:[%s923 + $0x90] sm:$0xff]
        %v1870 = vld [vmem:[%s923 + $0x98] sm:$0xff]
        %v1871 = vld [vmem:[%s923 + $0xa8] sm:$0xff]
        %v1872 = vld [vmem:[%s923 + $0xb0] sm:$0xff]
        %v1873 = vld [vmem:[%s923 + $0xc0] sm:$0xff]
        %v1874 = vld [vmem:[%s923 + $0xc8] sm:$0xff]
        %v1875 = vld [vmem:[%s923 + $0xd8] sm:$0xff]
        %v1876 = vld [vmem:[%s923 + $0xe0] sm:$0xff]
        %v1877 = vld [vmem:[%s923 + $0xf0] sm:$0xff]
        %v1878 = vld [vmem:[%s923 + $0xf8] sm:$0xff]
        %v1879 = vld [vmem:[%s923 + $0x108] sm:$0xff]
        %v1880 = vld [vmem:[%s923 + $0x110] sm:$0xff]
        %v1881 = vld [vmem:[%s923 + $0x120] sm:$0xff]
        %v1882 = vld [vmem:[%s923 + $0x128] sm:$0xff]
        %v1883 = vld [vmem:[%s923 + $0x138] sm:$0xff]
        %v1884 = vld [vmem:[%s923 + $0x140] sm:$0xff]
        %v1885 = vld [vmem:[%s923 + $0x150] sm:$0xff]
        %v1886 = vld [vmem:[%s923 + $0x158] sm:$0xff]
        %v1887 = vld [vmem:[%s923 + $0x168] sm:$0xff]
        %v1888 = vld [vmem:[%s923 + $0x170] sm:$0xff]
        %v1889 = vpack.c.bf16 %v1858, %v1857
        %v1890 = vpack.c.bf16 %v1860, %v1859
        %v1891 = vpack.c.bf16 %v1862, %v1861
        %v1892 = vpack.c.bf16 %v1864, %v1863
        %v1893 = vpack.c.bf16 %v1866, %v1865
        %v1894 = vpack.c.bf16 %v1868, %v1867
        %v1895 = vpack.c.bf16 %v1870, %v1869
        %v1896 = vpack.c.bf16 %v1872, %v1871
        %v1897 = vpack.c.bf16 %v1874, %v1873
        %v1898 = vpack.c.bf16 %v1876, %v1875
        %v1899 = vpack.c.bf16 %v1878, %v1877
        %v1900 = vpack.c.bf16 %v1880, %v1879
        %v1901 = vpack.c.bf16 %v1882, %v1881
        %v1902 = vpack.c.bf16 %v1884, %v1883
        %v1903 = vpack.c.bf16 %v1886, %v1885
        %v1904 = vpack.c.bf16 %v1888, %v1887
        %s1905 = scalar_lea.vmem [#allocation6], 96
        %v1906 = vld [vmem:[%s1905] sm:$0xf]
        %v1907 = vld [vmem:[%s1905 + $0x4] sm:$0xf]
        %v1908 = vld [vmem:[%s1905 + $0x8] sm:$0xf]
        %v1909 = vld [vmem:[%s1905 + $0xc] sm:$0xf]
        %v1910 = vld [vmem:[%s1905 + $0x10] sm:$0xf]
        %v1911 = vld [vmem:[%s1905 + $0x14] sm:$0xf]
        %v1912 = vld [vmem:[%s1905 + $0x18] sm:$0xf]
        %v1913 = vld [vmem:[%s1905 + $0x1c] sm:$0xf]
        %v1922 = vunpack.c.l.b16 %v1906
        %v1923 = vunpack.c.l.b16 %v1907
        %v1924 = vunpack.c.l.b16 %v1908
        %v1925 = vunpack.c.l.b16 %v1909
        %v1926 = vunpack.c.l.b16 %v1910
        %v1927 = vunpack.c.l.b16 %v1911
        %v1928 = vunpack.c.l.b16 %v1912
        %v1929 = vunpack.c.l.b16 %v1913
        %v1930 = vpack.c.b16 %v1923, %v1922
        %v1931 = vpack.c.b16 %v1925, %v1924
        %v1932 = vpack.c.b16 %v1927, %v1926
        %v1933 = vpack.c.b16 %v1929, %v1928
        %v1939 = vsel %vm877, %v1889, 0
        %v1942 = vsel %vm877, %v1890, 0
        %v1945 = vsel %vm877, %v1891, 0
        %v1948 = vsel %vm877, %v1892, 0
        %v1951 = vsel %vm877, %v1893, 0
        %v1954 = vsel %vm877, %v1894, 0
        %v1957 = vsel %vm877, %v1895, 0
        %v1960 = vsel %vm877, %v1896, 0
        %v1963 = vsel %vm877, %v1897, 0
        %v1966 = vsel %vm877, %v1898, 0
        %v1969 = vsel %vm877, %v1899, 0
        %v1972 = vsel %vm877, %v1900, 0
        %v1975 = vsel %vm877, %v1901, 0
        %v1978 = vsel %vm877, %v1902, 0
        %v1981 = vsel %vm877, %v1903, 0
        %v1984 = vsel %vm877, %v1904, 0
        %1986 = vmatprep.subr.bf16.mxu0 0
        %1987 = vmatpush1.bf16.msra.mxu0 0
        %1988 = vmatprep.subr.bf16.mxu0 0
        %1989 = vmatpush1.bf16.msra.mxu0 0
        %1990 = vmatprep.subr.bf16.mxu0 0
        %1991 = vmatpush1.bf16.msra.mxu0 0
        %1992 = vmatprep.subr.bf16.mxu0 0
        %1993 = vmatpush1.bf16.msra.mxu0 0
        %1994 = vmatprep.subr.bf16.mxu0 0
        %1995 = vmatpush1.bf16.msra.mxu0 %v1933
        %1996 = vmatprep.subr.bf16.mxu0 0
        %1997 = vmatpush1.bf16.msra.mxu0 %v1932
        %1998 = vmatprep.subr.bf16.mxu0 0
        %1999 = vmatpush1.bf16.msra.mxu0 %v1931
        %2000 = vmatprep.subr.bf16.mxu0 0
        %2001 = vmatpush1.bf16.msra.mxu0 %v1930
        %2002 = vmatprep.subr.bf16.mxu0 0
        %2003 = vmatpush2.bf16.msra.mxu0 0
        %2004 = vmatprep.subr.bf16.mxu0 0
        %2005 = vmatpush2.bf16.msra.mxu0 0
        %2006 = vmatprep.subr.bf16.mxu0 0
        %2007 = vmatpush2.bf16.msra.mxu0 0
        %2008 = vmatprep.subr.bf16.mxu0 0
        %2009 = vmatpush2.bf16.msra.mxu0 0
        %2010 = vmatprep.subr.bf16.mxu0 0
        %2011 = vmatpush2.bf16.msra.mxu0 0
        %2012 = vmatprep.subr.bf16.mxu0 0
        %2013 = vmatpush2.bf16.msra.mxu0 0
        %2014 = vmatprep.subr.bf16.mxu0 0
        %2015 = vmatpush2.bf16.msra.mxu0 0
        %2016 = vmatprep.subr.bf16.mxu0 0
        %2017 = vmatpush2.bf16.msra.mxu0 0
        %2018 = vmatprep.mubr.bf16.mxu0 0
        %2019 = vmatmul.mubr.bf16.gmra.mxu0 %v1939
        %v2020 = vpop.f32.mrf.mxu0
        %v2021 = vadd.f32 0.0, %v2020
        %v2022 = vpop.f32.mrf.mxu0
        %v2023 = vpop.f32.mrf.mxu0
        %v2024 = vadd.f32 0.0, %v2023
        %v2025 = vpop.f32.mrf.mxu0
        %2026 = vmatprep.mubr.bf16.mxu0 0
        %2027 = vmatmul.mubr.bf16.gmra.mxu0 %v1942
        %v2028 = vpop.f32.mrf.mxu0
        %v2029 = vadd.f32 0.0, %v2028
        %v2030 = vpop.f32.mrf.mxu0
        %v2031 = vpop.f32.mrf.mxu0
        %v2032 = vadd.f32 0.0, %v2031
        %v2033 = vpop.f32.mrf.mxu0
        %2034 = vmatprep.mubr.bf16.mxu0 0
        %2035 = vmatmul.mubr.bf16.gmra.mxu0 %v1945
        %v2036 = vpop.f32.mrf.mxu0
        %v2037 = vadd.f32 0.0, %v2036
        %v2038 = vpop.f32.mrf.mxu0
        %v2039 = vpop.f32.mrf.mxu0
        %v2040 = vadd.f32 0.0, %v2039
        %v2041 = vpop.f32.mrf.mxu0
        %2042 = vmatprep.mubr.bf16.mxu0 0
        %2043 = vmatmul.mubr.bf16.gmra.mxu0 %v1948
        %v2044 = vpop.f32.mrf.mxu0
        %v2045 = vadd.f32 0.0, %v2044
        %v2046 = vpop.f32.mrf.mxu0
        %v2047 = vpop.f32.mrf.mxu0
        %v2048 = vadd.f32 0.0, %v2047
        %v2049 = vpop.f32.mrf.mxu0
        %2050 = vmatprep.mubr.bf16.mxu0 0
        %2051 = vmatmul.mubr.bf16.gmra.mxu0 %v1951
        %v2052 = vpop.f32.mrf.mxu0
        %v2053 = vadd.f32 0.0, %v2052
        %v2054 = vpop.f32.mrf.mxu0
        %v2055 = vpop.f32.mrf.mxu0
        %v2056 = vadd.f32 0.0, %v2055
        %v2057 = vpop.f32.mrf.mxu0
        %2058 = vmatprep.mubr.bf16.mxu0 0
        %2059 = vmatmul.mubr.bf16.gmra.mxu0 %v1954
        %v2060 = vpop.f32.mrf.mxu0
        %v2061 = vadd.f32 0.0, %v2060
        %v2062 = vpop.f32.mrf.mxu0
        %v2063 = vpop.f32.mrf.mxu0
        %v2064 = vadd.f32 0.0, %v2063
        %v2065 = vpop.f32.mrf.mxu0
        %2066 = vmatprep.mubr.bf16.mxu0 0
        %2067 = vmatmul.mubr.bf16.gmra.mxu0 %v1957
        %v2068 = vpop.f32.mrf.mxu0
        %v2069 = vadd.f32 0.0, %v2068
        %v2070 = vpop.f32.mrf.mxu0
        %v2071 = vpop.f32.mrf.mxu0
        %v2072 = vadd.f32 0.0, %v2071
        %v2073 = vpop.f32.mrf.mxu0
        %2074 = vmatprep.mubr.bf16.mxu0 0
        %2075 = vmatmul.mubr.bf16.gmra.mxu0 %v1960
        %v2076 = vpop.f32.mrf.mxu0
        %v2077 = vadd.f32 0.0, %v2076
        %v2078 = vpop.f32.mrf.mxu0
        %v2079 = vpop.f32.mrf.mxu0
        %v2080 = vadd.f32 0.0, %v2079
        %v2081 = vpop.f32.mrf.mxu0
        %2082 = vmatprep.mubr.bf16.mxu0 0
        %2083 = vmatmul.mubr.bf16.gmra.mxu0 %v1963
        %v2084 = vpop.f32.mrf.mxu0
        %v2085 = vadd.f32 0.0, %v2084
        %v2086 = vpop.f32.mrf.mxu0
        %v2087 = vpop.f32.mrf.mxu0
        %v2088 = vadd.f32 0.0, %v2087
        %v2089 = vpop.f32.mrf.mxu0
        %2090 = vmatprep.mubr.bf16.mxu0 0
        %2091 = vmatmul.mubr.bf16.gmra.mxu0 %v1966
        %v2092 = vpop.f32.mrf.mxu0
        %v2093 = vadd.f32 0.0, %v2092
        %v2094 = vpop.f32.mrf.mxu0
        %v2095 = vpop.f32.mrf.mxu0
        %v2096 = vadd.f32 0.0, %v2095
        %v2097 = vpop.f32.mrf.mxu0
        %2098 = vmatprep.mubr.bf16.mxu0 0
        %2099 = vmatmul.mubr.bf16.gmra.mxu0 %v1969
        %v2100 = vpop.f32.mrf.mxu0
        %v2101 = vadd.f32 0.0, %v2100
        %v2102 = vpop.f32.mrf.mxu0
        %v2103 = vpop.f32.mrf.mxu0
        %v2104 = vadd.f32 0.0, %v2103
        %v2105 = vpop.f32.mrf.mxu0
        %2106 = vmatprep.mubr.bf16.mxu0 0
        %2107 = vmatmul.mubr.bf16.gmra.mxu0 %v1972
        %v2108 = vpop.f32.mrf.mxu0
        %v2109 = vadd.f32 0.0, %v2108
        %v2110 = vpop.f32.mrf.mxu0
        %v2111 = vpop.f32.mrf.mxu0
        %v2112 = vadd.f32 0.0, %v2111
        %v2113 = vpop.f32.mrf.mxu0
        %2114 = vmatprep.mubr.bf16.mxu0 0
        %2115 = vmatmul.mubr.bf16.gmra.mxu0 %v1975
        %v2116 = vpop.f32.mrf.mxu0
        %v2117 = vadd.f32 0.0, %v2116
        %v2118 = vpop.f32.mrf.mxu0
        %v2119 = vpop.f32.mrf.mxu0
        %v2120 = vadd.f32 0.0, %v2119
        %v2121 = vpop.f32.mrf.mxu0
        %2122 = vmatprep.mubr.bf16.mxu0 0
        %2123 = vmatmul.mubr.bf16.gmra.mxu0 %v1978
        %v2124 = vpop.f32.mrf.mxu0
        %v2125 = vadd.f32 0.0, %v2124
        %v2126 = vpop.f32.mrf.mxu0
        %v2127 = vpop.f32.mrf.mxu0
        %v2128 = vadd.f32 0.0, %v2127
        %v2129 = vpop.f32.mrf.mxu0
        %2130 = vmatprep.mubr.bf16.mxu0 0
        %2131 = vmatmul.mubr.bf16.gmra.mxu0 %v1981
        %v2132 = vpop.f32.mrf.mxu0
        %v2133 = vadd.f32 0.0, %v2132
        %v2134 = vpop.f32.mrf.mxu0
        %v2135 = vpop.f32.mrf.mxu0
        %v2136 = vadd.f32 0.0, %v2135
        %v2137 = vpop.f32.mrf.mxu0
        %2138 = vmatprep.mubr.bf16.mxu0 0
        %2139 = vmatmul.mubr.bf16.gmra.mxu0 %v1984
        %v2140 = vpop.f32.mrf.mxu0
        %v2141 = vadd.f32 0.0, %v2140
        %v2142 = vpop.f32.mrf.mxu0
        %v2143 = vpop.f32.mrf.mxu0
        %v2144 = vadd.f32 0.0, %v2143
        %v2145 = vpop.f32.mrf.mxu0
        %2146 = vdwg.mxu0
        %v2147 = vadd.f32 %v1825, %v2021
        %v2148 = vadd.f32 %v1826, %v2024
        %v2149 = vadd.f32 %v1827, %v2029
        %v2150 = vadd.f32 %v1828, %v2032
        %v2151 = vadd.f32 %v1829, %v2037
        %v2152 = vadd.f32 %v1830, %v2040
        %v2153 = vadd.f32 %v1831, %v2045
        %v2154 = vadd.f32 %v1832, %v2048
        %v2155 = vadd.f32 %v1833, %v2053
        %v2156 = vadd.f32 %v1834, %v2056
        %v2157 = vadd.f32 %v1835, %v2061
        %v2158 = vadd.f32 %v1836, %v2064
        %v2159 = vadd.f32 %v1837, %v2069
        %v2160 = vadd.f32 %v1838, %v2072
        %v2161 = vadd.f32 %v1839, %v2077
        %v2162 = vadd.f32 %v1840, %v2080
        %v2163 = vadd.f32 %v1841, %v2085
        %v2164 = vadd.f32 %v1842, %v2088
        %v2165 = vadd.f32 %v1843, %v2093
        %v2166 = vadd.f32 %v1844, %v2096
        %v2167 = vadd.f32 %v1845, %v2101
        %v2168 = vadd.f32 %v1846, %v2104
        %v2169 = vadd.f32 %v1847, %v2109
        %v2170 = vadd.f32 %v1848, %v2112
        %v2171 = vadd.f32 %v1849, %v2117
        %v2172 = vadd.f32 %v1850, %v2120
        %v2173 = vadd.f32 %v1851, %v2125
        %v2174 = vadd.f32 %v1852, %v2128
        %v2175 = vadd.f32 %v1853, %v2133
        %v2176 = vadd.f32 %v1854, %v2136
        %v2177 = vadd.f32 %v1855, %v2141
        %v2178 = vadd.f32 %v1856, %v2144
        %v2179 = vld [vmem:[%s923 + $0x1] sm:$0xff]
        %v2180 = vld [vmem:[%s923 + $0x9] sm:$0xff]
        %v2181 = vld [vmem:[%s923 + $0x19] sm:$0xff]
        %v2182 = vld [vmem:[%s923 + $0x21] sm:$0xff]
        %v2183 = vld [vmem:[%s923 + $0x31] sm:$0xff]
        %v2184 = vld [vmem:[%s923 + $0x39] sm:$0xff]
        %v2185 = vld [vmem:[%s923 + $0x49] sm:$0xff]
        %v2186 = vld [vmem:[%s923 + $0x51] sm:$0xff]
        %v2187 = vld [vmem:[%s923 + $0x61] sm:$0xff]
        %v2188 = vld [vmem:[%s923 + $0x69] sm:$0xff]
        %v2189 = vld [vmem:[%s923 + $0x79] sm:$0xff]
        %v2190 = vld [vmem:[%s923 + $0x81] sm:$0xff]
        %v2191 = vld [vmem:[%s923 + $0x91] sm:$0xff]
        %v2192 = vld [vmem:[%s923 + $0x99] sm:$0xff]
        %v2193 = vld [vmem:[%s923 + $0xa9] sm:$0xff]
        %v2194 = vld [vmem:[%s923 + $0xb1] sm:$0xff]
        %v2195 = vld [vmem:[%s923 + $0xc1] sm:$0xff]
        %v2196 = vld [vmem:[%s923 + $0xc9] sm:$0xff]
        %v2197 = vld [vmem:[%s923 + $0xd9] sm:$0xff]
        %v2198 = vld [vmem:[%s923 + $0xe1] sm:$0xff]
        %v2199 = vld [vmem:[%s923 + $0xf1] sm:$0xff]
        %v2200 = vld [vmem:[%s923 + $0xf9] sm:$0xff]
        %v2201 = vld [vmem:[%s923 + $0x109] sm:$0xff]
        %v2202 = vld [vmem:[%s923 + $0x111] sm:$0xff]
        %v2203 = vld [vmem:[%s923 + $0x121] sm:$0xff]
        %v2204 = vld [vmem:[%s923 + $0x129] sm:$0xff]
        %v2205 = vld [vmem:[%s923 + $0x139] sm:$0xff]
        %v2206 = vld [vmem:[%s923 + $0x141] sm:$0xff]
        %v2207 = vld [vmem:[%s923 + $0x151] sm:$0xff]
        %v2208 = vld [vmem:[%s923 + $0x159] sm:$0xff]
        %v2209 = vld [vmem:[%s923 + $0x169] sm:$0xff]
        %v2210 = vld [vmem:[%s923 + $0x171] sm:$0xff]
        %v2211 = vpack.c.bf16 %v2180, %v2179
        %v2212 = vpack.c.bf16 %v2182, %v2181
        %v2213 = vpack.c.bf16 %v2184, %v2183
        %v2214 = vpack.c.bf16 %v2186, %v2185
        %v2215 = vpack.c.bf16 %v2188, %v2187
        %v2216 = vpack.c.bf16 %v2190, %v2189
        %v2217 = vpack.c.bf16 %v2192, %v2191
        %v2218 = vpack.c.bf16 %v2194, %v2193
        %v2219 = vpack.c.bf16 %v2196, %v2195
        %v2220 = vpack.c.bf16 %v2198, %v2197
        %v2221 = vpack.c.bf16 %v2200, %v2199
        %v2222 = vpack.c.bf16 %v2202, %v2201
        %v2223 = vpack.c.bf16 %v2204, %v2203
        %v2224 = vpack.c.bf16 %v2206, %v2205
        %v2225 = vpack.c.bf16 %v2208, %v2207
        %v2226 = vpack.c.bf16 %v2210, %v2209
        %s2227 = scalar_lea.vmem [#allocation6], 128
        %v2228 = vld [vmem:[%s2227] sm:$0xf]
        %v2229 = vld [vmem:[%s2227 + $0x4] sm:$0xf]
        %v2230 = vld [vmem:[%s2227 + $0x8] sm:$0xf]
        %v2231 = vld [vmem:[%s2227 + $0xc] sm:$0xf]
        %v2232 = vld [vmem:[%s2227 + $0x10] sm:$0xf]
        %v2233 = vld [vmem:[%s2227 + $0x14] sm:$0xf]
        %v2234 = vld [vmem:[%s2227 + $0x18] sm:$0xf]
        %v2235 = vld [vmem:[%s2227 + $0x1c] sm:$0xf]
        %v2244 = vunpack.c.l.b16 %v2228
        %v2245 = vunpack.c.l.b16 %v2229
        %v2246 = vunpack.c.l.b16 %v2230
        %v2247 = vunpack.c.l.b16 %v2231
        %v2248 = vunpack.c.l.b16 %v2232
        %v2249 = vunpack.c.l.b16 %v2233
        %v2250 = vunpack.c.l.b16 %v2234
        %v2251 = vunpack.c.l.b16 %v2235
        %v2252 = vpack.c.b16 %v2245, %v2244
        %v2253 = vpack.c.b16 %v2247, %v2246
        %v2254 = vpack.c.b16 %v2249, %v2248
        %v2255 = vpack.c.b16 %v2251, %v2250
        %v2261 = vsel %vm877, %v2211, 0
        %v2264 = vsel %vm877, %v2212, 0
        %v2267 = vsel %vm877, %v2213, 0
        %v2270 = vsel %vm877, %v2214, 0
        %v2273 = vsel %vm877, %v2215, 0
        %v2276 = vsel %vm877, %v2216, 0
        %v2279 = vsel %vm877, %v2217, 0
        %v2282 = vsel %vm877, %v2218, 0
        %v2285 = vsel %vm877, %v2219, 0
        %v2288 = vsel %vm877, %v2220, 0
        %v2291 = vsel %vm877, %v2221, 0
        %v2294 = vsel %vm877, %v2222, 0
        %v2297 = vsel %vm877, %v2223, 0
        %v2300 = vsel %vm877, %v2224, 0
        %v2303 = vsel %vm877, %v2225, 0
        %v2306 = vsel %vm877, %v2226, 0
        %2308 = vmatprep.subr.bf16.mxu0 0
        %2309 = vmatpush1.bf16.msra.mxu0 0
        %2310 = vmatprep.subr.bf16.mxu0 0
        %2311 = vmatpush1.bf16.msra.mxu0 0
        %2312 = vmatprep.subr.bf16.mxu0 0
        %2313 = vmatpush1.bf16.msra.mxu0 0
        %2314 = vmatprep.subr.bf16.mxu0 0
        %2315 = vmatpush1.bf16.msra.mxu0 0
        %2316 = vmatprep.subr.bf16.mxu0 0
        %2317 = vmatpush1.bf16.msra.mxu0 %v2255
        %2318 = vmatprep.subr.bf16.mxu0 0
        %2319 = vmatpush1.bf16.msra.mxu0 %v2254
        %2320 = vmatprep.subr.bf16.mxu0 0
        %2321 = vmatpush1.bf16.msra.mxu0 %v2253
        %2322 = vmatprep.subr.bf16.mxu0 0
        %2323 = vmatpush1.bf16.msra.mxu0 %v2252
        %2324 = vmatprep.subr.bf16.mxu0 0
        %2325 = vmatpush2.bf16.msra.mxu0 0
        %2326 = vmatprep.subr.bf16.mxu0 0
        %2327 = vmatpush2.bf16.msra.mxu0 0
        %2328 = vmatprep.subr.bf16.mxu0 0
        %2329 = vmatpush2.bf16.msra.mxu0 0
        %2330 = vmatprep.subr.bf16.mxu0 0
        %2331 = vmatpush2.bf16.msra.mxu0 0
        %2332 = vmatprep.subr.bf16.mxu0 0
        %2333 = vmatpush2.bf16.msra.mxu0 0
        %2334 = vmatprep.subr.bf16.mxu0 0
        %2335 = vmatpush2.bf16.msra.mxu0 0
        %2336 = vmatprep.subr.bf16.mxu0 0
        %2337 = vmatpush2.bf16.msra.mxu0 0
        %2338 = vmatprep.subr.bf16.mxu0 0
        %2339 = vmatpush2.bf16.msra.mxu0 0
        %2340 = vmatprep.mubr.bf16.mxu0 0
        %2341 = vmatmul.mubr.bf16.gmra.mxu0 %v2261
        %v2342 = vpop.f32.mrf.mxu0
        %v2343 = vadd.f32 0.0, %v2342
        %v2344 = vpop.f32.mrf.mxu0
        %v2345 = vpop.f32.mrf.mxu0
        %v2346 = vadd.f32 0.0, %v2345
        %v2347 = vpop.f32.mrf.mxu0
        %2348 = vmatprep.mubr.bf16.mxu0 0
        %2349 = vmatmul.mubr.bf16.gmra.mxu0 %v2264
        %v2350 = vpop.f32.mrf.mxu0
        %v2351 = vadd.f32 0.0, %v2350
        %v2352 = vpop.f32.mrf.mxu0
        %v2353 = vpop.f32.mrf.mxu0
        %v2354 = vadd.f32 0.0, %v2353
        %v2355 = vpop.f32.mrf.mxu0
        %2356 = vmatprep.mubr.bf16.mxu0 0
        %2357 = vmatmul.mubr.bf16.gmra.mxu0 %v2267
        %v2358 = vpop.f32.mrf.mxu0
        %v2359 = vadd.f32 0.0, %v2358
        %v2360 = vpop.f32.mrf.mxu0
        %v2361 = vpop.f32.mrf.mxu0
        %v2362 = vadd.f32 0.0, %v2361
        %v2363 = vpop.f32.mrf.mxu0
        %2364 = vmatprep.mubr.bf16.mxu0 0
        %2365 = vmatmul.mubr.bf16.gmra.mxu0 %v2270
        %v2366 = vpop.f32.mrf.mxu0
        %v2367 = vadd.f32 0.0, %v2366
        %v2368 = vpop.f32.mrf.mxu0
        %v2369 = vpop.f32.mrf.mxu0
        %v2370 = vadd.f32 0.0, %v2369
        %v2371 = vpop.f32.mrf.mxu0
        %2372 = vmatprep.mubr.bf16.mxu0 0
        %2373 = vmatmul.mubr.bf16.gmra.mxu0 %v2273
        %v2374 = vpop.f32.mrf.mxu0
        %v2375 = vadd.f32 0.0, %v2374
        %v2376 = vpop.f32.mrf.mxu0
        %v2377 = vpop.f32.mrf.mxu0
        %v2378 = vadd.f32 0.0, %v2377
        %v2379 = vpop.f32.mrf.mxu0
        %2380 = vmatprep.mubr.bf16.mxu0 0
        %2381 = vmatmul.mubr.bf16.gmra.mxu0 %v2276
        %v2382 = vpop.f32.mrf.mxu0
        %v2383 = vadd.f32 0.0, %v2382
        %v2384 = vpop.f32.mrf.mxu0
        %v2385 = vpop.f32.mrf.mxu0
        %v2386 = vadd.f32 0.0, %v2385
        %v2387 = vpop.f32.mrf.mxu0
        %2388 = vmatprep.mubr.bf16.mxu0 0
        %2389 = vmatmul.mubr.bf16.gmra.mxu0 %v2279
        %v2390 = vpop.f32.mrf.mxu0
        %v2391 = vadd.f32 0.0, %v2390
        %v2392 = vpop.f32.mrf.mxu0
        %v2393 = vpop.f32.mrf.mxu0
        %v2394 = vadd.f32 0.0, %v2393
        %v2395 = vpop.f32.mrf.mxu0
        %2396 = vmatprep.mubr.bf16.mxu0 0
        %2397 = vmatmul.mubr.bf16.gmra.mxu0 %v2282
        %v2398 = vpop.f32.mrf.mxu0
        %v2399 = vadd.f32 0.0, %v2398
        %v2400 = vpop.f32.mrf.mxu0
        %v2401 = vpop.f32.mrf.mxu0
        %v2402 = vadd.f32 0.0, %v2401
        %v2403 = vpop.f32.mrf.mxu0
        %2404 = vmatprep.mubr.bf16.mxu0 0
        %2405 = vmatmul.mubr.bf16.gmra.mxu0 %v2285
        %v2406 = vpop.f32.mrf.mxu0
        %v2407 = vadd.f32 0.0, %v2406
        %v2408 = vpop.f32.mrf.mxu0
        %v2409 = vpop.f32.mrf.mxu0
        %v2410 = vadd.f32 0.0, %v2409
        %v2411 = vpop.f32.mrf.mxu0
        %2412 = vmatprep.mubr.bf16.mxu0 0
        %2413 = vmatmul.mubr.bf16.gmra.mxu0 %v2288
        %v2414 = vpop.f32.mrf.mxu0
        %v2415 = vadd.f32 0.0, %v2414
        %v2416 = vpop.f32.mrf.mxu0
        %v2417 = vpop.f32.mrf.mxu0
        %v2418 = vadd.f32 0.0, %v2417
        %v2419 = vpop.f32.mrf.mxu0
        %2420 = vmatprep.mubr.bf16.mxu0 0
        %2421 = vmatmul.mubr.bf16.gmra.mxu0 %v2291
        %v2422 = vpop.f32.mrf.mxu0
        %v2423 = vadd.f32 0.0, %v2422
        %v2424 = vpop.f32.mrf.mxu0
        %v2425 = vpop.f32.mrf.mxu0
        %v2426 = vadd.f32 0.0, %v2425
        %v2427 = vpop.f32.mrf.mxu0
        %2428 = vmatprep.mubr.bf16.mxu0 0
        %2429 = vmatmul.mubr.bf16.gmra.mxu0 %v2294
        %v2430 = vpop.f32.mrf.mxu0
        %v2431 = vadd.f32 0.0, %v2430
        %v2432 = vpop.f32.mrf.mxu0
        %v2433 = vpop.f32.mrf.mxu0
        %v2434 = vadd.f32 0.0, %v2433
        %v2435 = vpop.f32.mrf.mxu0
        %2436 = vmatprep.mubr.bf16.mxu0 0
        %2437 = vmatmul.mubr.bf16.gmra.mxu0 %v2297
        %v2438 = vpop.f32.mrf.mxu0
        %v2439 = vadd.f32 0.0, %v2438
        %v2440 = vpop.f32.mrf.mxu0
        %v2441 = vpop.f32.mrf.mxu0
        %v2442 = vadd.f32 0.0, %v2441
        %v2443 = vpop.f32.mrf.mxu0
        %2444 = vmatprep.mubr.bf16.mxu0 0
        %2445 = vmatmul.mubr.bf16.gmra.mxu0 %v2300
        %v2446 = vpop.f32.mrf.mxu0
        %v2447 = vadd.f32 0.0, %v2446
        %v2448 = vpop.f32.mrf.mxu0
        %v2449 = vpop.f32.mrf.mxu0
        %v2450 = vadd.f32 0.0, %v2449
        %v2451 = vpop.f32.mrf.mxu0
        %2452 = vmatprep.mubr.bf16.mxu0 0
        %2453 = vmatmul.mubr.bf16.gmra.mxu0 %v2303
        %v2454 = vpop.f32.mrf.mxu0
        %v2455 = vadd.f32 0.0, %v2454
        %v2456 = vpop.f32.mrf.mxu0
        %v2457 = vpop.f32.mrf.mxu0
        %v2458 = vadd.f32 0.0, %v2457
        %v2459 = vpop.f32.mrf.mxu0
        %2460 = vmatprep.mubr.bf16.mxu0 0
        %2461 = vmatmul.mubr.bf16.gmra.mxu0 %v2306
        %v2462 = vpop.f32.mrf.mxu0
        %v2463 = vadd.f32 0.0, %v2462
        %v2464 = vpop.f32.mrf.mxu0
        %v2465 = vpop.f32.mrf.mxu0
        %v2466 = vadd.f32 0.0, %v2465
        %v2467 = vpop.f32.mrf.mxu0
        %2468 = vdwg.mxu0
        %v2469 = vadd.f32 %v2147, %v2343
        %v2470 = vadd.f32 %v2148, %v2346
        %v2471 = vadd.f32 %v2149, %v2351
        %v2472 = vadd.f32 %v2150, %v2354
        %v2473 = vadd.f32 %v2151, %v2359
        %v2474 = vadd.f32 %v2152, %v2362
        %v2475 = vadd.f32 %v2153, %v2367
        %v2476 = vadd.f32 %v2154, %v2370
        %v2477 = vadd.f32 %v2155, %v2375
        %v2478 = vadd.f32 %v2156, %v2378
        %v2479 = vadd.f32 %v2157, %v2383
        %v2480 = vadd.f32 %v2158, %v2386
        %v2481 = vadd.f32 %v2159, %v2391
        %v2482 = vadd.f32 %v2160, %v2394
        %v2483 = vadd.f32 %v2161, %v2399
        %v2484 = vadd.f32 %v2162, %v2402
        %v2485 = vadd.f32 %v2163, %v2407
        %v2486 = vadd.f32 %v2164, %v2410
        %v2487 = vadd.f32 %v2165, %v2415
        %v2488 = vadd.f32 %v2166, %v2418
        %v2489 = vadd.f32 %v2167, %v2423
        %v2490 = vadd.f32 %v2168, %v2426
        %v2491 = vadd.f32 %v2169, %v2431
        %v2492 = vadd.f32 %v2170, %v2434
        %v2493 = vadd.f32 %v2171, %v2439
        %v2494 = vadd.f32 %v2172, %v2442
        %v2495 = vadd.f32 %v2173, %v2447
        %v2496 = vadd.f32 %v2174, %v2450
        %v2497 = vadd.f32 %v2175, %v2455
        %v2498 = vadd.f32 %v2176, %v2458
        %v2499 = vadd.f32 %v2177, %v2463
        %v2500 = vadd.f32 %v2178, %v2466
        %v2501 = vld [vmem:[%s923 + $0x2] sm:$0xff]
        %v2502 = vld [vmem:[%s923 + $0xa] sm:$0xff]
        %v2503 = vld [vmem:[%s923 + $0x1a] sm:$0xff]
        %v2504 = vld [vmem:[%s923 + $0x22] sm:$0xff]
        %v2505 = vld [vmem:[%s923 + $0x32] sm:$0xff]
        %v2506 = vld [vmem:[%s923 + $0x3a] sm:$0xff]
        %v2507 = vld [vmem:[%s923 + $0x4a] sm:$0xff]
        %v2508 = vld [vmem:[%s923 + $0x52] sm:$0xff]
        %v2509 = vld [vmem:[%s923 + $0x62] sm:$0xff]
        %v2510 = vld [vmem:[%s923 + $0x6a] sm:$0xff]
        %v2511 = vld [vmem:[%s923 + $0x7a] sm:$0xff]
        %v2512 = vld [vmem:[%s923 + $0x82] sm:$0xff]
        %v2513 = vld [vmem:[%s923 + $0x92] sm:$0xff]
        %v2514 = vld [vmem:[%s923 + $0x9a] sm:$0xff]
        %v2515 = vld [vmem:[%s923 + $0xaa] sm:$0xff]
        %v2516 = vld [vmem:[%s923 + $0xb2] sm:$0xff]
        %v2517 = vld [vmem:[%s923 + $0xc2] sm:$0xff]
        %v2518 = vld [vmem:[%s923 + $0xca] sm:$0xff]
        %v2519 = vld [vmem:[%s923 + $0xda] sm:$0xff]
        %v2520 = vld [vmem:[%s923 + $0xe2] sm:$0xff]
        %v2521 = vld [vmem:[%s923 + $0xf2] sm:$0xff]
        %v2522 = vld [vmem:[%s923 + $0xfa] sm:$0xff]
        %v2523 = vld [vmem:[%s923 + $0x10a] sm:$0xff]
        %v2524 = vld [vmem:[%s923 + $0x112] sm:$0xff]
        %v2525 = vld [vmem:[%s923 + $0x122] sm:$0xff]
        %v2526 = vld [vmem:[%s923 + $0x12a] sm:$0xff]
        %v2527 = vld [vmem:[%s923 + $0x13a] sm:$0xff]
        %v2528 = vld [vmem:[%s923 + $0x142] sm:$0xff]
        %v2529 = vld [vmem:[%s923 + $0x152] sm:$0xff]
        %v2530 = vld [vmem:[%s923 + $0x15a] sm:$0xff]
        %v2531 = vld [vmem:[%s923 + $0x16a] sm:$0xff]
        %v2532 = vld [vmem:[%s923 + $0x172] sm:$0xff]
        %v2533 = vpack.c.bf16 %v2502, %v2501
        %v2534 = vpack.c.bf16 %v2504, %v2503
        %v2535 = vpack.c.bf16 %v2506, %v2505
        %v2536 = vpack.c.bf16 %v2508, %v2507
        %v2537 = vpack.c.bf16 %v2510, %v2509
        %v2538 = vpack.c.bf16 %v2512, %v2511
        %v2539 = vpack.c.bf16 %v2514, %v2513
        %v2540 = vpack.c.bf16 %v2516, %v2515
        %v2541 = vpack.c.bf16 %v2518, %v2517
        %v2542 = vpack.c.bf16 %v2520, %v2519
        %v2543 = vpack.c.bf16 %v2522, %v2521
        %v2544 = vpack.c.bf16 %v2524, %v2523
        %v2545 = vpack.c.bf16 %v2526, %v2525
        %v2546 = vpack.c.bf16 %v2528, %v2527
        %v2547 = vpack.c.bf16 %v2530, %v2529
        %v2548 = vpack.c.bf16 %v2532, %v2531
        %s2549 = scalar_lea.vmem [#allocation6], 160
        %v2550 = vld [vmem:[%s2549] sm:$0xf]
        %v2551 = vld [vmem:[%s2549 + $0x4] sm:$0xf]
        %v2552 = vld [vmem:[%s2549 + $0x8] sm:$0xf]
        %v2553 = vld [vmem:[%s2549 + $0xc] sm:$0xf]
        %v2554 = vld [vmem:[%s2549 + $0x10] sm:$0xf]
        %v2555 = vld [vmem:[%s2549 + $0x14] sm:$0xf]
        %v2556 = vld [vmem:[%s2549 + $0x18] sm:$0xf]
        %v2557 = vld [vmem:[%s2549 + $0x1c] sm:$0xf]
        %v2566 = vunpack.c.l.b16 %v2550
        %v2567 = vunpack.c.l.b16 %v2551
        %v2568 = vunpack.c.l.b16 %v2552
        %v2569 = vunpack.c.l.b16 %v2553
        %v2570 = vunpack.c.l.b16 %v2554
        %v2571 = vunpack.c.l.b16 %v2555
        %v2572 = vunpack.c.l.b16 %v2556
        %v2573 = vunpack.c.l.b16 %v2557
        %v2574 = vpack.c.b16 %v2567, %v2566
        %v2575 = vpack.c.b16 %v2569, %v2568
        %v2576 = vpack.c.b16 %v2571, %v2570
        %v2577 = vpack.c.b16 %v2573, %v2572
        %v2583 = vsel %vm877, %v2533, 0
        %v2586 = vsel %vm877, %v2534, 0
        %v2589 = vsel %vm877, %v2535, 0
        %v2592 = vsel %vm877, %v2536, 0
        %v2595 = vsel %vm877, %v2537, 0
        %v2598 = vsel %vm877, %v2538, 0
        %v2601 = vsel %vm877, %v2539, 0
        %v2604 = vsel %vm877, %v2540, 0
        %v2607 = vsel %vm877, %v2541, 0
        %v2610 = vsel %vm877, %v2542, 0
        %v2613 = vsel %vm877, %v2543, 0
        %v2616 = vsel %vm877, %v2544, 0
        %v2619 = vsel %vm877, %v2545, 0
        %v2622 = vsel %vm877, %v2546, 0
        %v2625 = vsel %vm877, %v2547, 0
        %v2628 = vsel %vm877, %v2548, 0
        %2630 = vmatprep.subr.bf16.mxu0 0
        %2631 = vmatpush1.bf16.msra.mxu0 0
        %2632 = vmatprep.subr.bf16.mxu0 0
        %2633 = vmatpush1.bf16.msra.mxu0 0
        %2634 = vmatprep.subr.bf16.mxu0 0
        %2635 = vmatpush1.bf16.msra.mxu0 0
        %2636 = vmatprep.subr.bf16.mxu0 0
        %2637 = vmatpush1.bf16.msra.mxu0 0
        %2638 = vmatprep.subr.bf16.mxu0 0
        %2639 = vmatpush1.bf16.msra.mxu0 %v2577
        %2640 = vmatprep.subr.bf16.mxu0 0
        %2641 = vmatpush1.bf16.msra.mxu0 %v2576
        %2642 = vmatprep.subr.bf16.mxu0 0
        %2643 = vmatpush1.bf16.msra.mxu0 %v2575
        %2644 = vmatprep.subr.bf16.mxu0 0
        %2645 = vmatpush1.bf16.msra.mxu0 %v2574
        %2646 = vmatprep.subr.bf16.mxu0 0
        %2647 = vmatpush2.bf16.msra.mxu0 0
        %2648 = vmatprep.subr.bf16.mxu0 0
        %2649 = vmatpush2.bf16.msra.mxu0 0
        %2650 = vmatprep.subr.bf16.mxu0 0
        %2651 = vmatpush2.bf16.msra.mxu0 0
        %2652 = vmatprep.subr.bf16.mxu0 0
        %2653 = vmatpush2.bf16.msra.mxu0 0
        %2654 = vmatprep.subr.bf16.mxu0 0
        %2655 = vmatpush2.bf16.msra.mxu0 0
        %2656 = vmatprep.subr.bf16.mxu0 0
        %2657 = vmatpush2.bf16.msra.mxu0 0
        %2658 = vmatprep.subr.bf16.mxu0 0
        %2659 = vmatpush2.bf16.msra.mxu0 0
        %2660 = vmatprep.subr.bf16.mxu0 0
        %2661 = vmatpush2.bf16.msra.mxu0 0
        %2662 = vmatprep.mubr.bf16.mxu0 0
        %2663 = vmatmul.mubr.bf16.gmra.mxu0 %v2583
        %v2664 = vpop.f32.mrf.mxu0
        %v2665 = vadd.f32 0.0, %v2664
        %v2666 = vpop.f32.mrf.mxu0
        %v2667 = vpop.f32.mrf.mxu0
        %v2668 = vadd.f32 0.0, %v2667
        %v2669 = vpop.f32.mrf.mxu0
        %2670 = vmatprep.mubr.bf16.mxu0 0
        %2671 = vmatmul.mubr.bf16.gmra.mxu0 %v2586
        %v2672 = vpop.f32.mrf.mxu0
        %v2673 = vadd.f32 0.0, %v2672
        %v2674 = vpop.f32.mrf.mxu0
        %v2675 = vpop.f32.mrf.mxu0
        %v2676 = vadd.f32 0.0, %v2675
        %v2677 = vpop.f32.mrf.mxu0
        %2678 = vmatprep.mubr.bf16.mxu0 0
        %2679 = vmatmul.mubr.bf16.gmra.mxu0 %v2589
        %v2680 = vpop.f32.mrf.mxu0
        %v2681 = vadd.f32 0.0, %v2680
        %v2682 = vpop.f32.mrf.mxu0
        %v2683 = vpop.f32.mrf.mxu0
        %v2684 = vadd.f32 0.0, %v2683
        %v2685 = vpop.f32.mrf.mxu0
        %2686 = vmatprep.mubr.bf16.mxu0 0
        %2687 = vmatmul.mubr.bf16.gmra.mxu0 %v2592
        %v2688 = vpop.f32.mrf.mxu0
        %v2689 = vadd.f32 0.0, %v2688
        %v2690 = vpop.f32.mrf.mxu0
        %v2691 = vpop.f32.mrf.mxu0
        %v2692 = vadd.f32 0.0, %v2691
        %v2693 = vpop.f32.mrf.mxu0
        %2694 = vmatprep.mubr.bf16.mxu0 0
        %2695 = vmatmul.mubr.bf16.gmra.mxu0 %v2595
        %v2696 = vpop.f32.mrf.mxu0
        %v2697 = vadd.f32 0.0, %v2696
        %v2698 = vpop.f32.mrf.mxu0
        %v2699 = vpop.f32.mrf.mxu0
        %v2700 = vadd.f32 0.0, %v2699
        %v2701 = vpop.f32.mrf.mxu0
        %2702 = vmatprep.mubr.bf16.mxu0 0
        %2703 = vmatmul.mubr.bf16.gmra.mxu0 %v2598
        %v2704 = vpop.f32.mrf.mxu0
        %v2705 = vadd.f32 0.0, %v2704
        %v2706 = vpop.f32.mrf.mxu0
        %v2707 = vpop.f32.mrf.mxu0
        %v2708 = vadd.f32 0.0, %v2707
        %v2709 = vpop.f32.mrf.mxu0
        %2710 = vmatprep.mubr.bf16.mxu0 0
        %2711 = vmatmul.mubr.bf16.gmra.mxu0 %v2601
        %v2712 = vpop.f32.mrf.mxu0
        %v2713 = vadd.f32 0.0, %v2712
        %v2714 = vpop.f32.mrf.mxu0
        %v2715 = vpop.f32.mrf.mxu0
        %v2716 = vadd.f32 0.0, %v2715
        %v2717 = vpop.f32.mrf.mxu0
        %2718 = vmatprep.mubr.bf16.mxu0 0
        %2719 = vmatmul.mubr.bf16.gmra.mxu0 %v2604
        %v2720 = vpop.f32.mrf.mxu0
        %v2721 = vadd.f32 0.0, %v2720
        %v2722 = vpop.f32.mrf.mxu0
        %v2723 = vpop.f32.mrf.mxu0
        %v2724 = vadd.f32 0.0, %v2723
        %v2725 = vpop.f32.mrf.mxu0
        %2726 = vmatprep.mubr.bf16.mxu0 0
        %2727 = vmatmul.mubr.bf16.gmra.mxu0 %v2607
        %v2728 = vpop.f32.mrf.mxu0
        %v2729 = vadd.f32 0.0, %v2728
        %v2730 = vpop.f32.mrf.mxu0
        %v2731 = vpop.f32.mrf.mxu0
        %v2732 = vadd.f32 0.0, %v2731
        %v2733 = vpop.f32.mrf.mxu0
        %2734 = vmatprep.mubr.bf16.mxu0 0
        %2735 = vmatmul.mubr.bf16.gmra.mxu0 %v2610
        %v2736 = vpop.f32.mrf.mxu0
        %v2737 = vadd.f32 0.0, %v2736
        %v2738 = vpop.f32.mrf.mxu0
        %v2739 = vpop.f32.mrf.mxu0
        %v2740 = vadd.f32 0.0, %v2739
        %v2741 = vpop.f32.mrf.mxu0
        %2742 = vmatprep.mubr.bf16.mxu0 0
        %2743 = vmatmul.mubr.bf16.gmra.mxu0 %v2613
        %v2744 = vpop.f32.mrf.mxu0
        %v2745 = vadd.f32 0.0, %v2744
        %v2746 = vpop.f32.mrf.mxu0
        %v2747 = vpop.f32.mrf.mxu0
        %v2748 = vadd.f32 0.0, %v2747
        %v2749 = vpop.f32.mrf.mxu0
        %2750 = vmatprep.mubr.bf16.mxu0 0
        %2751 = vmatmul.mubr.bf16.gmra.mxu0 %v2616
        %v2752 = vpop.f32.mrf.mxu0
        %v2753 = vadd.f32 0.0, %v2752
        %v2754 = vpop.f32.mrf.mxu0
        %v2755 = vpop.f32.mrf.mxu0
        %v2756 = vadd.f32 0.0, %v2755
        %v2757 = vpop.f32.mrf.mxu0
        %2758 = vmatprep.mubr.bf16.mxu0 0
        %2759 = vmatmul.mubr.bf16.gmra.mxu0 %v2619
        %v2760 = vpop.f32.mrf.mxu0
        %v2761 = vadd.f32 0.0, %v2760
        %v2762 = vpop.f32.mrf.mxu0
        %v2763 = vpop.f32.mrf.mxu0
        %v2764 = vadd.f32 0.0, %v2763
        %v2765 = vpop.f32.mrf.mxu0
        %2766 = vmatprep.mubr.bf16.mxu0 0
        %2767 = vmatmul.mubr.bf16.gmra.mxu0 %v2622
        %v2768 = vpop.f32.mrf.mxu0
        %v2769 = vadd.f32 0.0, %v2768
        %v2770 = vpop.f32.mrf.mxu0
        %v2771 = vpop.f32.mrf.mxu0
        %v2772 = vadd.f32 0.0, %v2771
        %v2773 = vpop.f32.mrf.mxu0
        %2774 = vmatprep.mubr.bf16.mxu0 0
        %2775 = vmatmul.mubr.bf16.gmra.mxu0 %v2625
        %v2776 = vpop.f32.mrf.mxu0
        %v2777 = vadd.f32 0.0, %v2776
        %v2778 = vpop.f32.mrf.mxu0
        %v2779 = vpop.f32.mrf.mxu0
        %v2780 = vadd.f32 0.0, %v2779
        %v2781 = vpop.f32.mrf.mxu0
        %2782 = vmatprep.mubr.bf16.mxu0 0
        %2783 = vmatmul.mubr.bf16.gmra.mxu0 %v2628
        %v2784 = vpop.f32.mrf.mxu0
        %v2785 = vadd.f32 0.0, %v2784
        %v2786 = vpop.f32.mrf.mxu0
        %v2787 = vpop.f32.mrf.mxu0
        %v2788 = vadd.f32 0.0, %v2787
        %v2789 = vpop.f32.mrf.mxu0
        %2790 = vdwg.mxu0
        %v2791 = vadd.f32 %v2469, %v2665
        %v2792 = vadd.f32 %v2470, %v2668
        %v2793 = vadd.f32 %v2471, %v2673
        %v2794 = vadd.f32 %v2472, %v2676
        %v2795 = vadd.f32 %v2473, %v2681
        %v2796 = vadd.f32 %v2474, %v2684
        %v2797 = vadd.f32 %v2475, %v2689
        %v2798 = vadd.f32 %v2476, %v2692
        %v2799 = vadd.f32 %v2477, %v2697
        %v2800 = vadd.f32 %v2478, %v2700
        %v2801 = vadd.f32 %v2479, %v2705
        %v2802 = vadd.f32 %v2480, %v2708
        %v2803 = vadd.f32 %v2481, %v2713
        %v2804 = vadd.f32 %v2482, %v2716
        %v2805 = vadd.f32 %v2483, %v2721
        %v2806 = vadd.f32 %v2484, %v2724
        %v2807 = vadd.f32 %v2485, %v2729
        %v2808 = vadd.f32 %v2486, %v2732
        %v2809 = vadd.f32 %v2487, %v2737
        %v2810 = vadd.f32 %v2488, %v2740
        %v2811 = vadd.f32 %v2489, %v2745
        %v2812 = vadd.f32 %v2490, %v2748
        %v2813 = vadd.f32 %v2491, %v2753
        %v2814 = vadd.f32 %v2492, %v2756
        %v2815 = vadd.f32 %v2493, %v2761
        %v2816 = vadd.f32 %v2494, %v2764
        %v2817 = vadd.f32 %v2495, %v2769
        %v2818 = vadd.f32 %v2496, %v2772
        %v2819 = vadd.f32 %v2497, %v2777
        %v2820 = vadd.f32 %v2498, %v2780
        %v2821 = vadd.f32 %v2499, %v2785
        %v2822 = vadd.f32 %v2500, %v2788
        %s2823 = scalar_lea.vmem [#allocation2], 48
        %v2824 = vld [vmem:[%s2823] sm:$0xff]
        %v2825 = vld [vmem:[%s2823 + $0x8] sm:$0xff]
        %v2826 = vld [vmem:[%s2823 + $0x18] sm:$0xff]
        %v2827 = vld [vmem:[%s2823 + $0x20] sm:$0xff]
        %v2828 = vld [vmem:[%s2823 + $0x30] sm:$0xff]
        %v2829 = vld [vmem:[%s2823 + $0x38] sm:$0xff]
        %v2830 = vld [vmem:[%s2823 + $0x48] sm:$0xff]
        %v2831 = vld [vmem:[%s2823 + $0x50] sm:$0xff]
        %v2832 = vld [vmem:[%s2823 + $0x60] sm:$0xff]
        %v2833 = vld [vmem:[%s2823 + $0x68] sm:$0xff]
        %v2834 = vld [vmem:[%s2823 + $0x78] sm:$0xff]
        %v2835 = vld [vmem:[%s2823 + $0x80] sm:$0xff]
        %v2836 = vld [vmem:[%s2823 + $0x90] sm:$0xff]
        %v2837 = vld [vmem:[%s2823 + $0x98] sm:$0xff]
        %v2838 = vld [vmem:[%s2823 + $0xa8] sm:$0xff]
        %v2839 = vld [vmem:[%s2823 + $0xb0] sm:$0xff]
        %v2840 = vld [vmem:[%s2823 + $0xc0] sm:$0xff]
        %v2841 = vld [vmem:[%s2823 + $0xc8] sm:$0xff]
        %v2842 = vld [vmem:[%s2823 + $0xd8] sm:$0xff]
        %v2843 = vld [vmem:[%s2823 + $0xe0] sm:$0xff]
        %v2844 = vld [vmem:[%s2823 + $0xf0] sm:$0xff]
        %v2845 = vld [vmem:[%s2823 + $0xf8] sm:$0xff]
        %v2846 = vld [vmem:[%s2823 + $0x108] sm:$0xff]
        %v2847 = vld [vmem:[%s2823 + $0x110] sm:$0xff]
        %v2848 = vld [vmem:[%s2823 + $0x120] sm:$0xff]
        %v2849 = vld [vmem:[%s2823 + $0x128] sm:$0xff]
        %v2850 = vld [vmem:[%s2823 + $0x138] sm:$0xff]
        %v2851 = vld [vmem:[%s2823 + $0x140] sm:$0xff]
        %v2852 = vld [vmem:[%s2823 + $0x150] sm:$0xff]
        %v2853 = vld [vmem:[%s2823 + $0x158] sm:$0xff]
        %v2854 = vld [vmem:[%s2823 + $0x168] sm:$0xff]
        %v2855 = vld [vmem:[%s2823 + $0x170] sm:$0xff]
        %v2856 = vpack.c.bf16 %v2825, %v2824
        %v2857 = vpack.c.bf16 %v2827, %v2826
        %v2858 = vpack.c.bf16 %v2829, %v2828
        %v2859 = vpack.c.bf16 %v2831, %v2830
        %v2860 = vpack.c.bf16 %v2833, %v2832
        %v2861 = vpack.c.bf16 %v2835, %v2834
        %v2862 = vpack.c.bf16 %v2837, %v2836
        %v2863 = vpack.c.bf16 %v2839, %v2838
        %v2864 = vpack.c.bf16 %v2841, %v2840
        %v2865 = vpack.c.bf16 %v2843, %v2842
        %v2866 = vpack.c.bf16 %v2845, %v2844
        %v2867 = vpack.c.bf16 %v2847, %v2846
        %v2868 = vpack.c.bf16 %v2849, %v2848
        %v2869 = vpack.c.bf16 %v2851, %v2850
        %v2870 = vpack.c.bf16 %v2853, %v2852
        %v2871 = vpack.c.bf16 %v2855, %v2854
        %s2872 = scalar_lea.vmem [#allocation6], 192
        %v2873 = vld [vmem:[%s2872] sm:$0xf]
        %v2874 = vld [vmem:[%s2872 + $0x4] sm:$0xf]
        %v2875 = vld [vmem:[%s2872 + $0x8] sm:$0xf]
        %v2876 = vld [vmem:[%s2872 + $0xc] sm:$0xf]
        %v2877 = vld [vmem:[%s2872 + $0x10] sm:$0xf]
        %v2878 = vld [vmem:[%s2872 + $0x14] sm:$0xf]
        %v2879 = vld [vmem:[%s2872 + $0x18] sm:$0xf]
        %v2880 = vld [vmem:[%s2872 + $0x1c] sm:$0xf]
        %v2889 = vunpack.c.l.b16 %v2873
        %v2890 = vunpack.c.l.b16 %v2874
        %v2891 = vunpack.c.l.b16 %v2875
        %v2892 = vunpack.c.l.b16 %v2876
        %v2893 = vunpack.c.l.b16 %v2877
        %v2894 = vunpack.c.l.b16 %v2878
        %v2895 = vunpack.c.l.b16 %v2879
        %v2896 = vunpack.c.l.b16 %v2880
        %v2897 = vpack.c.b16 %v2890, %v2889
        %v2898 = vpack.c.b16 %v2892, %v2891
        %v2899 = vpack.c.b16 %v2894, %v2893
        %v2900 = vpack.c.b16 %v2896, %v2895
        %v2906 = vsel %vm877, %v2856, 0
        %v2909 = vsel %vm877, %v2857, 0
        %v2912 = vsel %vm877, %v2858, 0
        %v2915 = vsel %vm877, %v2859, 0
        %v2918 = vsel %vm877, %v2860, 0
        %v2921 = vsel %vm877, %v2861, 0
        %v2924 = vsel %vm877, %v2862, 0
        %v2927 = vsel %vm877, %v2863, 0
        %v2930 = vsel %vm877, %v2864, 0
        %v2933 = vsel %vm877, %v2865, 0
        %v2936 = vsel %vm877, %v2866, 0
        %v2939 = vsel %vm877, %v2867, 0
        %v2942 = vsel %vm877, %v2868, 0
        %v2945 = vsel %vm877, %v2869, 0
        %v2948 = vsel %vm877, %v2870, 0
        %v2951 = vsel %vm877, %v2871, 0
        %2953 = vmatprep.subr.bf16.mxu0 0
        %2954 = vmatpush1.bf16.msra.mxu0 0
        %2955 = vmatprep.subr.bf16.mxu0 0
        %2956 = vmatpush1.bf16.msra.mxu0 0
        %2957 = vmatprep.subr.bf16.mxu0 0
        %2958 = vmatpush1.bf16.msra.mxu0 0
        %2959 = vmatprep.subr.bf16.mxu0 0
        %2960 = vmatpush1.bf16.msra.mxu0 0
        %2961 = vmatprep.subr.bf16.mxu0 0
        %2962 = vmatpush1.bf16.msra.mxu0 %v2900
        %2963 = vmatprep.subr.bf16.mxu0 0
        %2964 = vmatpush1.bf16.msra.mxu0 %v2899
        %2965 = vmatprep.subr.bf16.mxu0 0
        %2966 = vmatpush1.bf16.msra.mxu0 %v2898
        %2967 = vmatprep.subr.bf16.mxu0 0
        %2968 = vmatpush1.bf16.msra.mxu0 %v2897
        %2969 = vmatprep.subr.bf16.mxu0 0
        %2970 = vmatpush2.bf16.msra.mxu0 0
        %2971 = vmatprep.subr.bf16.mxu0 0
        %2972 = vmatpush2.bf16.msra.mxu0 0
        %2973 = vmatprep.subr.bf16.mxu0 0
        %2974 = vmatpush2.bf16.msra.mxu0 0
        %2975 = vmatprep.subr.bf16.mxu0 0
        %2976 = vmatpush2.bf16.msra.mxu0 0
        %2977 = vmatprep.subr.bf16.mxu0 0
        %2978 = vmatpush2.bf16.msra.mxu0 0
        %2979 = vmatprep.subr.bf16.mxu0 0
        %2980 = vmatpush2.bf16.msra.mxu0 0
        %2981 = vmatprep.subr.bf16.mxu0 0
        %2982 = vmatpush2.bf16.msra.mxu0 0
        %2983 = vmatprep.subr.bf16.mxu0 0
        %2984 = vmatpush2.bf16.msra.mxu0 0
        %2985 = vmatprep.mubr.bf16.mxu0 0
        %2986 = vmatmul.mubr.bf16.gmra.mxu0 %v2906
        %v2987 = vpop.f32.mrf.mxu0
        %v2988 = vadd.f32 0.0, %v2987
        %v2989 = vpop.f32.mrf.mxu0
        %v2990 = vpop.f32.mrf.mxu0
        %v2991 = vadd.f32 0.0, %v2990
        %v2992 = vpop.f32.mrf.mxu0
        %2993 = vmatprep.mubr.bf16.mxu0 0
        %2994 = vmatmul.mubr.bf16.gmra.mxu0 %v2909
        %v2995 = vpop.f32.mrf.mxu0
        %v2996 = vadd.f32 0.0, %v2995
        %v2997 = vpop.f32.mrf.mxu0
        %v2998 = vpop.f32.mrf.mxu0
        %v2999 = vadd.f32 0.0, %v2998
        %v3000 = vpop.f32.mrf.mxu0
        %3001 = vmatprep.mubr.bf16.mxu0 0
        %3002 = vmatmul.mubr.bf16.gmra.mxu0 %v2912
        %v3003 = vpop.f32.mrf.mxu0
        %v3004 = vadd.f32 0.0, %v3003
        %v3005 = vpop.f32.mrf.mxu0
        %v3006 = vpop.f32.mrf.mxu0
        %v3007 = vadd.f32 0.0, %v3006
        %v3008 = vpop.f32.mrf.mxu0
        %3009 = vmatprep.mubr.bf16.mxu0 0
        %3010 = vmatmul.mubr.bf16.gmra.mxu0 %v2915
        %v3011 = vpop.f32.mrf.mxu0
        %v3012 = vadd.f32 0.0, %v3011
        %v3013 = vpop.f32.mrf.mxu0
        %v3014 = vpop.f32.mrf.mxu0
        %v3015 = vadd.f32 0.0, %v3014
        %v3016 = vpop.f32.mrf.mxu0
        %3017 = vmatprep.mubr.bf16.mxu0 0
        %3018 = vmatmul.mubr.bf16.gmra.mxu0 %v2918
        %v3019 = vpop.f32.mrf.mxu0
        %v3020 = vadd.f32 0.0, %v3019
        %v3021 = vpop.f32.mrf.mxu0
        %v3022 = vpop.f32.mrf.mxu0
        %v3023 = vadd.f32 0.0, %v3022
        %v3024 = vpop.f32.mrf.mxu0
        %3025 = vmatprep.mubr.bf16.mxu0 0
        %3026 = vmatmul.mubr.bf16.gmra.mxu0 %v2921
        %v3027 = vpop.f32.mrf.mxu0
        %v3028 = vadd.f32 0.0, %v3027
        %v3029 = vpop.f32.mrf.mxu0
        %v3030 = vpop.f32.mrf.mxu0
        %v3031 = vadd.f32 0.0, %v3030
        %v3032 = vpop.f32.mrf.mxu0
        %3033 = vmatprep.mubr.bf16.mxu0 0
        %3034 = vmatmul.mubr.bf16.gmra.mxu0 %v2924
        %v3035 = vpop.f32.mrf.mxu0
        %v3036 = vadd.f32 0.0, %v3035
        %v3037 = vpop.f32.mrf.mxu0
        %v3038 = vpop.f32.mrf.mxu0
        %v3039 = vadd.f32 0.0, %v3038
        %v3040 = vpop.f32.mrf.mxu0
        %3041 = vmatprep.mubr.bf16.mxu0 0
        %3042 = vmatmul.mubr.bf16.gmra.mxu0 %v2927
        %v3043 = vpop.f32.mrf.mxu0
        %v3044 = vadd.f32 0.0, %v3043
        %v3045 = vpop.f32.mrf.mxu0
        %v3046 = vpop.f32.mrf.mxu0
        %v3047 = vadd.f32 0.0, %v3046
        %v3048 = vpop.f32.mrf.mxu0
        %3049 = vmatprep.mubr.bf16.mxu0 0
        %3050 = vmatmul.mubr.bf16.gmra.mxu0 %v2930
        %v3051 = vpop.f32.mrf.mxu0
        %v3052 = vadd.f32 0.0, %v3051
        %v3053 = vpop.f32.mrf.mxu0
        %v3054 = vpop.f32.mrf.mxu0
        %v3055 = vadd.f32 0.0, %v3054
        %v3056 = vpop.f32.mrf.mxu0
        %3057 = vmatprep.mubr.bf16.mxu0 0
        %3058 = vmatmul.mubr.bf16.gmra.mxu0 %v2933
        %v3059 = vpop.f32.mrf.mxu0
        %v3060 = vadd.f32 0.0, %v3059
        %v3061 = vpop.f32.mrf.mxu0
        %v3062 = vpop.f32.mrf.mxu0
        %v3063 = vadd.f32 0.0, %v3062
        %v3064 = vpop.f32.mrf.mxu0
        %3065 = vmatprep.mubr.bf16.mxu0 0
        %3066 = vmatmul.mubr.bf16.gmra.mxu0 %v2936
        %v3067 = vpop.f32.mrf.mxu0
        %v3068 = vadd.f32 0.0, %v3067
        %v3069 = vpop.f32.mrf.mxu0
        %v3070 = vpop.f32.mrf.mxu0
        %v3071 = vadd.f32 0.0, %v3070
        %v3072 = vpop.f32.mrf.mxu0
        %3073 = vmatprep.mubr.bf16.mxu0 0
        %3074 = vmatmul.mubr.bf16.gmra.mxu0 %v2939
        %v3075 = vpop.f32.mrf.mxu0
        %v3076 = vadd.f32 0.0, %v3075
        %v3077 = vpop.f32.mrf.mxu0
        %v3078 = vpop.f32.mrf.mxu0
        %v3079 = vadd.f32 0.0, %v3078
        %v3080 = vpop.f32.mrf.mxu0
        %3081 = vmatprep.mubr.bf16.mxu0 0
        %3082 = vmatmul.mubr.bf16.gmra.mxu0 %v2942
        %v3083 = vpop.f32.mrf.mxu0
        %v3084 = vadd.f32 0.0, %v3083
        %v3085 = vpop.f32.mrf.mxu0
        %v3086 = vpop.f32.mrf.mxu0
        %v3087 = vadd.f32 0.0, %v3086
        %v3088 = vpop.f32.mrf.mxu0
        %3089 = vmatprep.mubr.bf16.mxu0 0
        %3090 = vmatmul.mubr.bf16.gmra.mxu0 %v2945
        %v3091 = vpop.f32.mrf.mxu0
        %v3092 = vadd.f32 0.0, %v3091
        %v3093 = vpop.f32.mrf.mxu0
        %v3094 = vpop.f32.mrf.mxu0
        %v3095 = vadd.f32 0.0, %v3094
        %v3096 = vpop.f32.mrf.mxu0
        %3097 = vmatprep.mubr.bf16.mxu0 0
        %3098 = vmatmul.mubr.bf16.gmra.mxu0 %v2948
        %v3099 = vpop.f32.mrf.mxu0
        %v3100 = vadd.f32 0.0, %v3099
        %v3101 = vpop.f32.mrf.mxu0
        %v3102 = vpop.f32.mrf.mxu0
        %v3103 = vadd.f32 0.0, %v3102
        %v3104 = vpop.f32.mrf.mxu0
        %3105 = vmatprep.mubr.bf16.mxu0 0
        %3106 = vmatmul.mubr.bf16.gmra.mxu0 %v2951
        %v3107 = vpop.f32.mrf.mxu0
        %v3108 = vadd.f32 0.0, %v3107
        %v3109 = vpop.f32.mrf.mxu0
        %v3110 = vpop.f32.mrf.mxu0
        %v3111 = vadd.f32 0.0, %v3110
        %v3112 = vpop.f32.mrf.mxu0
        %3113 = vdwg.mxu0
        %v3114 = vadd.f32 %v2791, %v2988
        %v3115 = vadd.f32 %v2792, %v2991
        %v3116 = vadd.f32 %v2793, %v2996
        %v3117 = vadd.f32 %v2794, %v2999
        %v3118 = vadd.f32 %v2795, %v3004
        %v3119 = vadd.f32 %v2796, %v3007
        %v3120 = vadd.f32 %v2797, %v3012
        %v3121 = vadd.f32 %v2798, %v3015
        %v3122 = vadd.f32 %v2799, %v3020
        %v3123 = vadd.f32 %v2800, %v3023
        %v3124 = vadd.f32 %v2801, %v3028
        %v3125 = vadd.f32 %v2802, %v3031
        %v3126 = vadd.f32 %v2803, %v3036
        %v3127 = vadd.f32 %v2804, %v3039
        %v3128 = vadd.f32 %v2805, %v3044
        %v3129 = vadd.f32 %v2806, %v3047
        %v3130 = vadd.f32 %v2807, %v3052
        %v3131 = vadd.f32 %v2808, %v3055
        %v3132 = vadd.f32 %v2809, %v3060
        %v3133 = vadd.f32 %v2810, %v3063
        %v3134 = vadd.f32 %v2811, %v3068
        %v3135 = vadd.f32 %v2812, %v3071
        %v3136 = vadd.f32 %v2813, %v3076
        %v3137 = vadd.f32 %v2814, %v3079
        %v3138 = vadd.f32 %v2815, %v3084
        %v3139 = vadd.f32 %v2816, %v3087
        %v3140 = vadd.f32 %v2817, %v3092
        %v3141 = vadd.f32 %v2818, %v3095
        %v3142 = vadd.f32 %v2819, %v3100
        %v3143 = vadd.f32 %v2820, %v3103
        %v3144 = vadd.f32 %v2821, %v3108
        %v3145 = vadd.f32 %v2822, %v3111
        %v3146 = vld [vmem:[%s2823 + $0x1] sm:$0xff]
        %v3147 = vld [vmem:[%s2823 + $0x9] sm:$0xff]
        %v3148 = vld [vmem:[%s2823 + $0x19] sm:$0xff]
        %v3149 = vld [vmem:[%s2823 + $0x21] sm:$0xff]
        %v3150 = vld [vmem:[%s2823 + $0x31] sm:$0xff]
        %v3151 = vld [vmem:[%s2823 + $0x39] sm:$0xff]
        %v3152 = vld [vmem:[%s2823 + $0x49] sm:$0xff]
        %v3153 = vld [vmem:[%s2823 + $0x51] sm:$0xff]
        %v3154 = vld [vmem:[%s2823 + $0x61] sm:$0xff]
        %v3155 = vld [vmem:[%s2823 + $0x69] sm:$0xff]
        %v3156 = vld [vmem:[%s2823 + $0x79] sm:$0xff]
        %v3157 = vld [vmem:[%s2823 + $0x81] sm:$0xff]
        %v3158 = vld [vmem:[%s2823 + $0x91] sm:$0xff]
        %v3159 = vld [vmem:[%s2823 + $0x99] sm:$0xff]
        %v3160 = vld [vmem:[%s2823 + $0xa9] sm:$0xff]
        %v3161 = vld [vmem:[%s2823 + $0xb1] sm:$0xff]
        %v3162 = vld [vmem:[%s2823 + $0xc1] sm:$0xff]
        %v3163 = vld [vmem:[%s2823 + $0xc9] sm:$0xff]
        %v3164 = vld [vmem:[%s2823 + $0xd9] sm:$0xff]
        %v3165 = vld [vmem:[%s2823 + $0xe1] sm:$0xff]
        %v3166 = vld [vmem:[%s2823 + $0xf1] sm:$0xff]
        %v3167 = vld [vmem:[%s2823 + $0xf9] sm:$0xff]
        %v3168 = vld [vmem:[%s2823 + $0x109] sm:$0xff]
        %v3169 = vld [vmem:[%s2823 + $0x111] sm:$0xff]
        %v3170 = vld [vmem:[%s2823 + $0x121] sm:$0xff]
        %v3171 = vld [vmem:[%s2823 + $0x129] sm:$0xff]
        %v3172 = vld [vmem:[%s2823 + $0x139] sm:$0xff]
        %v3173 = vld [vmem:[%s2823 + $0x141] sm:$0xff]
        %v3174 = vld [vmem:[%s2823 + $0x151] sm:$0xff]
        %v3175 = vld [vmem:[%s2823 + $0x159] sm:$0xff]
        %v3176 = vld [vmem:[%s2823 + $0x169] sm:$0xff]
        %v3177 = vld [vmem:[%s2823 + $0x171] sm:$0xff]
        %v3178 = vpack.c.bf16 %v3147, %v3146
        %v3179 = vpack.c.bf16 %v3149, %v3148
        %v3180 = vpack.c.bf16 %v3151, %v3150
        %v3181 = vpack.c.bf16 %v3153, %v3152
        %v3182 = vpack.c.bf16 %v3155, %v3154
        %v3183 = vpack.c.bf16 %v3157, %v3156
        %v3184 = vpack.c.bf16 %v3159, %v3158
        %v3185 = vpack.c.bf16 %v3161, %v3160
        %v3186 = vpack.c.bf16 %v3163, %v3162
        %v3187 = vpack.c.bf16 %v3165, %v3164
        %v3188 = vpack.c.bf16 %v3167, %v3166
        %v3189 = vpack.c.bf16 %v3169, %v3168
        %v3190 = vpack.c.bf16 %v3171, %v3170
        %v3191 = vpack.c.bf16 %v3173, %v3172
        %v3192 = vpack.c.bf16 %v3175, %v3174
        %v3193 = vpack.c.bf16 %v3177, %v3176
        %s3194 = scalar_lea.vmem [#allocation6], 224
        %v3195 = vld [vmem:[%s3194] sm:$0xf]
        %v3196 = vld [vmem:[%s3194 + $0x4] sm:$0xf]
        %v3197 = vld [vmem:[%s3194 + $0x8] sm:$0xf]
        %v3198 = vld [vmem:[%s3194 + $0xc] sm:$0xf]
        %v3199 = vld [vmem:[%s3194 + $0x10] sm:$0xf]
        %v3200 = vld [vmem:[%s3194 + $0x14] sm:$0xf]
        %v3201 = vld [vmem:[%s3194 + $0x18] sm:$0xf]
        %v3202 = vld [vmem:[%s3194 + $0x1c] sm:$0xf]
        %v3211 = vunpack.c.l.b16 %v3195
        %v3212 = vunpack.c.l.b16 %v3196
        %v3213 = vunpack.c.l.b16 %v3197
        %v3214 = vunpack.c.l.b16 %v3198
        %v3215 = vunpack.c.l.b16 %v3199
        %v3216 = vunpack.c.l.b16 %v3200
        %v3217 = vunpack.c.l.b16 %v3201
        %v3218 = vunpack.c.l.b16 %v3202
        %v3219 = vpack.c.b16 %v3212, %v3211
        %v3220 = vpack.c.b16 %v3214, %v3213
        %v3221 = vpack.c.b16 %v3216, %v3215
        %v3222 = vpack.c.b16 %v3218, %v3217
        %v3228 = vsel %vm877, %v3178, 0
        %v3231 = vsel %vm877, %v3179, 0
        %v3234 = vsel %vm877, %v3180, 0
        %v3237 = vsel %vm877, %v3181, 0
        %v3240 = vsel %vm877, %v3182, 0
        %v3243 = vsel %vm877, %v3183, 0
        %v3246 = vsel %vm877, %v3184, 0
        %v3249 = vsel %vm877, %v3185, 0
        %v3252 = vsel %vm877, %v3186, 0
        %v3255 = vsel %vm877, %v3187, 0
        %v3258 = vsel %vm877, %v3188, 0
        %v3261 = vsel %vm877, %v3189, 0
        %v3264 = vsel %vm877, %v3190, 0
        %v3267 = vsel %vm877, %v3191, 0
        %v3270 = vsel %vm877, %v3192, 0
        %v3273 = vsel %vm877, %v3193, 0
        %3275 = vmatprep.subr.bf16.mxu0 0
        %3276 = vmatpush1.bf16.msra.mxu0 0
        %3277 = vmatprep.subr.bf16.mxu0 0
        %3278 = vmatpush1.bf16.msra.mxu0 0
        %3279 = vmatprep.subr.bf16.mxu0 0
        %3280 = vmatpush1.bf16.msra.mxu0 0
        %3281 = vmatprep.subr.bf16.mxu0 0
        %3282 = vmatpush1.bf16.msra.mxu0 0
        %3283 = vmatprep.subr.bf16.mxu0 0
        %3284 = vmatpush1.bf16.msra.mxu0 %v3222
        %3285 = vmatprep.subr.bf16.mxu0 0
        %3286 = vmatpush1.bf16.msra.mxu0 %v3221
        %3287 = vmatprep.subr.bf16.mxu0 0
        %3288 = vmatpush1.bf16.msra.mxu0 %v3220
        %3289 = vmatprep.subr.bf16.mxu0 0
        %3290 = vmatpush1.bf16.msra.mxu0 %v3219
        %3291 = vmatprep.subr.bf16.mxu0 0
        %3292 = vmatpush2.bf16.msra.mxu0 0
        %3293 = vmatprep.subr.bf16.mxu0 0
        %3294 = vmatpush2.bf16.msra.mxu0 0
        %3295 = vmatprep.subr.bf16.mxu0 0
        %3296 = vmatpush2.bf16.msra.mxu0 0
        %3297 = vmatprep.subr.bf16.mxu0 0
        %3298 = vmatpush2.bf16.msra.mxu0 0
        %3299 = vmatprep.subr.bf16.mxu0 0
        %3300 = vmatpush2.bf16.msra.mxu0 0
        %3301 = vmatprep.subr.bf16.mxu0 0
        %3302 = vmatpush2.bf16.msra.mxu0 0
        %3303 = vmatprep.subr.bf16.mxu0 0
        %3304 = vmatpush2.bf16.msra.mxu0 0
        %3305 = vmatprep.subr.bf16.mxu0 0
        %3306 = vmatpush2.bf16.msra.mxu0 0
        %3307 = vmatprep.mubr.bf16.mxu0 0
        %3308 = vmatmul.mubr.bf16.gmra.mxu0 %v3228
        %v3309 = vpop.f32.mrf.mxu0
        %v3310 = vadd.f32 0.0, %v3309
        %v3311 = vpop.f32.mrf.mxu0
        %v3312 = vpop.f32.mrf.mxu0
        %v3313 = vadd.f32 0.0, %v3312
        %v3314 = vpop.f32.mrf.mxu0
        %3315 = vmatprep.mubr.bf16.mxu0 0
        %3316 = vmatmul.mubr.bf16.gmra.mxu0 %v3231
        %v3317 = vpop.f32.mrf.mxu0
        %v3318 = vadd.f32 0.0, %v3317
        %v3319 = vpop.f32.mrf.mxu0
        %v3320 = vpop.f32.mrf.mxu0
        %v3321 = vadd.f32 0.0, %v3320
        %v3322 = vpop.f32.mrf.mxu0
        %3323 = vmatprep.mubr.bf16.mxu0 0
        %3324 = vmatmul.mubr.bf16.gmra.mxu0 %v3234
        %v3325 = vpop.f32.mrf.mxu0
        %v3326 = vadd.f32 0.0, %v3325
        %v3327 = vpop.f32.mrf.mxu0
        %v3328 = vpop.f32.mrf.mxu0
        %v3329 = vadd.f32 0.0, %v3328
        %v3330 = vpop.f32.mrf.mxu0
        %3331 = vmatprep.mubr.bf16.mxu0 0
        %3332 = vmatmul.mubr.bf16.gmra.mxu0 %v3237
        %v3333 = vpop.f32.mrf.mxu0
        %v3334 = vadd.f32 0.0, %v3333
        %v3335 = vpop.f32.mrf.mxu0
        %v3336 = vpop.f32.mrf.mxu0
        %v3337 = vadd.f32 0.0, %v3336
        %v3338 = vpop.f32.mrf.mxu0
        %3339 = vmatprep.mubr.bf16.mxu0 0
        %3340 = vmatmul.mubr.bf16.gmra.mxu0 %v3240
        %v3341 = vpop.f32.mrf.mxu0
        %v3342 = vadd.f32 0.0, %v3341
        %v3343 = vpop.f32.mrf.mxu0
        %v3344 = vpop.f32.mrf.mxu0
        %v3345 = vadd.f32 0.0, %v3344
        %v3346 = vpop.f32.mrf.mxu0
        %3347 = vmatprep.mubr.bf16.mxu0 0
        %3348 = vmatmul.mubr.bf16.gmra.mxu0 %v3243
        %v3349 = vpop.f32.mrf.mxu0
        %v3350 = vadd.f32 0.0, %v3349
        %v3351 = vpop.f32.mrf.mxu0
        %v3352 = vpop.f32.mrf.mxu0
        %v3353 = vadd.f32 0.0, %v3352
        %v3354 = vpop.f32.mrf.mxu0
        %3355 = vmatprep.mubr.bf16.mxu0 0
        %3356 = vmatmul.mubr.bf16.gmra.mxu0 %v3246
        %v3357 = vpop.f32.mrf.mxu0
        %v3358 = vadd.f32 0.0, %v3357
        %v3359 = vpop.f32.mrf.mxu0
        %v3360 = vpop.f32.mrf.mxu0
        %v3361 = vadd.f32 0.0, %v3360
        %v3362 = vpop.f32.mrf.mxu0
        %3363 = vmatprep.mubr.bf16.mxu0 0
        %3364 = vmatmul.mubr.bf16.gmra.mxu0 %v3249
        %v3365 = vpop.f32.mrf.mxu0
        %v3366 = vadd.f32 0.0, %v3365
        %v3367 = vpop.f32.mrf.mxu0
        %v3368 = vpop.f32.mrf.mxu0
        %v3369 = vadd.f32 0.0, %v3368
        %v3370 = vpop.f32.mrf.mxu0
        %3371 = vmatprep.mubr.bf16.mxu0 0
        %3372 = vmatmul.mubr.bf16.gmra.mxu0 %v3252
        %v3373 = vpop.f32.mrf.mxu0
        %v3374 = vadd.f32 0.0, %v3373
        %v3375 = vpop.f32.mrf.mxu0
        %v3376 = vpop.f32.mrf.mxu0
        %v3377 = vadd.f32 0.0, %v3376
        %v3378 = vpop.f32.mrf.mxu0
        %3379 = vmatprep.mubr.bf16.mxu0 0
        %3380 = vmatmul.mubr.bf16.gmra.mxu0 %v3255
        %v3381 = vpop.f32.mrf.mxu0
        %v3382 = vadd.f32 0.0, %v3381
        %v3383 = vpop.f32.mrf.mxu0
        %v3384 = vpop.f32.mrf.mxu0
        %v3385 = vadd.f32 0.0, %v3384
        %v3386 = vpop.f32.mrf.mxu0
        %3387 = vmatprep.mubr.bf16.mxu0 0
        %3388 = vmatmul.mubr.bf16.gmra.mxu0 %v3258
        %v3389 = vpop.f32.mrf.mxu0
        %v3390 = vadd.f32 0.0, %v3389
        %v3391 = vpop.f32.mrf.mxu0
        %v3392 = vpop.f32.mrf.mxu0
        %v3393 = vadd.f32 0.0, %v3392
        %v3394 = vpop.f32.mrf.mxu0
        %3395 = vmatprep.mubr.bf16.mxu0 0
        %3396 = vmatmul.mubr.bf16.gmra.mxu0 %v3261
        %v3397 = vpop.f32.mrf.mxu0
        %v3398 = vadd.f32 0.0, %v3397
        %v3399 = vpop.f32.mrf.mxu0
        %v3400 = vpop.f32.mrf.mxu0
        %v3401 = vadd.f32 0.0, %v3400
        %v3402 = vpop.f32.mrf.mxu0
        %3403 = vmatprep.mubr.bf16.mxu0 0
        %3404 = vmatmul.mubr.bf16.gmra.mxu0 %v3264
        %v3405 = vpop.f32.mrf.mxu0
        %v3406 = vadd.f32 0.0, %v3405
        %v3407 = vpop.f32.mrf.mxu0
        %v3408 = vpop.f32.mrf.mxu0
        %v3409 = vadd.f32 0.0, %v3408
        %v3410 = vpop.f32.mrf.mxu0
        %3411 = vmatprep.mubr.bf16.mxu0 0
        %3412 = vmatmul.mubr.bf16.gmra.mxu0 %v3267
        %v3413 = vpop.f32.mrf.mxu0
        %v3414 = vadd.f32 0.0, %v3413
        %v3415 = vpop.f32.mrf.mxu0
        %v3416 = vpop.f32.mrf.mxu0
        %v3417 = vadd.f32 0.0, %v3416
        %v3418 = vpop.f32.mrf.mxu0
        %3419 = vmatprep.mubr.bf16.mxu0 0
        %3420 = vmatmul.mubr.bf16.gmra.mxu0 %v3270
        %v3421 = vpop.f32.mrf.mxu0
        %v3422 = vadd.f32 0.0, %v3421
        %v3423 = vpop.f32.mrf.mxu0
        %v3424 = vpop.f32.mrf.mxu0
        %v3425 = vadd.f32 0.0, %v3424
        %v3426 = vpop.f32.mrf.mxu0
        %3427 = vmatprep.mubr.bf16.mxu0 0
        %3428 = vmatmul.mubr.bf16.gmra.mxu0 %v3273
        %v3429 = vpop.f32.mrf.mxu0
        %v3430 = vadd.f32 0.0, %v3429
        %v3431 = vpop.f32.mrf.mxu0
        %v3432 = vpop.f32.mrf.mxu0
        %v3433 = vadd.f32 0.0, %v3432
        %v3434 = vpop.f32.mrf.mxu0
        %3435 = vdwg.mxu0
        %v3436 = vadd.f32 %v3114, %v3310
        %v3437 = vadd.f32 %v3115, %v3313
        %v3438 = vadd.f32 %v3116, %v3318
        %v3439 = vadd.f32 %v3117, %v3321
        %v3440 = vadd.f32 %v3118, %v3326
        %v3441 = vadd.f32 %v3119, %v3329
        %v3442 = vadd.f32 %v3120, %v3334
        %v3443 = vadd.f32 %v3121, %v3337
        %v3444 = vadd.f32 %v3122, %v3342
        %v3445 = vadd.f32 %v3123, %v3345
        %v3446 = vadd.f32 %v3124, %v3350
        %v3447 = vadd.f32 %v3125, %v3353
        %v3448 = vadd.f32 %v3126, %v3358
        %v3449 = vadd.f32 %v3127, %v3361
        %v3450 = vadd.f32 %v3128, %v3366
        %v3451 = vadd.f32 %v3129, %v3369
        %v3452 = vadd.f32 %v3130, %v3374
        %v3453 = vadd.f32 %v3131, %v3377
        %v3454 = vadd.f32 %v3132, %v3382
        %v3455 = vadd.f32 %v3133, %v3385
        %v3456 = vadd.f32 %v3134, %v3390
        %v3457 = vadd.f32 %v3135, %v3393
        %v3458 = vadd.f32 %v3136, %v3398
        %v3459 = vadd.f32 %v3137, %v3401
        %v3460 = vadd.f32 %v3138, %v3406
        %v3461 = vadd.f32 %v3139, %v3409
        %v3462 = vadd.f32 %v3140, %v3414
        %v3463 = vadd.f32 %v3141, %v3417
        %v3464 = vadd.f32 %v3142, %v3422
        %v3465 = vadd.f32 %v3143, %v3425
        %v3466 = vadd.f32 %v3144, %v3430
        %v3467 = vadd.f32 %v3145, %v3433
        %v3468 = vld [vmem:[%s2823 + $0x2] sm:$0xff]
        %v3469 = vld [vmem:[%s2823 + $0xa] sm:$0xff]
        %v3470 = vld [vmem:[%s2823 + $0x1a] sm:$0xff]
        %v3471 = vld [vmem:[%s2823 + $0x22] sm:$0xff]
        %v3472 = vld [vmem:[%s2823 + $0x32] sm:$0xff]
        %v3473 = vld [vmem:[%s2823 + $0x3a] sm:$0xff]
        %v3474 = vld [vmem:[%s2823 + $0x4a] sm:$0xff]
        %v3475 = vld [vmem:[%s2823 + $0x52] sm:$0xff]
        %v3476 = vld [vmem:[%s2823 + $0x62] sm:$0xff]
        %v3477 = vld [vmem:[%s2823 + $0x6a] sm:$0xff]
        %v3478 = vld [vmem:[%s2823 + $0x7a] sm:$0xff]
        %v3479 = vld [vmem:[%s2823 + $0x82] sm:$0xff]
        %v3480 = vld [vmem:[%s2823 + $0x92] sm:$0xff]
        %v3481 = vld [vmem:[%s2823 + $0x9a] sm:$0xff]
        %v3482 = vld [vmem:[%s2823 + $0xaa] sm:$0xff]
        %v3483 = vld [vmem:[%s2823 + $0xb2] sm:$0xff]
        %v3484 = vld [vmem:[%s2823 + $0xc2] sm:$0xff]
        %v3485 = vld [vmem:[%s2823 + $0xca] sm:$0xff]
        %v3486 = vld [vmem:[%s2823 + $0xda] sm:$0xff]
        %v3487 = vld [vmem:[%s2823 + $0xe2] sm:$0xff]
        %v3488 = vld [vmem:[%s2823 + $0xf2] sm:$0xff]
        %v3489 = vld [vmem:[%s2823 + $0xfa] sm:$0xff]
        %v3490 = vld [vmem:[%s2823 + $0x10a] sm:$0xff]
        %v3491 = vld [vmem:[%s2823 + $0x112] sm:$0xff]
        %v3492 = vld [vmem:[%s2823 + $0x122] sm:$0xff]
        %v3493 = vld [vmem:[%s2823 + $0x12a] sm:$0xff]
        %v3494 = vld [vmem:[%s2823 + $0x13a] sm:$0xff]
        %v3495 = vld [vmem:[%s2823 + $0x142] sm:$0xff]
        %v3496 = vld [vmem:[%s2823 + $0x152] sm:$0xff]
        %v3497 = vld [vmem:[%s2823 + $0x15a] sm:$0xff]
        %v3498 = vld [vmem:[%s2823 + $0x16a] sm:$0xff]
        %v3499 = vld [vmem:[%s2823 + $0x172] sm:$0xff]
        %v3500 = vpack.c.bf16 %v3469, %v3468
        %v3501 = vpack.c.bf16 %v3471, %v3470
        %v3502 = vpack.c.bf16 %v3473, %v3472
        %v3503 = vpack.c.bf16 %v3475, %v3474
        %v3504 = vpack.c.bf16 %v3477, %v3476
        %v3505 = vpack.c.bf16 %v3479, %v3478
        %v3506 = vpack.c.bf16 %v3481, %v3480
        %v3507 = vpack.c.bf16 %v3483, %v3482
        %v3508 = vpack.c.bf16 %v3485, %v3484
        %v3509 = vpack.c.bf16 %v3487, %v3486
        %v3510 = vpack.c.bf16 %v3489, %v3488
        %v3511 = vpack.c.bf16 %v3491, %v3490
        %v3512 = vpack.c.bf16 %v3493, %v3492
        %v3513 = vpack.c.bf16 %v3495, %v3494
        %v3514 = vpack.c.bf16 %v3497, %v3496
        %v3515 = vpack.c.bf16 %v3499, %v3498
        %s3516 = scalar_lea.vmem [#allocation6], 256
        %v3517 = vld [vmem:[%s3516] sm:$0xf]
        %v3518 = vld [vmem:[%s3516 + $0x4] sm:$0xf]
        %v3519 = vld [vmem:[%s3516 + $0x8] sm:$0xf]
        %v3520 = vld [vmem:[%s3516 + $0xc] sm:$0xf]
        %v3521 = vld [vmem:[%s3516 + $0x10] sm:$0xf]
        %v3522 = vld [vmem:[%s3516 + $0x14] sm:$0xf]
        %v3523 = vld [vmem:[%s3516 + $0x18] sm:$0xf]
        %v3524 = vld [vmem:[%s3516 + $0x1c] sm:$0xf]
        %v3533 = vunpack.c.l.b16 %v3517
        %v3534 = vunpack.c.l.b16 %v3518
        %v3535 = vunpack.c.l.b16 %v3519
        %v3536 = vunpack.c.l.b16 %v3520
        %v3537 = vunpack.c.l.b16 %v3521
        %v3538 = vunpack.c.l.b16 %v3522
        %v3539 = vunpack.c.l.b16 %v3523
        %v3540 = vunpack.c.l.b16 %v3524
        %v3541 = vpack.c.b16 %v3534, %v3533
        %v3542 = vpack.c.b16 %v3536, %v3535
        %v3543 = vpack.c.b16 %v3538, %v3537
        %v3544 = vpack.c.b16 %v3540, %v3539
        %v3550 = vsel %vm877, %v3500, 0
        %v3553 = vsel %vm877, %v3501, 0
        %v3556 = vsel %vm877, %v3502, 0
        %v3559 = vsel %vm877, %v3503, 0
        %v3562 = vsel %vm877, %v3504, 0
        %v3565 = vsel %vm877, %v3505, 0
        %v3568 = vsel %vm877, %v3506, 0
        %v3571 = vsel %vm877, %v3507, 0
        %v3574 = vsel %vm877, %v3508, 0
        %v3577 = vsel %vm877, %v3509, 0
        %v3580 = vsel %vm877, %v3510, 0
        %v3583 = vsel %vm877, %v3511, 0
        %v3586 = vsel %vm877, %v3512, 0
        %v3589 = vsel %vm877, %v3513, 0
        %v3592 = vsel %vm877, %v3514, 0
        %v3595 = vsel %vm877, %v3515, 0
        %3597 = vmatprep.subr.bf16.mxu0 0
        %3598 = vmatpush1.bf16.msra.mxu0 0
        %3599 = vmatprep.subr.bf16.mxu0 0
        %3600 = vmatpush1.bf16.msra.mxu0 0
        %3601 = vmatprep.subr.bf16.mxu0 0
        %3602 = vmatpush1.bf16.msra.mxu0 0
        %3603 = vmatprep.subr.bf16.mxu0 0
        %3604 = vmatpush1.bf16.msra.mxu0 0
        %3605 = vmatprep.subr.bf16.mxu0 0
        %3606 = vmatpush1.bf16.msra.mxu0 %v3544
        %3607 = vmatprep.subr.bf16.mxu0 0
        %3608 = vmatpush1.bf16.msra.mxu0 %v3543
        %3609 = vmatprep.subr.bf16.mxu0 0
        %3610 = vmatpush1.bf16.msra.mxu0 %v3542
        %3611 = vmatprep.subr.bf16.mxu0 0
        %3612 = vmatpush1.bf16.msra.mxu0 %v3541
        %3613 = vmatprep.subr.bf16.mxu0 0
        %3614 = vmatpush2.bf16.msra.mxu0 0
        %3615 = vmatprep.subr.bf16.mxu0 0
        %3616 = vmatpush2.bf16.msra.mxu0 0
        %3617 = vmatprep.subr.bf16.mxu0 0
        %3618 = vmatpush2.bf16.msra.mxu0 0
        %3619 = vmatprep.subr.bf16.mxu0 0
        %3620 = vmatpush2.bf16.msra.mxu0 0
        %3621 = vmatprep.subr.bf16.mxu0 0
        %3622 = vmatpush2.bf16.msra.mxu0 0
        %3623 = vmatprep.subr.bf16.mxu0 0
        %3624 = vmatpush2.bf16.msra.mxu0 0
        %3625 = vmatprep.subr.bf16.mxu0 0
        %3626 = vmatpush2.bf16.msra.mxu0 0
        %3627 = vmatprep.subr.bf16.mxu0 0
        %3628 = vmatpush2.bf16.msra.mxu0 0
        %3629 = vmatprep.mubr.bf16.mxu0 0
        %3630 = vmatmul.mubr.bf16.gmra.mxu0 %v3550
        %v3631 = vpop.f32.mrf.mxu0
        %v3632 = vadd.f32 0.0, %v3631
        %v3633 = vpop.f32.mrf.mxu0
        %v3634 = vpop.f32.mrf.mxu0
        %v3635 = vadd.f32 0.0, %v3634
        %v3636 = vpop.f32.mrf.mxu0
        %3637 = vmatprep.mubr.bf16.mxu0 0
        %3638 = vmatmul.mubr.bf16.gmra.mxu0 %v3553
        %v3639 = vpop.f32.mrf.mxu0
        %v3640 = vadd.f32 0.0, %v3639
        %v3641 = vpop.f32.mrf.mxu0
        %v3642 = vpop.f32.mrf.mxu0
        %v3643 = vadd.f32 0.0, %v3642
        %v3644 = vpop.f32.mrf.mxu0
        %3645 = vmatprep.mubr.bf16.mxu0 0
        %3646 = vmatmul.mubr.bf16.gmra.mxu0 %v3556
        %v3647 = vpop.f32.mrf.mxu0
        %v3648 = vadd.f32 0.0, %v3647
        %v3649 = vpop.f32.mrf.mxu0
        %v3650 = vpop.f32.mrf.mxu0
        %v3651 = vadd.f32 0.0, %v3650
        %v3652 = vpop.f32.mrf.mxu0
        %3653 = vmatprep.mubr.bf16.mxu0 0
        %3654 = vmatmul.mubr.bf16.gmra.mxu0 %v3559
        %v3655 = vpop.f32.mrf.mxu0
        %v3656 = vadd.f32 0.0, %v3655
        %v3657 = vpop.f32.mrf.mxu0
        %v3658 = vpop.f32.mrf.mxu0
        %v3659 = vadd.f32 0.0, %v3658
        %v3660 = vpop.f32.mrf.mxu0
        %3661 = vmatprep.mubr.bf16.mxu0 0
        %3662 = vmatmul.mubr.bf16.gmra.mxu0 %v3562
        %v3663 = vpop.f32.mrf.mxu0
        %v3664 = vadd.f32 0.0, %v3663
        %v3665 = vpop.f32.mrf.mxu0
        %v3666 = vpop.f32.mrf.mxu0
        %v3667 = vadd.f32 0.0, %v3666
        %v3668 = vpop.f32.mrf.mxu0
        %3669 = vmatprep.mubr.bf16.mxu0 0
        %3670 = vmatmul.mubr.bf16.gmra.mxu0 %v3565
        %v3671 = vpop.f32.mrf.mxu0
        %v3672 = vadd.f32 0.0, %v3671
        %v3673 = vpop.f32.mrf.mxu0
        %v3674 = vpop.f32.mrf.mxu0
        %v3675 = vadd.f32 0.0, %v3674
        %v3676 = vpop.f32.mrf.mxu0
        %3677 = vmatprep.mubr.bf16.mxu0 0
        %3678 = vmatmul.mubr.bf16.gmra.mxu0 %v3568
        %v3679 = vpop.f32.mrf.mxu0
        %v3680 = vadd.f32 0.0, %v3679
        %v3681 = vpop.f32.mrf.mxu0
        %v3682 = vpop.f32.mrf.mxu0
        %v3683 = vadd.f32 0.0, %v3682
        %v3684 = vpop.f32.mrf.mxu0
        %3685 = vmatprep.mubr.bf16.mxu0 0
        %3686 = vmatmul.mubr.bf16.gmra.mxu0 %v3571
        %v3687 = vpop.f32.mrf.mxu0
        %v3688 = vadd.f32 0.0, %v3687
        %v3689 = vpop.f32.mrf.mxu0
        %v3690 = vpop.f32.mrf.mxu0
        %v3691 = vadd.f32 0.0, %v3690
        %v3692 = vpop.f32.mrf.mxu0
        %3693 = vmatprep.mubr.bf16.mxu0 0
        %3694 = vmatmul.mubr.bf16.gmra.mxu0 %v3574
        %v3695 = vpop.f32.mrf.mxu0
        %v3696 = vadd.f32 0.0, %v3695
        %v3697 = vpop.f32.mrf.mxu0
        %v3698 = vpop.f32.mrf.mxu0
        %v3699 = vadd.f32 0.0, %v3698
        %v3700 = vpop.f32.mrf.mxu0
        %3701 = vmatprep.mubr.bf16.mxu0 0
        %3702 = vmatmul.mubr.bf16.gmra.mxu0 %v3577
        %v3703 = vpop.f32.mrf.mxu0
        %v3704 = vadd.f32 0.0, %v3703
        %v3705 = vpop.f32.mrf.mxu0
        %v3706 = vpop.f32.mrf.mxu0
        %v3707 = vadd.f32 0.0, %v3706
        %v3708 = vpop.f32.mrf.mxu0
        %3709 = vmatprep.mubr.bf16.mxu0 0
        %3710 = vmatmul.mubr.bf16.gmra.mxu0 %v3580
        %v3711 = vpop.f32.mrf.mxu0
        %v3712 = vadd.f32 0.0, %v3711
        %v3713 = vpop.f32.mrf.mxu0
        %v3714 = vpop.f32.mrf.mxu0
        %v3715 = vadd.f32 0.0, %v3714
        %v3716 = vpop.f32.mrf.mxu0
        %3717 = vmatprep.mubr.bf16.mxu0 0
        %3718 = vmatmul.mubr.bf16.gmra.mxu0 %v3583
        %v3719 = vpop.f32.mrf.mxu0
        %v3720 = vadd.f32 0.0, %v3719
        %v3721 = vpop.f32.mrf.mxu0
        %v3722 = vpop.f32.mrf.mxu0
        %v3723 = vadd.f32 0.0, %v3722
        %v3724 = vpop.f32.mrf.mxu0
        %3725 = vmatprep.mubr.bf16.mxu0 0
        %3726 = vmatmul.mubr.bf16.gmra.mxu0 %v3586
        %v3727 = vpop.f32.mrf.mxu0
        %v3728 = vadd.f32 0.0, %v3727
        %v3729 = vpop.f32.mrf.mxu0
        %v3730 = vpop.f32.mrf.mxu0
        %v3731 = vadd.f32 0.0, %v3730
        %v3732 = vpop.f32.mrf.mxu0
        %3733 = vmatprep.mubr.bf16.mxu0 0
        %3734 = vmatmul.mubr.bf16.gmra.mxu0 %v3589
        %v3735 = vpop.f32.mrf.mxu0
        %v3736 = vadd.f32 0.0, %v3735
        %v3737 = vpop.f32.mrf.mxu0
        %v3738 = vpop.f32.mrf.mxu0
        %v3739 = vadd.f32 0.0, %v3738
        %v3740 = vpop.f32.mrf.mxu0
        %3741 = vmatprep.mubr.bf16.mxu0 0
        %3742 = vmatmul.mubr.bf16.gmra.mxu0 %v3592
        %v3743 = vpop.f32.mrf.mxu0
        %v3744 = vadd.f32 0.0, %v3743
        %v3745 = vpop.f32.mrf.mxu0
        %v3746 = vpop.f32.mrf.mxu0
        %v3747 = vadd.f32 0.0, %v3746
        %v3748 = vpop.f32.mrf.mxu0
        %3749 = vmatprep.mubr.bf16.mxu0 0
        %3750 = vmatmul.mubr.bf16.gmra.mxu0 %v3595
        %v3751 = vpop.f32.mrf.mxu0
        %v3752 = vadd.f32 0.0, %v3751
        %v3753 = vpop.f32.mrf.mxu0
        %v3754 = vpop.f32.mrf.mxu0
        %v3755 = vadd.f32 0.0, %v3754
        %v3756 = vpop.f32.mrf.mxu0
        %3757 = vdwg.mxu0
        %v3758 = vadd.f32 %v3436, %v3632
        %v3759 = vadd.f32 %v3437, %v3635
        %v3760 = vadd.f32 %v3438, %v3640
        %v3761 = vadd.f32 %v3439, %v3643
        %v3762 = vadd.f32 %v3440, %v3648
        %v3763 = vadd.f32 %v3441, %v3651
        %v3764 = vadd.f32 %v3442, %v3656
        %v3765 = vadd.f32 %v3443, %v3659
        %v3766 = vadd.f32 %v3444, %v3664
        %v3767 = vadd.f32 %v3445, %v3667
        %v3768 = vadd.f32 %v3446, %v3672
        %v3769 = vadd.f32 %v3447, %v3675
        %v3770 = vadd.f32 %v3448, %v3680
        %v3771 = vadd.f32 %v3449, %v3683
        %v3772 = vadd.f32 %v3450, %v3688
        %v3773 = vadd.f32 %v3451, %v3691
        %v3774 = vadd.f32 %v3452, %v3696
        %v3775 = vadd.f32 %v3453, %v3699
        %v3776 = vadd.f32 %v3454, %v3704
        %v3777 = vadd.f32 %v3455, %v3707
        %v3778 = vadd.f32 %v3456, %v3712
        %v3779 = vadd.f32 %v3457, %v3715
        %v3780 = vadd.f32 %v3458, %v3720
        %v3781 = vadd.f32 %v3459, %v3723
        %v3782 = vadd.f32 %v3460, %v3728
        %v3783 = vadd.f32 %v3461, %v3731
        %v3784 = vadd.f32 %v3462, %v3736
        %v3785 = vadd.f32 %v3463, %v3739
        %v3786 = vadd.f32 %v3464, %v3744
        %v3787 = vadd.f32 %v3465, %v3747
        %v3788 = vadd.f32 %v3466, %v3752
        %v3789 = vadd.f32 %v3467, %v3755
        %v3790 = vld [vmem:[%s4] sm:$0x1]
        %v3792 = vlaneseq
        %v3793 = vshrl.u32 %v3792, 7
        %v3794 = vsub.s32 0, %v3793
        %v3795 = vrot.slane %v3790, %v3794
        %v3797 = vadd.f32 %v3758, %v3795
        %v3798 = vadd.f32 %v3759, %v3795
        %v3799 = vadd.f32 %v3760, %v3795
        %v3800 = vadd.f32 %v3761, %v3795
        %v3801 = vadd.f32 %v3762, %v3795
        %v3802 = vadd.f32 %v3763, %v3795
        %v3803 = vadd.f32 %v3764, %v3795
        %v3804 = vadd.f32 %v3765, %v3795
        %v3805 = vadd.f32 %v3766, %v3795
        %v3806 = vadd.f32 %v3767, %v3795
        %v3807 = vadd.f32 %v3768, %v3795
        %v3808 = vadd.f32 %v3769, %v3795
        %v3809 = vadd.f32 %v3770, %v3795
        %v3810 = vadd.f32 %v3771, %v3795
        %v3811 = vadd.f32 %v3772, %v3795
        %v3812 = vadd.f32 %v3773, %v3795
        %v3813 = vadd.f32 %v3774, %v3795
        %v3814 = vadd.f32 %v3775, %v3795
        %v3815 = vadd.f32 %v3776, %v3795
        %v3816 = vadd.f32 %v3777, %v3795
        %v3817 = vadd.f32 %v3778, %v3795
        %v3818 = vadd.f32 %v3779, %v3795
        %v3819 = vadd.f32 %v3780, %v3795
        %v3820 = vadd.f32 %v3781, %v3795
        %v3821 = vadd.f32 %v3782, %v3795
        %v3822 = vadd.f32 %v3783, %v3795
        %v3823 = vadd.f32 %v3784, %v3795
        %v3824 = vadd.f32 %v3785, %v3795
        %v3825 = vadd.f32 %v3786, %v3795
        %v3826 = vadd.f32 %v3787, %v3795
        %v3827 = vadd.f32 %v3788, %v3795
        %v3828 = vadd.f32 %v3789, %v3795
        %v3829 = vmul.f32 %v3797, 0.001
        %v3830 = vmul.f32 %v3798, 0.001
        %v3831 = vmul.f32 %v3799, 0.001
        %v3832 = vmul.f32 %v3800, 0.001
        %v3833 = vmul.f32 %v3801, 0.001
        %v3834 = vmul.f32 %v3802, 0.001
        %v3835 = vmul.f32 %v3803, 0.001
        %v3836 = vmul.f32 %v3804, 0.001
        %v3837 = vmul.f32 %v3805, 0.001
        %v3838 = vmul.f32 %v3806, 0.001
        %v3839 = vmul.f32 %v3807, 0.001
        %v3840 = vmul.f32 %v3808, 0.001
        %v3841 = vmul.f32 %v3809, 0.001
        %v3842 = vmul.f32 %v3810, 0.001
        %v3843 = vmul.f32 %v3811, 0.001
        %v3844 = vmul.f32 %v3812, 0.001
        %v3845 = vmul.f32 %v3813, 0.001
        %v3846 = vmul.f32 %v3814, 0.001
        %v3847 = vmul.f32 %v3815, 0.001
        %v3848 = vmul.f32 %v3816, 0.001
        %v3849 = vmul.f32 %v3817, 0.001
        %v3850 = vmul.f32 %v3818, 0.001
        %v3851 = vmul.f32 %v3819, 0.001
        %v3852 = vmul.f32 %v3820, 0.001
        %v3853 = vmul.f32 %v3821, 0.001
        %v3854 = vmul.f32 %v3822, 0.001
        %v3855 = vmul.f32 %v3823, 0.001
        %v3856 = vmul.f32 %v3824, 0.001
        %v3857 = vmul.f32 %v3825, 0.001
        %v3858 = vmul.f32 %v3826, 0.001
        %v3859 = vmul.f32 %v3827, 0.001
        %v3860 = vmul.f32 %v3828, 0.001
        %v3861 = vmax.f32 %v3797, %v3829
        %v3862 = vmax.f32 %v3798, %v3830
        %v3863 = vmax.f32 %v3799, %v3831
        %v3864 = vmax.f32 %v3800, %v3832
        %v3865 = vmax.f32 %v3801, %v3833
        %v3866 = vmax.f32 %v3802, %v3834
        %v3867 = vmax.f32 %v3803, %v3835
        %v3868 = vmax.f32 %v3804, %v3836
        %v3869 = vmax.f32 %v3805, %v3837
        %v3870 = vmax.f32 %v3806, %v3838
        %v3871 = vmax.f32 %v3807, %v3839
        %v3872 = vmax.f32 %v3808, %v3840
        %v3873 = vmax.f32 %v3809, %v3841
        %v3874 = vmax.f32 %v3810, %v3842
        %v3875 = vmax.f32 %v3811, %v3843
        %v3876 = vmax.f32 %v3812, %v3844
        %v3877 = vmax.f32 %v3813, %v3845
        %v3878 = vmax.f32 %v3814, %v3846
        %v3879 = vmax.f32 %v3815, %v3847
        %v3880 = vmax.f32 %v3816, %v3848
        %v3881 = vmax.f32 %v3817, %v3849
        %v3882 = vmax.f32 %v3818, %v3850
        %v3883 = vmax.f32 %v3819, %v3851
        %v3884 = vmax.f32 %v3820, %v3852
        %v3885 = vmax.f32 %v3821, %v3853
        %v3886 = vmax.f32 %v3822, %v3854
        %v3887 = vmax.f32 %v3823, %v3855
        %v3888 = vmax.f32 %v3824, %v3856
        %v3889 = vmax.f32 %v3825, %v3857
        %v3890 = vmax.f32 %v3826, %v3858
        %v3891 = vmax.f32 %v3827, %v3859
        %v3892 = vmax.f32 %v3828, %v3860
        %v3893 = vsel %vm877, %v3861, 0.0
        %v3894 = vsel %vm877, %v3862, 0.0
        %v3895 = vadd.f32 %v3893, %v3894
        %v3896 = vsel %vm877, %v3863, 0.0
        %v3897 = vadd.f32 %v3895, %v3896
        %v3898 = vsel %vm877, %v3864, 0.0
        %v3899 = vadd.f32 %v3897, %v3898
        %v3900 = vsel %vm877, %v3865, 0.0
        %v3901 = vadd.f32 %v3899, %v3900
        %v3902 = vsel %vm877, %v3866, 0.0
        %v3903 = vadd.f32 %v3901, %v3902
        %v3904 = vsel %vm877, %v3867, 0.0
        %v3905 = vadd.f32 %v3903, %v3904
        %v3906 = vsel %vm877, %v3868, 0.0
        %v3907 = vadd.f32 %v3905, %v3906
        %v3908 = vsel %vm877, %v3869, 0.0
        %v3909 = vadd.f32 %v3907, %v3908
        %v3910 = vsel %vm877, %v3870, 0.0
        %v3911 = vadd.f32 %v3909, %v3910
        %v3912 = vsel %vm877, %v3871, 0.0
        %v3913 = vadd.f32 %v3911, %v3912
        %v3914 = vsel %vm877, %v3872, 0.0
        %v3915 = vadd.f32 %v3913, %v3914
        %v3916 = vsel %vm877, %v3873, 0.0
        %v3917 = vadd.f32 %v3915, %v3916
        %v3918 = vsel %vm877, %v3874, 0.0
        %v3919 = vadd.f32 %v3917, %v3918
        %v3920 = vsel %vm877, %v3875, 0.0
        %v3921 = vadd.f32 %v3919, %v3920
        %v3922 = vsel %vm877, %v3876, 0.0
        %v3923 = vadd.f32 %v3921, %v3922
        %v3924 = vsel %vm877, %v3877, 0.0
        %v3925 = vadd.f32 %v3923, %v3924
        %v3926 = vsel %vm877, %v3878, 0.0
        %v3927 = vadd.f32 %v3925, %v3926
        %v3928 = vsel %vm877, %v3879, 0.0
        %v3929 = vadd.f32 %v3927, %v3928
        %v3930 = vsel %vm877, %v3880, 0.0
        %v3931 = vadd.f32 %v3929, %v3930
        %v3932 = vsel %vm877, %v3881, 0.0
        %v3933 = vadd.f32 %v3931, %v3932
        %v3934 = vsel %vm877, %v3882, 0.0
        %v3935 = vadd.f32 %v3933, %v3934
        %v3936 = vsel %vm877, %v3883, 0.0
        %v3937 = vadd.f32 %v3935, %v3936
        %v3938 = vsel %vm877, %v3884, 0.0
        %v3939 = vadd.f32 %v3937, %v3938
        %v3940 = vsel %vm877, %v3885, 0.0
        %v3941 = vadd.f32 %v3939, %v3940
        %v3942 = vsel %vm877, %v3886, 0.0
        %v3943 = vadd.f32 %v3941, %v3942
        %v3944 = vsel %vm877, %v3887, 0.0
        %v3945 = vadd.f32 %v3943, %v3944
        %v3946 = vsel %vm877, %v3888, 0.0
        %v3947 = vadd.f32 %v3945, %v3946
        %v3948 = vsel %vm877, %v3889, 0.0
        %v3949 = vadd.f32 %v3947, %v3948
        %v3950 = vsel %vm877, %v3890, 0.0
        %v3951 = vadd.f32 %v3949, %v3950
        %v3952 = vsel %vm877, %v3891, 0.0
        %v3953 = vadd.f32 %v3951, %v3952
        %v3954 = vsel %vm877, %v3892, 0.0
        %v3955 = vadd.f32 %v3953, %v3954
        %v3956 = vrot.slane %v3955, 4
        %v3957 = vadd.f32 %v3955, %v3956
        %v3958 = vrot.slane %v3957, 2
        %v3959 = vadd.f32 %v3957, %v3958
        %v3960 = vrot.slane %v3959, 1
        %v3961 = vadd.f32 %v3959, %v3960
        %v3962 = vrcp.pop 256.0
        %v3963 = vmul.f32 %v3961, %v3962
        %v3964 = vld [vmem:[%s5] sm:$0xff]
        %v3965 = vld [vmem:[%s5 + $0x8] sm:$0xff]
        %v3966 = vld [vmem:[%s5 + $0x10] sm:$0xff]
        %v3967 = vld [vmem:[%s5 + $0x18] sm:$0xff]
        %v3968 = vld [vmem:[%s5 + $0x20] sm:$0xff]
        %v3969 = vld [vmem:[%s5 + $0x28] sm:$0xff]
        %v3970 = vld [vmem:[%s5 + $0x30] sm:$0xff]
        %v3971 = vld [vmem:[%s5 + $0x38] sm:$0xff]
        %v3972 = vmul.f32 %v3964, %v3963
        %v3973 = vmul.f32 %v3965, %v3963
        %v3974 = vmul.f32 %v3966, %v3963
        %v3975 = vmul.f32 %v3967, %v3963
        %v3976 = vmul.f32 %v3968, %v3963
        %v3977 = vmul.f32 %v3969, %v3963
        %v3978 = vmul.f32 %v3970, %v3963
        %v3979 = vmul.f32 %v3971, %v3963
        %v3980 = vsel %vm877, %v3972, 0.0
        %3981 = vadd.xlane.f32.xlu0 %v3980
        %v3982 = vpop.xlane.xlu0 %3981
        %v3983 = vsel %vm877, %v3973, 0.0
        %3984 = vadd.xlane.f32.xlu0 %v3983
        %v3985 = vpop.xlane.xlu0 %3984
        %v3986 = vsel %vm877, %v3974, 0.0
        %3987 = vadd.xlane.f32.xlu0 %v3986
        %v3988 = vpop.xlane.xlu0 %3987
        %v3989 = vsel %vm877, %v3975, 0.0
        %3990 = vadd.xlane.f32.xlu0 %v3989
        %v3991 = vpop.xlane.xlu0 %3990
        %v3992 = vsel %vm877, %v3976, 0.0
        %3993 = vadd.xlane.f32.xlu0 %v3992
        %v3994 = vpop.xlane.xlu0 %3993
        %v3995 = vsel %vm877, %v3977, 0.0
        %3996 = vadd.xlane.f32.xlu0 %v3995
        %v3997 = vpop.xlane.xlu0 %3996
        %v3998 = vsel %vm877, %v3978, 0.0
        %3999 = vadd.xlane.f32.xlu0 %v3998
        %v4000 = vpop.xlane.xlu0 %3999
        %v4001 = vsel %vm877, %v3979, 0.0
        %4002 = vadd.xlane.f32.xlu0 %v4001
        %v4003 = vpop.xlane.xlu0 %4002
        %v4004 = vld [vmem:[%s6] sm:$0xff]
        %v4005 = vld [vmem:[%s6 + $0x8] sm:$0xff]
        %v4006 = vld [vmem:[%s6 + $0x10] sm:$0xff]
        %v4007 = vld [vmem:[%s6 + $0x18] sm:$0xff]
        %v4008 = vld [vmem:[%s6 + $0x20] sm:$0xff]
        %v4009 = vld [vmem:[%s6 + $0x28] sm:$0xff]
        %v4010 = vld [vmem:[%s6 + $0x30] sm:$0xff]
        %v4011 = vld [vmem:[%s6 + $0x38] sm:$0xff]
        %v4012 = vadd.f32 %v3982, %v4004
        %v4013 = vadd.f32 %v3985, %v4005
        %v4014 = vadd.f32 %v3988, %v4006
        %v4015 = vadd.f32 %v3991, %v4007
        %v4016 = vadd.f32 %v3994, %v4008
        %v4017 = vadd.f32 %v3997, %v4009
        %v4018 = vadd.f32 %v4000, %v4010
        %v4019 = vadd.f32 %v4003, %v4011
        %v4020 = vmax.f32 %v4012, 0.0
        %v4021 = vmax.f32 %v4013, 0.0
        %v4022 = vmax.f32 %v4014, 0.0
        %v4023 = vmax.f32 %v4015, 0.0
        %v4024 = vmax.f32 %v4016, 0.0
        %v4025 = vmax.f32 %v4017, 0.0
        %v4026 = vmax.f32 %v4018, 0.0
        %v4027 = vmax.f32 %v4019, 0.0
        %v4028 = vld [vmem:[%s7] sm:$0xff]
        %v4029 = vld [vmem:[%s7 + $0x8] sm:$0xff]
        %v4030 = vld [vmem:[%s7 + $0x10] sm:$0xff]
        %v4031 = vld [vmem:[%s7 + $0x18] sm:$0xff]
        %v4032 = vld [vmem:[%s7 + $0x20] sm:$0xff]
        %v4033 = vld [vmem:[%s7 + $0x28] sm:$0xff]
        %v4034 = vld [vmem:[%s7 + $0x30] sm:$0xff]
        %v4035 = vld [vmem:[%s7 + $0x38] sm:$0xff]
        %4037 = vset.pattern.permute.xlu0 0
        %4038 = vperm.xlu0 %4037, %v4020
        %v4039 = vpop.permute.xlu0 %4038
        %4042 = vset.pattern.permute.xlu0 0
        %4043 = vperm.xlu0 %4042, %v4021
        %v4044 = vpop.permute.xlu0 %4043
        %4047 = vset.pattern.permute.xlu0 0
        %4048 = vperm.xlu0 %4047, %v4022
        %v4049 = vpop.permute.xlu0 %4048
        %4052 = vset.pattern.permute.xlu0 0
        %4053 = vperm.xlu0 %4052, %v4023
        %v4054 = vpop.permute.xlu0 %4053
        %4057 = vset.pattern.permute.xlu0 0
        %4058 = vperm.xlu0 %4057, %v4024
        %v4059 = vpop.permute.xlu0 %4058
        %4062 = vset.pattern.permute.xlu0 0
        %4063 = vperm.xlu0 %4062, %v4025
        %v4064 = vpop.permute.xlu0 %4063
        %4067 = vset.pattern.permute.xlu0 0
        %4068 = vperm.xlu0 %4067, %v4026
        %v4069 = vpop.permute.xlu0 %4068
        %4072 = vset.pattern.permute.xlu0 0
        %4073 = vperm.xlu0 %4072, %v4027
        %v4074 = vpop.permute.xlu0 %4073
        %v4076 = vmul.f32 %v4028, %v4039
        %v4077 = vmul.f32 %v4029, %v4044
        %v4078 = vmul.f32 %v4030, %v4049
        %v4079 = vmul.f32 %v4031, %v4054
        %v4080 = vmul.f32 %v4032, %v4059
        %v4081 = vmul.f32 %v4033, %v4064
        %v4082 = vmul.f32 %v4034, %v4069
        %v4083 = vmul.f32 %v4035, %v4074
        %v4084 = vsel %vm877, %v4076, 0.0
        %v4085 = vsel %vm877, %v4077, 0.0
        %v4086 = vadd.f32 %v4084, %v4085
        %v4087 = vsel %vm877, %v4078, 0.0
        %v4088 = vadd.f32 %v4086, %v4087
        %v4089 = vsel %vm877, %v4079, 0.0
        %v4090 = vadd.f32 %v4088, %v4089
        %v4091 = vsel %vm877, %v4080, 0.0
        %v4092 = vadd.f32 %v4090, %v4091
        %v4093 = vsel %vm877, %v4081, 0.0
        %v4094 = vadd.f32 %v4092, %v4093
        %v4095 = vsel %vm877, %v4082, 0.0
        %v4096 = vadd.f32 %v4094, %v4095
        %v4097 = vsel %vm877, %v4083, 0.0
        %v4098 = vadd.f32 %v4096, %v4097
        %v4099 = vrot.slane %v4098, 4
        %v4100 = vadd.f32 %v4098, %v4099
        %v4101 = vrot.slane %v4100, 2
        %v4102 = vadd.f32 %v4100, %v4101
        %v4103 = vrot.slane %v4102, 1
        %v4104 = vadd.f32 %v4102, %v4103
        %v4105 = vld [vmem:[%s8] sm:$0x1]
        %v4106 = vadd.f32 %v4104, %v4105
        %v4107 = vsub.f32 0.0, %v4106
        %v4108 = vmul.f32 %v4107, 1.442695
        %v4109 = vpow.pop %v4108
        %v4110 = vadd.f32 %v4109, 1.0
        %v4111 = vrcp.pop %v4110
        %v4112 = vmul.f32 1.0, %v4111
        %v4113 = vlaneseq
        %v4114 = vshrl.u32 %v4113, 7
        %v4115 = vsub.s32 0, %v4114
        %v4116 = vrot.slane %v4112, %v4115
        %v4117 = vmul.f32 %v3861, %v4116
        %v4118 = vmul.f32 %v3862, %v4116
        %v4119 = vmul.f32 %v3863, %v4116
        %v4120 = vmul.f32 %v3864, %v4116
        %v4121 = vmul.f32 %v3865, %v4116
        %v4122 = vmul.f32 %v3866, %v4116
        %v4123 = vmul.f32 %v3867, %v4116
        %v4124 = vmul.f32 %v3868, %v4116
        %v4125 = vmul.f32 %v3869, %v4116
        %v4126 = vmul.f32 %v3870, %v4116
        %v4127 = vmul.f32 %v3871, %v4116
        %v4128 = vmul.f32 %v3872, %v4116
        %v4129 = vmul.f32 %v3873, %v4116
        %v4130 = vmul.f32 %v3874, %v4116
        %v4131 = vmul.f32 %v3875, %v4116
        %v4132 = vmul.f32 %v3876, %v4116
        %v4133 = vmul.f32 %v3877, %v4116
        %v4134 = vmul.f32 %v3878, %v4116
        %v4135 = vmul.f32 %v3879, %v4116
        %v4136 = vmul.f32 %v3880, %v4116
        %v4137 = vmul.f32 %v3881, %v4116
        %v4138 = vmul.f32 %v3882, %v4116
        %v4139 = vmul.f32 %v3883, %v4116
        %v4140 = vmul.f32 %v3884, %v4116
        %v4141 = vmul.f32 %v3885, %v4116
        %v4142 = vmul.f32 %v3886, %v4116
        %v4143 = vmul.f32 %v3887, %v4116
        %v4144 = vmul.f32 %v3888, %v4116
        %v4145 = vmul.f32 %v3889, %v4116
        %v4146 = vmul.f32 %v3890, %v4116
        %v4147 = vmul.f32 %v3891, %v4116
        %v4148 = vmul.f32 %v3892, %v4116
        %v4149 = vpack.c.bf16 %v4118, %v4117
        %v4150 = vpack.c.bf16 %v4120, %v4119
        %v4151 = vpack.c.bf16 %v4122, %v4121
        %v4152 = vpack.c.bf16 %v4124, %v4123
        %v4153 = vpack.c.bf16 %v4126, %v4125
        %v4154 = vpack.c.bf16 %v4128, %v4127
        %v4155 = vpack.c.bf16 %v4130, %v4129
        %v4156 = vpack.c.bf16 %v4132, %v4131
        %v4157 = vpack.c.bf16 %v4134, %v4133
        %v4158 = vpack.c.bf16 %v4136, %v4135
        %v4159 = vpack.c.bf16 %v4138, %v4137
        %v4160 = vpack.c.bf16 %v4140, %v4139
        %v4161 = vpack.c.bf16 %v4142, %v4141
        %v4162 = vpack.c.bf16 %v4144, %v4143
        %v4163 = vpack.c.bf16 %v4146, %v4145
        %v4164 = vpack.c.bf16 %v4148, %v4147
        %v4165 = vld [vmem:[%s9] sm:$0xff]
        %v4166 = vld [vmem:[%s9 + $0x8] sm:$0xff]
        %v4167 = vld [vmem:[%s9 + $0x10] sm:$0xff]
        %v4168 = vld [vmem:[%s9 + $0x18] sm:$0xff]
        %v4169 = vld [vmem:[%s9 + $0x20] sm:$0xff]
        %v4170 = vld [vmem:[%s9 + $0x28] sm:$0xff]
        %v4171 = vld [vmem:[%s9 + $0x30] sm:$0xff]
        %v4172 = vld [vmem:[%s9 + $0x38] sm:$0xff]
        %v4173 = vld [vmem:[%s10] sm:$0x3]
        %v4175 = vlaneseq
        %v4176 = vshrl.u32 %v4175, 7
        %v4177 = vsub.s32 0, %v4176
        %v4178 = vrot.slane %v4173, %v4177
        %v4179 = vlaneseq
        %v4180 = vshrl.u32 %v4179, 7
        %v4181 = vsub.s32 1, %v4180
        %v4182 = vrot.slane %v4173, %v4181
        %v4193 = vunpack.c.l.b16 %v4165
        %v4194 = vunpack.c.h.b16 %v4165
        %v4195 = vunpack.c.l.b16 %v4166
        %v4196 = vunpack.c.h.b16 %v4166
        %v4197 = vunpack.c.l.b16 %v4167
        %v4198 = vunpack.c.h.b16 %v4167
        %v4199 = vunpack.c.l.b16 %v4168
        %v4200 = vunpack.c.h.b16 %v4168
        %v4201 = vunpack.c.l.b16 %v4169
        %v4202 = vunpack.c.h.b16 %v4169
        %v4203 = vunpack.c.l.b16 %v4170
        %v4204 = vunpack.c.h.b16 %v4170
        %v4205 = vunpack.c.l.b16 %v4171
        %v4206 = vunpack.c.h.b16 %v4171
        %v4207 = vunpack.c.l.b16 %v4172
        %v4208 = vunpack.c.h.b16 %v4172
        %v4209 = vpack.c.b16 %v4195, %v4193
        %v4210 = vpack.c.b16 %v4196, %v4194
        %v4211 = vpack.c.b16 %v4199, %v4197
        %v4212 = vpack.c.b16 %v4200, %v4198
        %v4213 = vpack.c.b16 %v4203, %v4201
        %v4214 = vpack.c.b16 %v4204, %v4202
        %v4215 = vpack.c.b16 %v4207, %v4205
        %v4216 = vpack.c.b16 %v4208, %v4206
        %v4226 = vsel %vm877, %v4149, 0
        %v4229 = vsel %vm877, %v4150, 0
        %v4232 = vsel %vm877, %v4151, 0
        %v4235 = vsel %vm877, %v4152, 0
        %v4238 = vsel %vm877, %v4153, 0
        %v4241 = vsel %vm877, %v4154, 0
        %v4244 = vsel %vm877, %v4155, 0
        %v4247 = vsel %vm877, %v4156, 0
        %v4250 = vsel %vm877, %v4157, 0
        %v4253 = vsel %vm877, %v4158, 0
        %v4256 = vsel %vm877, %v4159, 0
        %v4259 = vsel %vm877, %v4160, 0
        %v4262 = vsel %vm877, %v4161, 0
        %v4265 = vsel %vm877, %v4162, 0
        %v4268 = vsel %vm877, %v4163, 0
        %v4271 = vsel %vm877, %v4164, 0
        %4273 = vmatprep.subr.bf16.mxu0 0
        %4274 = vmatpush1.bf16.msra.mxu0 0
        %4275 = vmatprep.subr.bf16.mxu0 0
        %4276 = vmatpush1.bf16.msra.mxu0 0
        %4277 = vmatprep.subr.bf16.mxu0 0
        %4278 = vmatpush1.bf16.msra.mxu0 0
        %4279 = vmatprep.subr.bf16.mxu0 0
        %4280 = vmatpush1.bf16.msra.mxu0 0
        %4281 = vmatprep.subr.bf16.mxu0 %v4216
        %4282 = vmatpush1.bf16.msra.mxu0 %v4215
        %4283 = vmatprep.subr.bf16.mxu0 %v4214
        %4284 = vmatpush1.bf16.msra.mxu0 %v4213
        %4285 = vmatprep.subr.bf16.mxu0 %v4212
        %4286 = vmatpush1.bf16.msra.mxu0 %v4211
        %4287 = vmatprep.subr.bf16.mxu0 %v4210
        %4288 = vmatpush1.bf16.msra.mxu0 %v4209
        %4289 = vmatprep.subr.bf16.mxu0 0
        %4290 = vmatpush2.bf16.msra.mxu0 0
        %4291 = vmatprep.subr.bf16.mxu0 0
        %4292 = vmatpush2.bf16.msra.mxu0 0
        %4293 = vmatprep.subr.bf16.mxu0 0
        %4294 = vmatpush2.bf16.msra.mxu0 0
        %4295 = vmatprep.subr.bf16.mxu0 0
        %4296 = vmatpush2.bf16.msra.mxu0 0
        %4297 = vmatprep.subr.bf16.mxu0 0
        %4298 = vmatpush2.bf16.msra.mxu0 0
        %4299 = vmatprep.subr.bf16.mxu0 0
        %4300 = vmatpush2.bf16.msra.mxu0 0
        %4301 = vmatprep.subr.bf16.mxu0 0
        %4302 = vmatpush2.bf16.msra.mxu0 0
        %4303 = vmatprep.subr.bf16.mxu0 0
        %4304 = vmatpush2.bf16.msra.mxu0 0
        %4305 = vmatprep.mubr.bf16.mxu0 0
        %4306 = vmatmul.mubr.bf16.gmra.mxu0 %v4226
        %v4307 = vpop.f32.mrf.mxu0
        %v4308 = vadd.f32 %v4178, %v4307
        %v4309 = vpop.f32.mrf.mxu0
        %v4310 = vadd.f32 %v4182, %v4309
        %v4311 = vpop.f32.mrf.mxu0
        %v4312 = vadd.f32 %v4178, %v4311
        %v4313 = vpop.f32.mrf.mxu0
        %v4314 = vadd.f32 %v4182, %v4313
        %4315 = vmatprep.mubr.bf16.mxu0 0
        %4316 = vmatmul.mubr.bf16.gmra.mxu0 %v4229
        %v4317 = vpop.f32.mrf.mxu0
        %v4318 = vadd.f32 %v4178, %v4317
        %v4319 = vpop.f32.mrf.mxu0
        %v4320 = vadd.f32 %v4182, %v4319
        %v4321 = vpop.f32.mrf.mxu0
        %v4322 = vadd.f32 %v4178, %v4321
        %v4323 = vpop.f32.mrf.mxu0
        %v4324 = vadd.f32 %v4182, %v4323
        %4325 = vmatprep.mubr.bf16.mxu0 0
        %4326 = vmatmul.mubr.bf16.gmra.mxu0 %v4232
        %v4327 = vpop.f32.mrf.mxu0
        %v4328 = vadd.f32 %v4178, %v4327
        %v4329 = vpop.f32.mrf.mxu0
        %v4330 = vadd.f32 %v4182, %v4329
        %v4331 = vpop.f32.mrf.mxu0
        %v4332 = vadd.f32 %v4178, %v4331
        %v4333 = vpop.f32.mrf.mxu0
        %v4334 = vadd.f32 %v4182, %v4333
        %4335 = vmatprep.mubr.bf16.mxu0 0
        %4336 = vmatmul.mubr.bf16.gmra.mxu0 %v4235
        %v4337 = vpop.f32.mrf.mxu0
        %v4338 = vadd.f32 %v4178, %v4337
        %v4339 = vpop.f32.mrf.mxu0
        %v4340 = vadd.f32 %v4182, %v4339
        %v4341 = vpop.f32.mrf.mxu0
        %v4342 = vadd.f32 %v4178, %v4341
        %v4343 = vpop.f32.mrf.mxu0
        %v4344 = vadd.f32 %v4182, %v4343
        %4345 = vmatprep.mubr.bf16.mxu0 0
        %4346 = vmatmul.mubr.bf16.gmra.mxu0 %v4238
        %v4347 = vpop.f32.mrf.mxu0
        %v4348 = vadd.f32 %v4178, %v4347
        %v4349 = vpop.f32.mrf.mxu0
        %v4350 = vadd.f32 %v4182, %v4349
        %v4351 = vpop.f32.mrf.mxu0
        %v4352 = vadd.f32 %v4178, %v4351
        %v4353 = vpop.f32.mrf.mxu0
        %v4354 = vadd.f32 %v4182, %v4353
        %4355 = vmatprep.mubr.bf16.mxu0 0
        %4356 = vmatmul.mubr.bf16.gmra.mxu0 %v4241
        %v4357 = vpop.f32.mrf.mxu0
        %v4358 = vadd.f32 %v4178, %v4357
        %v4359 = vpop.f32.mrf.mxu0
        %v4360 = vadd.f32 %v4182, %v4359
        %v4361 = vpop.f32.mrf.mxu0
        %v4362 = vadd.f32 %v4178, %v4361
        %v4363 = vpop.f32.mrf.mxu0
        %v4364 = vadd.f32 %v4182, %v4363
        %4365 = vmatprep.mubr.bf16.mxu0 0
        %4366 = vmatmul.mubr.bf16.gmra.mxu0 %v4244
        %v4367 = vpop.f32.mrf.mxu0
        %v4368 = vadd.f32 %v4178, %v4367
        %v4369 = vpop.f32.mrf.mxu0
        %v4370 = vadd.f32 %v4182, %v4369
        %v4371 = vpop.f32.mrf.mxu0
        %v4372 = vadd.f32 %v4178, %v4371
        %v4373 = vpop.f32.mrf.mxu0
        %v4374 = vadd.f32 %v4182, %v4373
        %4375 = vmatprep.mubr.bf16.mxu0 0
        %4376 = vmatmul.mubr.bf16.gmra.mxu0 %v4247
        %v4377 = vpop.f32.mrf.mxu0
        %v4378 = vadd.f32 %v4178, %v4377
        %v4379 = vpop.f32.mrf.mxu0
        %v4380 = vadd.f32 %v4182, %v4379
        %v4381 = vpop.f32.mrf.mxu0
        %v4382 = vadd.f32 %v4178, %v4381
        %v4383 = vpop.f32.mrf.mxu0
        %v4384 = vadd.f32 %v4182, %v4383
        %4385 = vmatprep.mubr.bf16.mxu0 0
        %4386 = vmatmul.mubr.bf16.gmra.mxu0 %v4250
        %v4387 = vpop.f32.mrf.mxu0
        %v4388 = vadd.f32 %v4178, %v4387
        %v4389 = vpop.f32.mrf.mxu0
        %v4390 = vadd.f32 %v4182, %v4389
        %v4391 = vpop.f32.mrf.mxu0
        %v4392 = vadd.f32 %v4178, %v4391
        %v4393 = vpop.f32.mrf.mxu0
        %v4394 = vadd.f32 %v4182, %v4393
        %4395 = vmatprep.mubr.bf16.mxu0 0
        %4396 = vmatmul.mubr.bf16.gmra.mxu0 %v4253
        %v4397 = vpop.f32.mrf.mxu0
        %v4398 = vadd.f32 %v4178, %v4397
        %v4399 = vpop.f32.mrf.mxu0
        %v4400 = vadd.f32 %v4182, %v4399
        %v4401 = vpop.f32.mrf.mxu0
        %v4402 = vadd.f32 %v4178, %v4401
        %v4403 = vpop.f32.mrf.mxu0
        %v4404 = vadd.f32 %v4182, %v4403
        %4405 = vmatprep.mubr.bf16.mxu0 0
        %4406 = vmatmul.mubr.bf16.gmra.mxu0 %v4256
        %v4407 = vpop.f32.mrf.mxu0
        %v4408 = vadd.f32 %v4178, %v4407
        %v4409 = vpop.f32.mrf.mxu0
        %v4410 = vadd.f32 %v4182, %v4409
        %v4411 = vpop.f32.mrf.mxu0
        %v4412 = vadd.f32 %v4178, %v4411
        %v4413 = vpop.f32.mrf.mxu0
        %v4414 = vadd.f32 %v4182, %v4413
        %4415 = vmatprep.mubr.bf16.mxu0 0
        %4416 = vmatmul.mubr.bf16.gmra.mxu0 %v4259
        %v4417 = vpop.f32.mrf.mxu0
        %v4418 = vadd.f32 %v4178, %v4417
        %v4419 = vpop.f32.mrf.mxu0
        %v4420 = vadd.f32 %v4182, %v4419
        %v4421 = vpop.f32.mrf.mxu0
        %v4422 = vadd.f32 %v4178, %v4421
        %v4423 = vpop.f32.mrf.mxu0
        %v4424 = vadd.f32 %v4182, %v4423
        %4425 = vmatprep.mubr.bf16.mxu0 0
        %4426 = vmatmul.mubr.bf16.gmra.mxu0 %v4262
        %v4427 = vpop.f32.mrf.mxu0
        %v4428 = vadd.f32 %v4178, %v4427
        %v4429 = vpop.f32.mrf.mxu0
        %v4430 = vadd.f32 %v4182, %v4429
        %v4431 = vpop.f32.mrf.mxu0
        %v4432 = vadd.f32 %v4178, %v4431
        %v4433 = vpop.f32.mrf.mxu0
        %v4434 = vadd.f32 %v4182, %v4433
        %4435 = vmatprep.mubr.bf16.mxu0 0
        %4436 = vmatmul.mubr.bf16.gmra.mxu0 %v4265
        %v4437 = vpop.f32.mrf.mxu0
        %v4438 = vadd.f32 %v4178, %v4437
        %v4439 = vpop.f32.mrf.mxu0
        %v4440 = vadd.f32 %v4182, %v4439
        %v4441 = vpop.f32.mrf.mxu0
        %v4442 = vadd.f32 %v4178, %v4441
        %v4443 = vpop.f32.mrf.mxu0
        %v4444 = vadd.f32 %v4182, %v4443
        %4445 = vmatprep.mubr.bf16.mxu0 0
        %4446 = vmatmul.mubr.bf16.gmra.mxu0 %v4268
        %v4447 = vpop.f32.mrf.mxu0
        %v4448 = vadd.f32 %v4178, %v4447
        %v4449 = vpop.f32.mrf.mxu0
        %v4450 = vadd.f32 %v4182, %v4449
        %v4451 = vpop.f32.mrf.mxu0
        %v4452 = vadd.f32 %v4178, %v4451
        %v4453 = vpop.f32.mrf.mxu0
        %v4454 = vadd.f32 %v4182, %v4453
        %4455 = vmatprep.mubr.bf16.mxu0 0
        %4456 = vmatmul.mubr.bf16.gmra.mxu0 %v4271
        %v4457 = vpop.f32.mrf.mxu0
        %v4458 = vadd.f32 %v4178, %v4457
        %v4459 = vpop.f32.mrf.mxu0
        %v4460 = vadd.f32 %v4182, %v4459
        %v4461 = vpop.f32.mrf.mxu0
        %v4462 = vadd.f32 %v4178, %v4461
        %v4463 = vpop.f32.mrf.mxu0
        %v4464 = vadd.f32 %v4182, %v4463
        %4465 = vdwg.mxu0
        %v4466 = vadd.f32 %v4308, %v421
        %v4467 = vadd.f32 %v4310, %v422
        %v4468 = vadd.f32 %v4312, %v423
        %v4469 = vadd.f32 %v4314, %v424
        %v4470 = vadd.f32 %v4318, %v425
        %v4471 = vadd.f32 %v4320, %v426
        %v4472 = vadd.f32 %v4322, %v427
        %v4473 = vadd.f32 %v4324, %v428
        %v4474 = vadd.f32 %v4328, %v429
        %v4475 = vadd.f32 %v4330, %v430
        %v4476 = vadd.f32 %v4332, %v431
        %v4477 = vadd.f32 %v4334, %v432
        %v4478 = vadd.f32 %v4338, %v433
        %v4479 = vadd.f32 %v4340, %v434
        %v4480 = vadd.f32 %v4342, %v435
        %v4481 = vadd.f32 %v4344, %v436
        %v4482 = vadd.f32 %v4348, %v437
        %v4483 = vadd.f32 %v4350, %v438
        %v4484 = vadd.f32 %v4352, %v439
        %v4485 = vadd.f32 %v4354, %v440
        %v4486 = vadd.f32 %v4358, %v441
        %v4487 = vadd.f32 %v4360, %v442
        %v4488 = vadd.f32 %v4362, %v443
        %v4489 = vadd.f32 %v4364, %v444
        %v4490 = vadd.f32 %v4368, %v445
        %v4491 = vadd.f32 %v4370, %v446
        %v4492 = vadd.f32 %v4372, %v447
        %v4493 = vadd.f32 %v4374, %v448
        %v4494 = vadd.f32 %v4378, %v449
        %v4495 = vadd.f32 %v4380, %v450
        %v4496 = vadd.f32 %v4382, %v451
        %v4497 = vadd.f32 %v4384, %v452
        %v4498 = vadd.f32 %v4388, %v453
        %v4499 = vadd.f32 %v4390, %v454
        %v4500 = vadd.f32 %v4392, %v455
        %v4501 = vadd.f32 %v4394, %v456
        %v4502 = vadd.f32 %v4398, %v457
        %v4503 = vadd.f32 %v4400, %v458
        %v4504 = vadd.f32 %v4402, %v459
        %v4505 = vadd.f32 %v4404, %v460
        %v4506 = vadd.f32 %v4408, %v461
        %v4507 = vadd.f32 %v4410, %v462
        %v4508 = vadd.f32 %v4412, %v463
        %v4509 = vadd.f32 %v4414, %v464
        %v4510 = vadd.f32 %v4418, %v465
        %v4511 = vadd.f32 %v4420, %v466
        %v4512 = vadd.f32 %v4422, %v467
        %v4513 = vadd.f32 %v4424, %v468
        %v4514 = vadd.f32 %v4428, %v469
        %v4515 = vadd.f32 %v4430, %v470
        %v4516 = vadd.f32 %v4432, %v471
        %v4517 = vadd.f32 %v4434, %v472
        %v4518 = vadd.f32 %v4438, %v473
        %v4519 = vadd.f32 %v4440, %v474
        %v4520 = vadd.f32 %v4442, %v475
        %v4521 = vadd.f32 %v4444, %v476
        %v4522 = vadd.f32 %v4448, %v477
        %v4523 = vadd.f32 %v4450, %v478
        %v4524 = vadd.f32 %v4452, %v479
        %v4525 = vadd.f32 %v4454, %v480
        %v4526 = vadd.f32 %v4458, %v481
        %v4527 = vadd.f32 %v4460, %v482
        %v4528 = vadd.f32 %v4462, %v483
        %v4529 = vadd.f32 %v4464, %v484
        %v4530 = vmax.f32 %v4466, 0.0
        %v4531 = vmax.f32 %v4467, 0.0
        %v4532 = vmax.f32 %v4468, 0.0
        %v4533 = vmax.f32 %v4469, 0.0
        %v4534 = vmax.f32 %v4470, 0.0
        %v4535 = vmax.f32 %v4471, 0.0
        %v4536 = vmax.f32 %v4472, 0.0
        %v4537 = vmax.f32 %v4473, 0.0
        %v4538 = vmax.f32 %v4474, 0.0
        %v4539 = vmax.f32 %v4475, 0.0
        %v4540 = vmax.f32 %v4476, 0.0
        %v4541 = vmax.f32 %v4477, 0.0
        %v4542 = vmax.f32 %v4478, 0.0
        %v4543 = vmax.f32 %v4479, 0.0
        %v4544 = vmax.f32 %v4480, 0.0
        %v4545 = vmax.f32 %v4481, 0.0
        %v4546 = vmax.f32 %v4482, 0.0
        %v4547 = vmax.f32 %v4483, 0.0
        %v4548 = vmax.f32 %v4484, 0.0
        %v4549 = vmax.f32 %v4485, 0.0
        %v4550 = vmax.f32 %v4486, 0.0
        %v4551 = vmax.f32 %v4487, 0.0
        %v4552 = vmax.f32 %v4488, 0.0
        %v4553 = vmax.f32 %v4489, 0.0
        %v4554 = vmax.f32 %v4490, 0.0
        %v4555 = vmax.f32 %v4491, 0.0
        %v4556 = vmax.f32 %v4492, 0.0
        %v4557 = vmax.f32 %v4493, 0.0
        %v4558 = vmax.f32 %v4494, 0.0
        %v4559 = vmax.f32 %v4495, 0.0
        %v4560 = vmax.f32 %v4496, 0.0
        %v4561 = vmax.f32 %v4497, 0.0
        %v4562 = vmax.f32 %v4498, 0.0
        %v4563 = vmax.f32 %v4499, 0.0
        %v4564 = vmax.f32 %v4500, 0.0
        %v4565 = vmax.f32 %v4501, 0.0
        %v4566 = vmax.f32 %v4502, 0.0
        %v4567 = vmax.f32 %v4503, 0.0
        %v4568 = vmax.f32 %v4504, 0.0
        %v4569 = vmax.f32 %v4505, 0.0
        %v4570 = vmax.f32 %v4506, 0.0
        %v4571 = vmax.f32 %v4507, 0.0
        %v4572 = vmax.f32 %v4508, 0.0
        %v4573 = vmax.f32 %v4509, 0.0
        %v4574 = vmax.f32 %v4510, 0.0
        %v4575 = vmax.f32 %v4511, 0.0
        %v4576 = vmax.f32 %v4512, 0.0
        %v4577 = vmax.f32 %v4513, 0.0
        %v4578 = vmax.f32 %v4514, 0.0
        %v4579 = vmax.f32 %v4515, 0.0
        %v4580 = vmax.f32 %v4516, 0.0
        %v4581 = vmax.f32 %v4517, 0.0
        %v4582 = vmax.f32 %v4518, 0.0
        %v4583 = vmax.f32 %v4519, 0.0
        %v4584 = vmax.f32 %v4520, 0.0
        %v4585 = vmax.f32 %v4521, 0.0
        %v4586 = vmax.f32 %v4522, 0.0
        %v4587 = vmax.f32 %v4523, 0.0
        %v4588 = vmax.f32 %v4524, 0.0
        %v4589 = vmax.f32 %v4525, 0.0
        %v4590 = vmax.f32 %v4526, 0.0
        %v4591 = vmax.f32 %v4527, 0.0
        %v4592 = vmax.f32 %v4528, 0.0
        %v4593 = vmax.f32 %v4529, 0.0
        %4594 = vst [vmem:[%s419] sm:$0xff] %v4530
        %4595 = vst [vmem:[%s419 + $0x8] sm:$0xff] %v4531
        %4596 = vst [vmem:[%s419 + $0x10] sm:$0xff] %v4532
        %4597 = vst [vmem:[%s419 + $0x18] sm:$0xff] %v4533
        %4598 = vst [vmem:[%s419 + $0x20] sm:$0xff] %v4534
        %4599 = vst [vmem:[%s419 + $0x28] sm:$0xff] %v4535
        %4600 = vst [vmem:[%s419 + $0x30] sm:$0xff] %v4536
        %4601 = vst [vmem:[%s419 + $0x38] sm:$0xff] %v4537
        %4602 = vst [vmem:[%s419 + $0x40] sm:$0xff] %v4538
        %4603 = vst [vmem:[%s419 + $0x48] sm:$0xff] %v4539
        %4604 = vst [vmem:[%s419 + $0x50] sm:$0xff] %v4540
        %4605 = vst [vmem:[%s419 + $0x58] sm:$0xff] %v4541
        %4606 = vst [vmem:[%s419 + $0x60] sm:$0xff] %v4542
        %4607 = vst [vmem:[%s419 + $0x68] sm:$0xff] %v4543
        %4608 = vst [vmem:[%s419 + $0x70] sm:$0xff] %v4544
        %4609 = vst [vmem:[%s419 + $0x78] sm:$0xff] %v4545
        %4610 = vst [vmem:[%s419 + $0x80] sm:$0xff] %v4546
        %4611 = vst [vmem:[%s419 + $0x88] sm:$0xff] %v4547
        %4612 = vst [vmem:[%s419 + $0x90] sm:$0xff] %v4548
        %4613 = vst [vmem:[%s419 + $0x98] sm:$0xff] %v4549
        %4614 = vst [vmem:[%s419 + $0xa0] sm:$0xff] %v4550
        %4615 = vst [vmem:[%s419 + $0xa8] sm:$0xff] %v4551
        %4616 = vst [vmem:[%s419 + $0xb0] sm:$0xff] %v4552
        %4617 = vst [vmem:[%s419 + $0xb8] sm:$0xff] %v4553
        %4618 = vst [vmem:[%s419 + $0xc0] sm:$0xff] %v4554
        %4619 = vst [vmem:[%s419 + $0xc8] sm:$0xff] %v4555
        %4620 = vst [vmem:[%s419 + $0xd0] sm:$0xff] %v4556
        %4621 = vst [vmem:[%s419 + $0xd8] sm:$0xff] %v4557
        %4622 = vst [vmem:[%s419 + $0xe0] sm:$0xff] %v4558
        %4623 = vst [vmem:[%s419 + $0xe8] sm:$0xff] %v4559
        %4624 = vst [vmem:[%s419 + $0xf0] sm:$0xff] %v4560
        %4625 = vst [vmem:[%s419 + $0xf8] sm:$0xff] %v4561
        %4626 = vst [vmem:[%s419 + $0x100] sm:$0xff] %v4562
        %4627 = vst [vmem:[%s419 + $0x108] sm:$0xff] %v4563
        %4628 = vst [vmem:[%s419 + $0x110] sm:$0xff] %v4564
        %4629 = vst [vmem:[%s419 + $0x118] sm:$0xff] %v4565
        %4630 = vst [vmem:[%s419 + $0x120] sm:$0xff] %v4566
        %4631 = vst [vmem:[%s419 + $0x128] sm:$0xff] %v4567
        %4632 = vst [vmem:[%s419 + $0x130] sm:$0xff] %v4568
        %4633 = vst [vmem:[%s419 + $0x138] sm:$0xff] %v4569
        %4634 = vst [vmem:[%s419 + $0x140] sm:$0xff] %v4570
        %4635 = vst [vmem:[%s419 + $0x148] sm:$0xff] %v4571
        %4636 = vst [vmem:[%s419 + $0x150] sm:$0xff] %v4572
        %4637 = vst [vmem:[%s419 + $0x158] sm:$0xff] %v4573
        %4638 = vst [vmem:[%s419 + $0x160] sm:$0xff] %v4574
        %4639 = vst [vmem:[%s419 + $0x168] sm:$0xff] %v4575
        %4640 = vst [vmem:[%s419 + $0x170] sm:$0xff] %v4576
        %4641 = vst [vmem:[%s419 + $0x178] sm:$0xff] %v4577
        %4642 = vst [vmem:[%s419 + $0x180] sm:$0xff] %v4578
        %4643 = vst [vmem:[%s419 + $0x188] sm:$0xff] %v4579
        %4644 = vst [vmem:[%s419 + $0x190] sm:$0xff] %v4580
        %4645 = vst [vmem:[%s419 + $0x198] sm:$0xff] %v4581
        %4646 = vst [vmem:[%s419 + $0x1a0] sm:$0xff] %v4582
        %4647 = vst [vmem:[%s419 + $0x1a8] sm:$0xff] %v4583
        %4648 = vst [vmem:[%s419 + $0x1b0] sm:$0xff] %v4584
        %4649 = vst [vmem:[%s419 + $0x1b8] sm:$0xff] %v4585
        %4650 = vst [vmem:[%s419 + $0x1c0] sm:$0xff] %v4586
        %4651 = vst [vmem:[%s419 + $0x1c8] sm:$0xff] %v4587
        %4652 = vst [vmem:[%s419 + $0x1d0] sm:$0xff] %v4588
        %4653 = vst [vmem:[%s419 + $0x1d8] sm:$0xff] %v4589
        %4654 = vst [vmem:[%s419 + $0x1e0] sm:$0xff] %v4590
        %4655 = vst [vmem:[%s419 + $0x1e8] sm:$0xff] %v4591
        %4656 = vst [vmem:[%s419 + $0x1f0] sm:$0xff] %v4592
        %4657 = vst [vmem:[%s419 + $0x1f8] sm:$0xff] %v4593
        %s4658 = sand.u32 %s273, 1
        %s4659 = scalar_lea.sflag [#allocation5], %s4658
        %s4660 = sand.u32 %s273, 1
        %s4661 = smul.addr %s4660, 512
        %s4662 = scalar_lea.vmem [#allocation8], %s4661
        // Predicated region
        $region73: #{tpu_custom_call.1} parent=63 // pred_check
          %p4663 = pneg %p283
        $region74: #{tpu_custom_call.1} parent=63 // pred_check_branch
          %4665 = sbr.rel (%p4663) target = $region76
        $region75: #{tpu_custom_call.1} parent=63 // pred_region
          %s4667 = ssub.s32 8192, 8192
          %4668 = vsyncadd %s4659, %s4667
          %s4669 = smul.addr %s29, 64
          %s4670 = smul.addr %s4669, 128
          %s4671 = scalar_lea.hbm %s11, %s4670
          %s4672 = sshll.u32 %s4662, 4
          %s4673 = int_to_ptr.vmem [resolvable:$true] %s4672
          %4678 = dma.vmem_to_hbm [thread:$0]  %s4673, 8192, %s4671, %s4659, 256, 256, 16
        $region76: #{tpu_custom_call.1} parent=63 // pred_fallthru
          _
      $region64: #{tpu_custom_call.1} parent=5 // pred_fallthru
        _
      %p4679 = scmp.le.s32.totalorder 2, %s24
      // Predicated region
      $region77: #{tpu_custom_call.1} parent=5 // pred_check
        %p4680 = pneg %p4679
      $region78: #{tpu_custom_call.1} parent=5 // pred_check_branch
        %4682 = sbr.rel (%p4680) target = $region80
      $region79: #{tpu_custom_call.1} parent=5 // pred_region
        %s4683 = ssub.s32 %s24, 2
        // Predicated region
        $region81: #{tpu_custom_call.1} parent=79 // pred_check
          %p4684 = pneg %p289
        $region82: #{tpu_custom_call.1} parent=79 // pred_check_branch
          %4686 = sbr.rel (%p4684) target = $region84
        $region83: #{tpu_custom_call.1} parent=79 // pred_region
          %s4687 = sand.u32 %s274, 1
          %s4688 = scalar_lea.sflag [#allocation5], %s4687
          %s4689 = sand.u32 %s274, 1
          %s4690 = smul.addr %s4689, 512
          %s4691 = scalar_lea.vmem [#allocation8], %s4690
          %4692 = dma.done %s4688, 8192
        $region84: #{tpu_custom_call.1} parent=79 // pred_fallthru
          _
      $region80: #{tpu_custom_call.1} parent=5 // pred_fallthru
        _
    $region6: #{tpu_custom_call.1} parent=1 // loop_footer
      %s28 = sadd.s32 1, %s24
    $region7: #{tpu_custom_call.1} parent=1 // loop_footer_branch
      %23 = sbr.rel target = $region3
    $region8: #{tpu_custom_call.1} parent=1 // loop_exit
      _
    %4693 = vsyncpa [#allocation4], 1
    %s4694 = scalar_lea.sflag [#allocation4], 1
    %4695 = vsyncpa %s4694, 1
    %4696 = vsyncpa [#allocation7], 1
    %4697 = vsyncpa [#allocation5], 1
    %s4698 = scalar_lea.sflag [#allocation5], 1
    %4699 = vsyncpa %s4698, 1

</llo_original>
